<compile_context>
chip_gen: v7x
topology: tpu7x:2x2x1
jax: 0.10.0
libtpu: 0.0.40
codegen_flags: <defaults>
</compile_context>

<pallas_src>
import functools

import numpy as np
import jax
import jax.numpy as jnp
from jax import lax
from jax.experimental import pallas as pl
from jax.experimental.pallas import tpu as pltpu


# ---------------------------------------------------------------------------
# Host-side (one-time) construction of the structured operand matrices.
# ---------------------------------------------------------------------------
def _bilinear_matrix(in_size, out_size):
    """Interpolation matrix matching F.interpolate(mode='bilinear', align_corners=False)."""
    scale = in_size / out_size
    dst = np.arange(out_size, dtype=np.float32)
    src = (dst + np.float32(0.5)) * np.float32(scale) - np.float32(0.5)
    src = np.maximum(src, np.float32(0.0)).astype(np.float32)
    i0 = np.minimum(np.floor(src).astype(np.int32), in_size - 1)
    i1 = np.minimum(i0 + 1, in_size - 1)
    w1 = (src - i0.astype(np.float32)).astype(np.float32)
    w0 = (np.float32(1.0) - w1).astype(np.float32)
    m = np.zeros((out_size, in_size), np.float32)
    rows = np.arange(out_size)
    np.add.at(m, (rows, i0), w0)
    np.add.at(m, (rows, i1), w1)
    return m


def _pick_batch_tile(B, max_tile=8):
    """Largest divisor of B that still leaves >= 2 grid steps (so both v7x TCs work),
    capped at max_tile images per step."""
    if B <= 1:
        return 1
    target = min(max_tile, max(1, B // 2))
    for d in range(target, 0, -1):
        if B % d == 0:
            return d
    return 1


def build_decoder_operands(params, *, H, W, img_size, embed_dim, num_feat,
                           num_out_ch, batch_tile):
    """Precompute banded conv matrices, sub-pixel conv_last matrices, batched
    bilinear resize matrices and the valid-row mask for the fused kernel."""
    E, C, Co, Bt = embed_dim, num_feat, num_out_ch, batch_tile
    C4 = 4 * C
    P = H + 2                      # rows per padded image in the stacked scratch
    M = Bt * P - 2                 # sliding-window rows worked on per stage

    w0 = np.asarray(params["w0"], np.float32)        # (3,3,E,C)   HWIO
    b0 = np.asarray(params["b0"], np.float32)
    w1 = np.asarray(params["w1"], np.float32)        # (3,3,C,4C)
    b1 = np.asarray(params["b1"], np.float32)
    w2 = np.asarray(params["w2"], np.float32)        # (3,3,C,Co)
    b2 = np.asarray(params["b2"], np.float32)

    # TODO(synk): the banded form has O(W^2) memory and ~(1 - 3/W) structural zeros;
    # for large W switch to a kw-decomposed 9-tap form instead.
    def band(w):
        # Y2d = sum_kh Xpad2d[kh:kh+M,:] @ A[kh] implements a 3x3 "same" conv in the
        # [row, w*Cin+c] -> [row, w*Cout+o] layout (width padding baked into the band).
        Ci, Cout = w.shape[2], w.shape[3]
        A = np.zeros((3, W * Ci, W * Cout), np.float32)
        for kh in range(3):
            for kw in range(3):
                for wc in range(W):
                    wp = wc + kw - 1
                    if 0 <= wp < W:
                        A[kh, wp * Ci:(wp + 1) * Ci, wc * Cout:(wc + 1) * Cout] = w[kh, kw]
        return A

    # conv_before_upsample
    A0 = band(w0)                                     # (3, W*E, W*C)
    b0row = np.tile(b0, W)[None, :]                   # (1, W*C)

    # upsample conv with PixelShuffle-permuted outputs: o_perm = (r1*2+r2)*C + c
    w1p = w1.reshape(3, 3, C, C, 4).transpose(0, 1, 2, 4, 3).reshape(3, 3, C, C4)
    b1p = b1.reshape(C, 4).T.reshape(C4)
    A1 = band(w1p)                                    # (3, W*C, W*4C)
    b1row = np.tile(b1p, W)[None, :]                  # (1, W*4C)

    # conv_last folded into sub-pixel form: for output rows 2h+r1, the conv on the
    # (never materialised) shuffled image is  sum_j Y1pad[r1+j : r1+j+M] @ G[2*r1+j],
    # producing columns indexed [r2*W*Co + w*Co + o] (sub-pixel cols 2w+r2).
    G = np.zeros((2, 2, W * C4, 2 * W * Co), np.float32)
    for r1 in range(2):
        for j in range(2):                            # row-slice start = r1 + j
            q1 = r1 + j - 1
            for s1 in range(2):
                kh = 2 * q1 + s1 + 1 - r1
                if not 0 <= kh <= 2:
                    continue
                for r2 in range(2):
                    for s2 in range(2):
                        for q2 in (-1, 0, 1):
                            kw = 2 * q2 + s2 + 1 - r2
                            if not 0 <= kw <= 2:
                                continue
                            sidx = s1 * 2 + s2
                            for wc in range(W):
                                wp = wc + q2
                                if not 0 <= wp < W:
                                    continue
                                G[r1, j,
                                  wp * C4 + sidx * C: wp * C4 + (sidx + 1) * C,
                                  r2 * W * Co + wc * Co: r2 * W * Co + (wc + 1) * Co] = w2[kh, kw]
    G = G.reshape(4, W * C4, 2 * W * Co)
    b2row = np.tile(b2, 2 * W)[None, :]               # (1, 2*W*Co)

    # Bilinear row-resize, batched & block-diagonal over the Bt stacked images.
    # NOTE: adding b2row BEFORE this resize is exact only because every row of WY
    # sums to 1 (true for align_corners=False with the clamping above) -- assert it.
    WY = _bilinear_matrix(2 * H, img_size)            # (img, 2H)
    assert np.allclose(WY.sum(axis=1), 1.0, atol=1e-5)
    WYb = np.zeros((2, Bt * img_size, M), np.float32)
    for r1 in range(2):
        sub = WY[:, r1::2]                            # (img, H)
        for b in range(Bt):
            WYb[r1, b * img_size:(b + 1) * img_size, b * P: b * P + H] = sub

    # Bilinear column-resize into a lane-dense slab, padded to a 128 multiple so the
    # final output store is unmasked.
    out_cols = img_size * Co
    out_pad = ((out_cols + 127) // 128) * 128
    WX = _bilinear_matrix(2 * W, img_size)            # (img, 2W)
    Mcol = np.zeros((2 * W * Co, out_pad), np.float32)
    for r2 in range(2):
        for wc in range(W):
            for o in range(Co):
                Mcol[r2 * W * Co + wc * Co + o, o:out_cols:Co] = WX[:, 2 * wc + r2]

    # Valid-row mask: 1.0 on image rows, 0.0 on the junk rows produced by windows
    # spanning an image boundary (keeps the zero separator rows exactly zero).
    rowmask = np.zeros((M, 1), np.float32)
    for r in range(M):
        if (r % P) < H:
            rowmask[r, 0] = 1.0

    return dict(A0=jnp.asarray(A0), b0row=jnp.asarray(b0row),
                A1=jnp.asarray(A1), b1row=jnp.asarray(b1row),
                G=jnp.asarray(G), b2row=jnp.asarray(b2row),
                WYb=jnp.asarray(WYb), Mcol=jnp.asarray(Mcol),
                rowmask=jnp.asarray(rowmask), out_pad=out_pad)


# ---------------------------------------------------------------------------
# Fused decoder kernel (one grid step processes Bt batch images).
# ---------------------------------------------------------------------------
def _decoder_kernel(x_ref, A0_ref, b0_ref, A1_ref, b1_ref, G_ref, b2_ref,
                    WYb_ref, Mcol_ref, mask_ref, o_ref,
                    xp_ref, z0p_ref, y1p_ref, *, Bt, H):
    f32 = jnp.float32
    P = H + 2
    Btot = Bt * P
    M = Btot - 2

    # ---- stack this step's Bt token images row-wise with zero separator rows ----
    zx = jnp.zeros((1, xp_ref.shape[1]), f32)
    for b in range(Bt):
        xp_ref[b * P: b * P + 1, :] = zx                       # top pad of image b
        xp_ref[b * P + 1: b * P + 1 + H, :] = x_ref[b]
        xp_ref[b * P + H + 1: b * P + H + 2, :] = zx           # bottom pad of image b

    mask = mask_ref[...]                                        # (M, 1)

    # ---- conv_before_upsample: 3x3 conv (E -> C) + LeakyReLU(0.01) ----
    pre0 = b0_ref[...] + jnp.dot(xp_ref[0:M, :], A0_ref[0], preferred_element_type=f32)
    pre0 = pre0 + jnp.dot(xp_ref[1:M + 1, :], A0_ref[1], preferred_element_type=f32)
    pre0 = pre0 + jnp.dot(xp_ref[2:M + 2, :], A0_ref[2], preferred_element_type=f32)
    z0 = jnp.where(pre0 >= 0, pre0, 0.01 * pre0)

    zc = jnp.zeros((1, z0p_ref.shape[1]), f32)
    z0p_ref[0:1, :] = zc
    z0p_ref[Btot - 1:Btot, :] = zc
    z0p_ref[1:M + 1, :] = z0 * mask                             # junk rows -> 0

    # ---- upsample conv: 3x3 conv (C -> 4C), outputs pre-permuted so that
    #      PixelShuffle(2) is a pure re-indexing absorbed by the G matrices ----
    y1 = b1_ref[...] + jnp.dot(z0p_ref[0:M, :], A1_ref[0], preferred_element_type=f32)
    y1 = y1 + jnp.dot(z0p_ref[1:M + 1, :], A1_ref[1], preferred_element_type=f32)
    y1 = y1 + jnp.dot(z0p_ref[2:M + 2, :], A1_ref[2], preferred_element_type=f32)

    zc4 = jnp.zeros((1, y1p_ref.shape[1]), f32)
    y1p_ref[0:1, :] = zc4
    y1p_ref[Btot - 1:Btot, :] = zc4
    y1p_ref[1:M + 1, :] = y1 * mask                             # junk rows -> 0

    # ---- conv_last on the implicit shuffled image (sub-pixel decomposition) ----
    osub0 = b2_ref[...] + jnp.dot(y1p_ref[0:M, :], G_ref[0], preferred_element_type=f32)
    osub0 = osub0 + jnp.dot(y1p_ref[1:M + 1, :], G_ref[1], preferred_element_type=f32)
    osub1 = b2_ref[...] + jnp.dot(y1p_ref[1:M + 1, :], G_ref[2], preferred_element_type=f32)
    osub1 = osub1 + jnp.dot(y1p_ref[2:M + 2, :], G_ref[3], preferred_element_type=f32)

    # ---- bilinear row-resize (batched block-diagonal matrices skip junk rows;
    #      adding b2 first is exact because every WY row sums to 1) ----
    rsum = jnp.dot(WYb_ref[0], osub0, preferred_element_type=f32)
    rsum = rsum + jnp.dot(WYb_ref[1], osub1, preferred_element_type=f32)

    # ---- bilinear column-resize into the lane-padded (128-multiple) output slab ----
    o_ref[...] = jnp.dot(rsum, Mcol_ref[...], preferred_element_type=f32).astype(o_ref.dtype)


def _const_spec(arr):
    """BlockSpec for a constant operand: whole array, constant index_map, and
    single-buffered when pipeline_mode=pl.Buffered(1) is supported."""
    nd = arr.ndim
    idx = lambda *_args, _nd=nd: (0,) * _nd
    buffered = getattr(pl, "Buffered", None)
    if buffered is not None:
        try:
            return pl.BlockSpec(arr.shape, idx, pipeline_mode=buffered(1))
        except TypeError:
            pass
    return pl.BlockSpec(arr.shape, idx)


# ---------------------------------------------------------------------------
# Factory: builds operands once, returns a jitted forward (NCHW output).
# ---------------------------------------------------------------------------
def make_reconstruction_decoder(params, *, patches_resolution, img_size,
                                batch_size, upscale=2):
    # TODO(synk): only the 'pixelshuffle' upsampler with upscale=2 is implemented
    # (scales 4 / 3 and the conv_last-only 'else' path of the module are not).
    assert upscale == 2
    H, W = patches_resolution
    E = int(params["w0"].shape[2])
    C = int(params["w0"].shape[3])
    Co = int(params["w2"].shape[3])
    B = int(batch_size)

    Bt = _pick_batch_tile(B)
    if (Bt * img_size) % 8 != 0 and Bt != B:
        Bt = B                      # keep the output block sublane-aligned / full
    n_steps = B // Bt
    WE, WC, WC4 = W * E, W * C, W * 4 * C
    Btot = Bt * (H + 2)

    ops = build_decoder_operands(params, H=H, W=W, img_size=img_size,
                                 embed_dim=E, num_feat=C, num_out_ch=Co,
                                 batch_tile=Bt)
    out_pad = ops["out_pad"]
    const_names = ("A0", "b0row", "A1", "b1row", "G", "b2row",
                   "WYb", "Mcol", "rowmask")
    const_arrays = [ops[n] for n in const_names]

    kern = functools.partial(_decoder_kernel, Bt=Bt, H=H)

    call = pl.pallas_call(
        kern,
        out_shape=jax.ShapeDtypeStruct((B * img_size, out_pad), jnp.float32),
        grid_spec=pltpu.PrefetchScalarGridSpec(
            num_scalar_prefetch=0,
            grid=(n_steps,),
            in_specs=[pl.BlockSpec((Bt, H, WE), lambda i: (i, 0, 0))]
                     + [_const_spec(a) for a in const_arrays],
            out_specs=pl.BlockSpec((Bt * img_size, out_pad), lambda i: (i, 0)),
            scratch_shapes=[
                pltpu.VMEM((Btot, WE), jnp.float32),    # stacked padded tokens
                pltpu.VMEM((Btot, WC), jnp.float32),    # stacked padded conv0 out
                pltpu.VMEM((Btot, WC4), jnp.float32),   # stacked padded conv1 out
            ],
        ),
        # "parallel" shards grid steps across v7x's two TensorCores (no-op on
        # single-TC v5e/v6e); 48 MiB scoped VMEM is explicit and fits all chips.
        compiler_params=pltpu.CompilerParams(
            dimension_semantics=("parallel",),
            vmem_limit_bytes=48 * 1024 * 1024),
    )

    @jax.jit
    def forward(x_tokens):
        Bx, N, Ex = x_tokens.shape
        assert Bx == B and N == H * W and Ex == E
        # (B, N, E) tokens == NHWC (B, H, W, E); flatten (W, E) into the lane dim.
        x2d = x_tokens.astype(jnp.float32).reshape(B, H, WE)
        out = call(x2d, *const_arrays)                       # (B*img, out_pad)
        out = out.reshape(B, img_size, out_pad)[:, :, :img_size * Co]
        out = out.reshape(B, img_size, img_size, Co)
        return out.transpose(0, 3, 1, 2)                     # NCHW

    return forward


# ---------------------------------------------------------------------------
# Independent pure-JAX reference (lax conv + real pixel-shuffle + resize).
# ---------------------------------------------------------------------------
def _ref_forward(x_tokens, params, patches_resolution, img_size):
    B, N, E = x_tokens.shape
    H, W = patches_resolution
    x = x_tokens.reshape(B, H, W, E)

    def conv(x, w, b):
        y = lax.conv_general_dilated(
            x, w, (1, 1), "SAME", dimension_numbers=("NHWC", "HWIO", "NHWC"))
        return y + b[None, None, None, :]

    x = conv(x, params["w0"], params["b0"])
    x = jnp.where(x >= 0, x, 0.01 * x)
    x = conv(x, params["w1"], params["b1"])
    # PixelShuffle(2): input channel c*4 + r1*2 + r2 -> (c, 2h+r1, 2w+r2)
    Bc, Hh, Ww, C4 = x.shape
    C = C4 // 4
    x = x.reshape(B, Hh, Ww, C, 2, 2).transpose(0, 1, 4, 2, 5, 3)
    x = x.reshape(B, 2 * Hh, 2 * Ww, C)
    x = conv(x, params["w2"], params["b2"])
    WY = jnp.asarray(_bilinear_matrix(2 * H, img_size))
    WX = jnp.asarray(_bilinear_matrix(2 * W, img_size))
    y = jnp.einsum("ih,bhwc->biwc", WY, x)
    y = jnp.einsum("jw,biwc->bijc", WX, y)
    return y.transpose(0, 3, 1, 2)


# ---------------------------------------------------------------------------
if __name__ == "__main__":
    # Small shapes consistent with the module:
    #   embed_dim=32, num_feat=16, num_out_ch=3, upscale=2,
    #   patches_resolution=(8, 8)  =>  N=64,  img_size=32
    # B=4 exercises the batched-rows path (Bt=2) and the 2-step parallel grid.
    B = 4
    embed_dim = 32
    num_feat = 16
    num_out_ch = 3
    upscale = 2
    patches_resolution = (8, 8)
    img_size = 32
    N = patches_resolution[0] * patches_resolution[1]

    key = jax.random.PRNGKey(0)
    kx, k0, k1, k2, kb0, kb1, kb2 = jax.random.split(key, 7)

    x_tokens = jax.random.normal(kx, (B, N, embed_dim), dtype=jnp.float32)

    # HWIO conv weights (deterministic synthetic init)
    params = {
        "w0": 0.05 * jax.random.normal(k0, (3, 3, embed_dim, num_feat), jnp.float32),
        "b0": 0.01 * jax.random.normal(kb0, (num_feat,), jnp.float32),
        "w1": 0.05 * jax.random.normal(k1, (3, 3, num_feat, 4 * num_feat), jnp.float32),
        "b1": 0.01 * jax.random.normal(kb1, (4 * num_feat,), jnp.float32),
        "w2": 0.05 * jax.random.normal(k2, (3, 3, num_feat, num_out_ch), jnp.float32),
        "b2": 0.01 * jax.random.normal(kb2, (num_out_ch,), jnp.float32),
    }

    forward = make_reconstruction_decoder(
        params, patches_resolution=patches_resolution, img_size=img_size,
        batch_size=B, upscale=upscale)

    out = jax.block_until_ready(forward(x_tokens))
    assert out.shape == (B, num_out_ch, img_size, img_size), out.shape

    ref = jax.block_until_ready(
        _ref_forward(x_tokens, params, patches_resolution, img_size))
    max_err = float(jnp.max(jnp.abs(out - ref)))
    assert max_err < 2e-3, max_err

    print("KERNEL_OK")
</pallas_src>

<mosaic_0001>
module attributes {stable_mosaic.version = 11 : i64} {
  func.func @_decoder_kernel(%arg0: i32, %arg1: memref<2x8x256xf32, #tpu.memory_space<vmem>>, %arg2: memref<3x256x128xf32, #tpu.memory_space<vmem>>, %arg3: memref<1x128xf32, #tpu.memory_space<vmem>>, %arg4: memref<3x128x512xf32, #tpu.memory_space<vmem>>, %arg5: memref<1x512xf32, #tpu.memory_space<vmem>>, %arg6: memref<4x512x48xf32, #tpu.memory_space<vmem>>, %arg7: memref<1x48xf32, #tpu.memory_space<vmem>>, %arg8: memref<2x64x18xf32, #tpu.memory_space<vmem>>, %arg9: memref<48x128xf32, #tpu.memory_space<vmem>>, %arg10: memref<18x1xf32, #tpu.memory_space<vmem>>, %arg11: memref<64x128xf32, #tpu.memory_space<vmem>>, %arg12: memref<20x256xf32, #tpu.memory_space<vmem>>, %arg13: memref<20x128xf32, #tpu.memory_space<vmem>>, %arg14: memref<20x512xf32, #tpu.memory_space<vmem>>) attributes {dimension_semantics = [#tpu.dimension_semantics<parallel>], iteration_bounds = array<i64: 2>, scalar_prefetch = 0 : i64, scratch_operands = 3 : i64, tpu.core_type = #tpu.core_type<tc>, window_params = [{transform_indices = @transform_0, window_bounds = array<i64: 2, 8, 256>}, {pipeline_mode = #tpu.pipeline_mode<synchronous>, transform_indices = @transform_1, window_bounds = array<i64: 3, 256, 128>}, {pipeline_mode = #tpu.pipeline_mode<synchronous>, transform_indices = @transform_2, window_bounds = array<i64: 1, 128>}, {pipeline_mode = #tpu.pipeline_mode<synchronous>, transform_indices = @transform_3, window_bounds = array<i64: 3, 128, 512>}, {pipeline_mode = #tpu.pipeline_mode<synchronous>, transform_indices = @transform_4, window_bounds = array<i64: 1, 512>}, {pipeline_mode = #tpu.pipeline_mode<synchronous>, transform_indices = @transform_5, window_bounds = array<i64: 4, 512, 48>}, {pipeline_mode = #tpu.pipeline_mode<synchronous>, transform_indices = @transform_6, window_bounds = array<i64: 1, 48>}, {pipeline_mode = #tpu.pipeline_mode<synchronous>, transform_indices = @transform_7, window_bounds = array<i64: 2, 64, 18>}, {pipeline_mode = #tpu.pipeline_mode<synchronous>, transform_indices = @transform_8, window_bounds = array<i64: 48, 128>}, {pipeline_mode = #tpu.pipeline_mode<synchronous>, transform_indices = @transform_9, window_bounds = array<i64: 18, 1>}, {transform_indices = @transform_10, window_bounds = array<i64: 64, 128>}]} {
    %cst = arith.constant 0.000000e+00 : f32
    %0 = vector.broadcast %cst : f32 to vector<1x256xf32>
    %c0 = arith.constant 0 : index
    %c0_0 = arith.constant 0 : index
    %1 = vector.load %arg12[%c0, %c0_0] : memref<20x256xf32, #tpu.memory_space<vmem>>, vector<1x256xf32>
    tpu.vector_store %arg12[%c0, %c0_0], %0 {strides = array<i32>} : memref<20x256xf32, #tpu.memory_space<vmem>>, vector<1x256xf32>,
    %c0_1 = arith.constant 0 : index
    %c0_2 = arith.constant 0 : index
    %c0_3 = arith.constant 0 : index
    %2 = vector.load %arg1[%c0_1, %c0_2, %c0_3] : memref<2x8x256xf32, #tpu.memory_space<vmem>>, vector<1x8x256xf32>
    %3 = vector.shape_cast %2 : vector<1x8x256xf32> to vector<8x256xf32>
    %c1 = arith.constant 1 : index
    %c0_4 = arith.constant 0 : index
    %4 = vector.load %arg12[%c1, %c0_4] : memref<20x256xf32, #tpu.memory_space<vmem>>, vector<8x256xf32>
    tpu.vector_store %arg12[%c1, %c0_4], %3 {strides = array<i32>} : memref<20x256xf32, #tpu.memory_space<vmem>>, vector<8x256xf32>,
    %c9 = arith.constant 9 : index
    %c0_5 = arith.constant 0 : index
    %5 = vector.load %arg12[%c9, %c0_5] : memref<20x256xf32, #tpu.memory_space<vmem>>, vector<1x256xf32>
    tpu.vector_store %arg12[%c9, %c0_5], %0 {strides = array<i32>} : memref<20x256xf32, #tpu.memory_space<vmem>>, vector<1x256xf32>,
    %c10 = arith.constant 10 : index
    %c0_6 = arith.constant 0 : index
    %6 = vector.load %arg12[%c10, %c0_6] : memref<20x256xf32, #tpu.memory_space<vmem>>, vector<1x256xf32>
    tpu.vector_store %arg12[%c10, %c0_6], %0 {strides = array<i32>} : memref<20x256xf32, #tpu.memory_space<vmem>>, vector<1x256xf32>,
    %c1_7 = arith.constant 1 : index
    %c0_8 = arith.constant 0 : index
    %c0_9 = arith.constant 0 : index
    %7 = vector.load %arg1[%c1_7, %c0_8, %c0_9] : memref<2x8x256xf32, #tpu.memory_space<vmem>>, vector<1x8x256xf32>
    %8 = vector.shape_cast %7 : vector<1x8x256xf32> to vector<8x256xf32>
    %c11 = arith.constant 11 : index
    %c0_10 = arith.constant 0 : index
    %9 = vector.load %arg12[%c11, %c0_10] : memref<20x256xf32, #tpu.memory_space<vmem>>, vector<8x256xf32>
    tpu.vector_store %arg12[%c11, %c0_10], %8 {strides = array<i32>} : memref<20x256xf32, #tpu.memory_space<vmem>>, vector<8x256xf32>,
    %c19 = arith.constant 19 : index
    %c0_11 = arith.constant 0 : index
    %10 = vector.load %arg12[%c19, %c0_11] : memref<20x256xf32, #tpu.memory_space<vmem>>, vector<1x256xf32>
    tpu.vector_store %arg12[%c19, %c0_11], %0 {strides = array<i32>} : memref<20x256xf32, #tpu.memory_space<vmem>>, vector<1x256xf32>,
    %c0_12 = arith.constant 0 : index
    %c0_13 = arith.constant 0 : index
    %11 = vector.load %arg10[%c0_12, %c0_13] : memref<18x1xf32, #tpu.memory_space<vmem>>, vector<18x1xf32>
    %c0_14 = arith.constant 0 : index
    %c0_15 = arith.constant 0 : index
    %12 = vector.load %arg3[%c0_14, %c0_15] : memref<1x128xf32, #tpu.memory_space<vmem>>, vector<1x128xf32>
    %c0_16 = arith.constant 0 : index
    %c0_17 = arith.constant 0 : index
    %13 = vector.load %arg12[%c0_16, %c0_17] : memref<20x256xf32, #tpu.memory_space<vmem>>, vector<18x256xf32>
    %c0_18 = arith.constant 0 : index
    %c0_19 = arith.constant 0 : index
    %c0_20 = arith.constant 0 : index
    %14 = vector.load %arg2[%c0_18, %c0_19, %c0_20] : memref<3x256x128xf32, #tpu.memory_space<vmem>>, vector<1x256x128xf32>
    %15 = vector.shape_cast %14 : vector<1x256x128xf32> to vector<256x128xf32>
    %cst_21 = arith.constant dense<0.000000e+00> : vector<18x128xf32>
    %16 = tpu.matmul %13, %15, %cst_21 {dimension_numbers = #tpu.dot_dimension_numbers<[1], [0], [0], [1], [0, 0, 1, 1], [], []>} : vector<18x256xf32>, vector<256x128xf32>, vector<18x128xf32> -> vector<18x128xf32>
    %17 = vector.broadcast %12 : vector<1x128xf32> to vector<18x128xf32>
    %18 = arith.addf %17, %16 : vector<18x128xf32>
    %c1_22 = arith.constant 1 : index
    %c0_23 = arith.constant 0 : index
    %19 = vector.load %arg12[%c1_22, %c0_23] : memref<20x256xf32, #tpu.memory_space<vmem>>, vector<18x256xf32>
    %c1_24 = arith.constant 1 : index
    %c0_25 = arith.constant 0 : index
    %c0_26 = arith.constant 0 : index
    %20 = vector.load %arg2[%c1_24, %c0_25, %c0_26] : memref<3x256x128xf32, #tpu.memory_space<vmem>>, vector<1x256x128xf32>
    %21 = vector.shape_cast %20 : vector<1x256x128xf32> to vector<256x128xf32>
    %cst_27 = arith.constant dense<0.000000e+00> : vector<18x128xf32>
    %22 = tpu.matmul %19, %21, %cst_27 {dimension_numbers = #tpu.dot_dimension_numbers<[1], [0], [0], [1], [0, 0, 1, 1], [], []>} : vector<18x256xf32>, vector<256x128xf32>, vector<18x128xf32> -> vector<18x128xf32>
    %23 = arith.addf %18, %22 : vector<18x128xf32>
    %c2 = arith.constant 2 : index
    %c0_28 = arith.constant 0 : index
    %24 = vector.load %arg12[%c2, %c0_28] : memref<20x256xf32, #tpu.memory_space<vmem>>, vector<18x256xf32>
    %c2_29 = arith.constant 2 : index
    %c0_30 = arith.constant 0 : index
    %c0_31 = arith.constant 0 : index
    %25 = vector.load %arg2[%c2_29, %c0_30, %c0_31] : memref<3x256x128xf32, #tpu.memory_space<vmem>>, vector<1x256x128xf32>
    %26 = vector.shape_cast %25 : vector<1x256x128xf32> to vector<256x128xf32>
    %cst_32 = arith.constant dense<0.000000e+00> : vector<18x128xf32>
    %27 = tpu.matmul %24, %26, %cst_32 {dimension_numbers = #tpu.dot_dimension_numbers<[1], [0], [0], [1], [0, 0, 1, 1], [], []>} : vector<18x256xf32>, vector<256x128xf32>, vector<18x128xf32> -> vector<18x128xf32>
    %28 = arith.addf %23, %27 : vector<18x128xf32>
    %cst_33 = arith.constant 0.000000e+00 : f32
    %29 = vector.broadcast %cst_33 : f32 to vector<18x128xf32>
    %30 = arith.cmpf oge, %28, %29 : vector<18x128xf32>
    %cst_34 = arith.constant 0.00999999977 : f32
    %31 = vector.broadcast %cst_34 : f32 to vector<18x128xf32>
    %32 = arith.mulf %31, %28 : vector<18x128xf32>
    %33 = arith.select %30, %28, %32 : vector<18x128xi1>, vector<18x128xf32>
    %cst_35 = arith.constant 0.000000e+00 : f32
    %34 = vector.broadcast %cst_35 : f32 to vector<1x128xf32>
    %c0_36 = arith.constant 0 : index
    %c0_37 = arith.constant 0 : index
    %35 = vector.load %arg13[%c0_36, %c0_37] : memref<20x128xf32, #tpu.memory_space<vmem>>, vector<1x128xf32>
    tpu.vector_store %arg13[%c0_36, %c0_37], %34 {strides = array<i32>} : memref<20x128xf32, #tpu.memory_space<vmem>>, vector<1x128xf32>,
    %c19_38 = arith.constant 19 : index
    %c0_39 = arith.constant 0 : index
    %36 = vector.load %arg13[%c19_38, %c0_39] : memref<20x128xf32, #tpu.memory_space<vmem>>, vector<1x128xf32>
    tpu.vector_store %arg13[%c19_38, %c0_39], %34 {strides = array<i32>} : memref<20x128xf32, #tpu.memory_space<vmem>>, vector<1x128xf32>,
    %37 = vector.broadcast %11 : vector<18x1xf32> to vector<18x128xf32>
    %38 = arith.mulf %33, %37 : vector<18x128xf32>
    %c1_40 = arith.constant 1 : index
    %c0_41 = arith.constant 0 : index
    %39 = vector.load %arg13[%c1_40, %c0_41] : memref<20x128xf32, #tpu.memory_space<vmem>>, vector<18x128xf32>
    tpu.vector_store %arg13[%c1_40, %c0_41], %38 {strides = array<i32>} : memref<20x128xf32, #tpu.memory_space<vmem>>, vector<18x128xf32>,
    %c0_42 = arith.constant 0 : index
    %c0_43 = arith.constant 0 : index
    %40 = vector.load %arg5[%c0_42, %c0_43] : memref<1x512xf32, #tpu.memory_space<vmem>>, vector<1x512xf32>
    %c0_44 = arith.constant 0 : index
    %c0_45 = arith.constant 0 : index
    %41 = vector.load %arg13[%c0_44, %c0_45] : memref<20x128xf32, #tpu.memory_space<vmem>>, vector<18x128xf32>
    %c0_46 = arith.constant 0 : index
    %c0_47 = arith.constant 0 : index
    %c0_48 = arith.constant 0 : index
    %42 = vector.load %arg4[%c0_46, %c0_47, %c0_48] : memref<3x128x512xf32, #tpu.memory_space<vmem>>, vector<1x128x512xf32>
    %43 = vector.shape_cast %42 : vector<1x128x512xf32> to vector<128x512xf32>
    %cst_49 = arith.constant dense<0.000000e+00> : vector<18x512xf32>
    %44 = tpu.matmul %41, %43, %cst_49 {dimension_numbers = #tpu.dot_dimension_numbers<[1], [0], [0], [1], [0, 0, 1, 1], [], []>} : vector<18x128xf32>, vector<128x512xf32>, vector<18x512xf32> -> vector<18x512xf32>
    %45 = vector.broadcast %40 : vector<1x512xf32> to vector<18x512xf32>
    %46 = arith.addf %45, %44 : vector<18x512xf32>
    %c1_50 = arith.constant 1 : index
    %c0_51 = arith.constant 0 : index
    %47 = vector.load %arg13[%c1_50, %c0_51] : memref<20x128xf32, #tpu.memory_space<vmem>>, vector<18x128xf32>
    %c1_52 = arith.constant 1 : index
    %c0_53 = arith.constant 0 : index
    %c0_54 = arith.constant 0 : index
    %48 = vector.load %arg4[%c1_52, %c0_53, %c0_54] : memref<3x128x512xf32, #tpu.memory_space<vmem>>, vector<1x128x512xf32>
    %49 = vector.shape_cast %48 : vector<1x128x512xf32> to vector<128x512xf32>
    %cst_55 = arith.constant dense<0.000000e+00> : vector<18x512xf32>
    %50 = tpu.matmul %47, %49, %cst_55 {dimension_numbers = #tpu.dot_dimension_numbers<[1], [0], [0], [1], [0, 0, 1, 1], [], []>} : vector<18x128xf32>, vector<128x512xf32>, vector<18x512xf32> -> vector<18x512xf32>
    %51 = arith.addf %46, %50 : vector<18x512xf32>
    %c2_56 = arith.constant 2 : index
    %c0_57 = arith.constant 0 : index
    %52 = vector.load %arg13[%c2_56, %c0_57] : memref<20x128xf32, #tpu.memory_space<vmem>>, vector<18x128xf32>
    %c2_58 = arith.constant 2 : index
    %c0_59 = arith.constant 0 : index
    %c0_60 = arith.constant 0 : index
    %53 = vector.load %arg4[%c2_58, %c0_59, %c0_60] : memref<3x128x512xf32, #tpu.memory_space<vmem>>, vector<1x128x512xf32>
    %54 = vector.shape_cast %53 : vector<1x128x512xf32> to vector<128x512xf32>
    %cst_61 = arith.constant dense<0.000000e+00> : vector<18x512xf32>
    %55 = tpu.matmul %52, %54, %cst_61 {dimension_numbers = #tpu.dot_dimension_numbers<[1], [0], [0], [1], [0, 0, 1, 1], [], []>} : vector<18x128xf32>, vector<128x512xf32>, vector<18x512xf32> -> vector<18x512xf32>
    %56 = arith.addf %51, %55 : vector<18x512xf32>
    %cst_62 = arith.constant 0.000000e+00 : f32
    %57 = vector.broadcast %cst_62 : f32 to vector<1x512xf32>
    %c0_63 = arith.constant 0 : index
    %c0_64 = arith.constant 0 : index
    %58 = vector.load %arg14[%c0_63, %c0_64] : memref<20x512xf32, #tpu.memory_space<vmem>>, vector<1x512xf32>
    tpu.vector_store %arg14[%c0_63, %c0_64], %57 {strides = array<i32>} : memref<20x512xf32, #tpu.memory_space<vmem>>, vector<1x512xf32>,
    %c19_65 = arith.constant 19 : index
    %c0_66 = arith.constant 0 : index
    %59 = vector.load %arg14[%c19_65, %c0_66] : memref<20x512xf32, #tpu.memory_space<vmem>>, vector<1x512xf32>
    tpu.vector_store %arg14[%c19_65, %c0_66], %57 {strides = array<i32>} : memref<20x512xf32, #tpu.memory_space<vmem>>, vector<1x512xf32>,
    %60 = vector.broadcast %11 : vector<18x1xf32> to vector<18x512xf32>
    %61 = arith.mulf %56, %60 : vector<18x512xf32>
    %c1_67 = arith.constant 1 : index
    %c0_68 = arith.constant 0 : index
    %62 = vector.load %arg14[%c1_67, %c0_68] : memref<20x512xf32, #tpu.memory_space<vmem>>, vector<18x512xf32>
    tpu.vector_store %arg14[%c1_67, %c0_68], %61 {strides = array<i32>} : memref<20x512xf32, #tpu.memory_space<vmem>>, vector<18x512xf32>,
    %c0_69 = arith.constant 0 : index
    %c0_70 = arith.constant 0 : index
    %63 = vector.load %arg7[%c0_69, %c0_70] : memref<1x48xf32, #tpu.memory_space<vmem>>, vector<1x48xf32>
    %c0_71 = arith.constant 0 : index
    %c0_72 = arith.constant 0 : index
    %64 = vector.load %arg14[%c0_71, %c0_72] : memref<20x512xf32, #tpu.memory_space<vmem>>, vector<18x512xf32>
    %c0_73 = arith.constant 0 : index
    %c0_74 = arith.constant 0 : index
    %c0_75 = arith.constant 0 : index
    %65 = vector.load %arg6[%c0_73, %c0_74, %c0_75] : memref<4x512x48xf32, #tpu.memory_space<vmem>>, vector<1x512x48xf32>
    %66 = vector.shape_cast %65 : vector<1x512x48xf32> to vector<512x48xf32>
    %cst_76 = arith.constant dense<0.000000e+00> : vector<18x48xf32>
    %67 = tpu.matmul %64, %66, %cst_76 {dimension_numbers = #tpu.dot_dimension_numbers<[1], [0], [0], [1], [0, 0, 1, 1], [], []>} : vector<18x512xf32>, vector<512x48xf32>, vector<18x48xf32> -> vector<18x48xf32>
    %68 = vector.broadcast %63 : vector<1x48xf32> to vector<18x48xf32>
    %69 = arith.addf %68, %67 : vector<18x48xf32>
    %c1_77 = arith.constant 1 : index
    %c0_78 = arith.constant 0 : index
    %70 = vector.load %arg14[%c1_77, %c0_78] : memref<20x512xf32, #tpu.memory_space<vmem>>, vector<18x512xf32>
    %c1_79 = arith.constant 1 : index
    %c0_80 = arith.constant 0 : index
    %c0_81 = arith.constant 0 : index
    %71 = vector.load %arg6[%c1_79, %c0_80, %c0_81] : memref<4x512x48xf32, #tpu.memory_space<vmem>>, vector<1x512x48xf32>
    %72 = vector.shape_cast %71 : vector<1x512x48xf32> to vector<512x48xf32>
    %cst_82 = arith.constant dense<0.000000e+00> : vector<18x48xf32>
    %73 = tpu.matmul %70, %72, %cst_82 {dimension_numbers = #tpu.dot_dimension_numbers<[1], [0], [0], [1], [0, 0, 1, 1], [], []>} : vector<18x512xf32>, vector<512x48xf32>, vector<18x48xf32> -> vector<18x48xf32>
    %74 = arith.addf %69, %73 : vector<18x48xf32>
    %c0_83 = arith.constant 0 : index
    %c0_84 = arith.constant 0 : index
    %75 = vector.load %arg7[%c0_83, %c0_84] : memref<1x48xf32, #tpu.memory_space<vmem>>, vector<1x48xf32>
    %c1_85 = arith.constant 1 : index
    %c0_86 = arith.constant 0 : index
    %76 = vector.load %arg14[%c1_85, %c0_86] : memref<20x512xf32, #tpu.memory_space<vmem>>, vector<18x512xf32>
    %c2_87 = arith.constant 2 : index
    %c0_88 = arith.constant 0 : index
    %c0_89 = arith.constant 0 : index
    %77 = vector.load %arg6[%c2_87, %c0_88, %c0_89] : memref<4x512x48xf32, #tpu.memory_space<vmem>>, vector<1x512x48xf32>
    %78 = vector.shape_cast %77 : vector<1x512x48xf32> to vector<512x48xf32>
    %cst_90 = arith.constant dense<0.000000e+00> : vector<18x48xf32>
    %79 = tpu.matmul %76, %78, %cst_90 {dimension_numbers = #tpu.dot_dimension_numbers<[1], [0], [0], [1], [0, 0, 1, 1], [], []>} : vector<18x512xf32>, vector<512x48xf32>, vector<18x48xf32> -> vector<18x48xf32>
    %80 = vector.broadcast %75 : vector<1x48xf32> to vector<18x48xf32>
    %81 = arith.addf %80, %79 : vector<18x48xf32>
    %c2_91 = arith.constant 2 : index
    %c0_92 = arith.constant 0 : index
    %82 = vector.load %arg14[%c2_91, %c0_92] : memref<20x512xf32, #tpu.memory_space<vmem>>, vector<18x512xf32>
    %c3 = arith.constant 3 : index
    %c0_93 = arith.constant 0 : index
    %c0_94 = arith.constant 0 : index
    %83 = vector.load %arg6[%c3, %c0_93, %c0_94] : memref<4x512x48xf32, #tpu.memory_space<vmem>>, vector<1x512x48xf32>
    %84 = vector.shape_cast %83 : vector<1x512x48xf32> to vector<512x48xf32>
    %cst_95 = arith.constant dense<0.000000e+00> : vector<18x48xf32>
    %85 = tpu.matmul %82, %84, %cst_95 {dimension_numbers = #tpu.dot_dimension_numbers<[1], [0], [0], [1], [0, 0, 1, 1], [], []>} : vector<18x512xf32>, vector<512x48xf32>, vector<18x48xf32> -> vector<18x48xf32>
    %86 = arith.addf %81, %85 : vector<18x48xf32>
    %c0_96 = arith.constant 0 : index
    %c0_97 = arith.constant 0 : index
    %c0_98 = arith.constant 0 : index
    %87 = vector.load %arg8[%c0_96, %c0_97, %c0_98] : memref<2x64x18xf32, #tpu.memory_space<vmem>>, vector<1x64x18xf32>
    %88 = vector.shape_cast %87 : vector<1x64x18xf32> to vector<64x18xf32>
    %cst_99 = arith.constant dense<0.000000e+00> : vector<64x48xf32>
    %89 = tpu.matmul %88, %74, %cst_99 {dimension_numbers = #tpu.dot_dimension_numbers<[1], [0], [0], [1], [0, 0, 1, 1], [], []>} : vector<64x18xf32>, vector<18x48xf32>, vector<64x48xf32> -> vector<64x48xf32>
    %c1_100 = arith.constant 1 : index
    %c0_101 = arith.constant 0 : index
    %c0_102 = arith.constant 0 : index
    %90 = vector.load %arg8[%c1_100, %c0_101, %c0_102] : memref<2x64x18xf32, #tpu.memory_space<vmem>>, vector<1x64x18xf32>
    %91 = vector.shape_cast %90 : vector<1x64x18xf32> to vector<64x18xf32>
    %cst_103 = arith.constant dense<0.000000e+00> : vector<64x48xf32>
    %92 = tpu.matmul %91, %86, %cst_103 {dimension_numbers = #tpu.dot_dimension_numbers<[1], [0], [0], [1], [0, 0, 1, 1], [], []>} : vector<64x18xf32>, vector<18x48xf32>, vector<64x48xf32> -> vector<64x48xf32>
    %93 = arith.addf %89, %92 : vector<64x48xf32>
    %c0_104 = arith.constant 0 : index
    %c0_105 = arith.constant 0 : index
    %94 = vector.load %arg9[%c0_104, %c0_105] : memref<48x128xf32, #tpu.memory_space<vmem>>, vector<48x128xf32>
    %cst_106 = arith.constant dense<0.000000e+00> : vector<64x128xf32>
    %95 = tpu.matmul %93, %94, %cst_106 {dimension_numbers = #tpu.dot_dimension_numbers<[1], [0], [0], [1], [0, 0, 1, 1], [], []>} : vector<64x48xf32>, vector<48x128xf32>, vector<64x128xf32> -> vector<64x128xf32>
    %c0_107 = arith.constant 0 : index
    %c0_108 = arith.constant 0 : index
    %96 = vector.load %arg11[%c0_107, %c0_108] : memref<64x128xf32, #tpu.memory_space<vmem>>, vector<64x128xf32>
    tpu.vector_store %arg11[%c0_107, %c0_108], %95 {strides = array<i32>} : memref<64x128xf32, #tpu.memory_space<vmem>>, vector<64x128xf32>,
    return
  }
  func.func @transform_0(%arg0: i32) -> (i32, i32, i32) {
    %c0_i32 = arith.constant 0 : i32
    %c0_i32_0 = arith.constant 0 : i32
    %c0_i32_1 = arith.constant 0 : i32
    return %arg0, %c0_i32, %c0_i32_0 : i32, i32, i32
  }
  func.func @transform_1(%arg0: i32) -> (i32, i32, i32) {
    %c0_i32 = arith.constant 0 : i32
    %c0_i32_0 = arith.constant 0 : i32
    %c0_i32_1 = arith.constant 0 : i32
    %c0_i32_2 = arith.constant 0 : i32
    return %c0_i32, %c0_i32_0, %c0_i32_1 : i32, i32, i32
  }
  func.func @transform_2(%arg0: i32) -> (i32, i32) {
    %c0_i32 = arith.constant 0 : i32
    %c0_i32_0 = arith.constant 0 : i32
    %c0_i32_1 = arith.constant 0 : i32
    return %c0_i32, %c0_i32_0 : i32, i32
  }
  func.func @transform_3(%arg0: i32) -> (i32, i32, i32) {
    %c0_i32 = arith.constant 0 : i32
    %c0_i32_0 = arith.constant 0 : i32
    %c0_i32_1 = arith.constant 0 : i32
    %c0_i32_2 = arith.constant 0 : i32
    return %c0_i32, %c0_i32_0, %c0_i32_1 : i32, i32, i32
  }
  func.func @transform_4(%arg0: i32) -> (i32, i32) {
    %c0_i32 = arith.constant 0 : i32
    %c0_i32_0 = arith.constant 0 : i32
    %c0_i32_1 = arith.constant 0 : i32
    return %c0_i32, %c0_i32_0 : i32, i32
  }
  func.func @transform_5(%arg0: i32) -> (i32, i32, i32) {
    %c0_i32 = arith.constant 0 : i32
    %c0_i32_0 = arith.constant 0 : i32
    %c0_i32_1 = arith.constant 0 : i32
    %c0_i32_2 = arith.constant 0 : i32
    return %c0_i32, %c0_i32_0, %c0_i32_1 : i32, i32, i32
  }
  func.func @transform_6(%arg0: i32) -> (i32, i32) {
    %c0_i32 = arith.constant 0 : i32
    %c0_i32_0 = arith.constant 0 : i32
    %c0_i32_1 = arith.constant 0 : i32
    return %c0_i32, %c0_i32_0 : i32, i32
  }
  func.func @transform_7(%arg0: i32) -> (i32, i32, i32) {
    %c0_i32 = arith.constant 0 : i32
    %c0_i32_0 = arith.constant 0 : i32
    %c0_i32_1 = arith.constant 0 : i32
    %c0_i32_2 = arith.constant 0 : i32
    return %c0_i32, %c0_i32_0, %c0_i32_1 : i32, i32, i32
  }
  func.func @transform_8(%arg0: i32) -> (i32, i32) {
    %c0_i32 = arith.constant 0 : i32
    %c0_i32_0 = arith.constant 0 : i32
    %c0_i32_1 = arith.constant 0 : i32
    return %c0_i32, %c0_i32_0 : i32, i32
  }
  func.func @transform_9(%arg0: i32) -> (i32, i32) {
    %c0_i32 = arith.constant 0 : i32
    %c0_i32_0 = arith.constant 0 : i32
    %c0_i32_1 = arith.constant 0 : i32
    return %c0_i32, %c0_i32_0 : i32, i32
  }
  func.func @transform_10(%arg0: i32) -> (i32, i32) {
    %c0_i32 = arith.constant 0 : i32
    %c0_i32_0 = arith.constant 0 : i32
    return %arg0, %c0_i32 : i32, i32
  }
}

</mosaic_0001>

<llo_original>
// kernel: forward.1
$region0: #{forward.1}
  #allocation0 [shape = 'u32[]', space=smem, size = 0x4, offset = 0x4, fixed_abs, tag = 'smem constant byte address 0x4 - core index']
  #allocation1 [shape = 'u32[144,128]{1,0:T(1,128)}', space=vmem, size = 0x12000, scoped, tag = 'internal scratch']
  #allocation2 [shape = 'f32[20,256]{1,0:T(8,128)}', space=vmem, size = 0x6000, scoped, tag = 'scratch operand']
  #allocation3 [shape = 'f32[20,128]{1,0:T(8,128)}', space=vmem, size = 0x3000, scoped, tag = 'scratch operand']
  #allocation4 [shape = 'f32[20,512]{1,0:T(8,128)}', space=vmem, size = 0xc000, scoped, tag = 'scratch operand']
  %s0 = inlined_call_operand.vmem [shape: f32[4,8,256], index: 0, kind: input, shape index: {}]
  %s1 = inlined_call_operand.hbm [shape: f32[3,256,128], index: 1, kind: input, shape index: {}]
  %s2 = inlined_call_operand.vmem [shape: f32[1,128], index: 2, kind: input, shape index: {}]
  %s3 = inlined_call_operand.hbm [shape: f32[3,128,512], index: 3, kind: input, shape index: {}]
  %s4 = inlined_call_operand.vmem [shape: f32[1,512], index: 4, kind: input, shape index: {}]
  %s5 = inlined_call_operand.hbm [shape: f32[4,512,48], index: 5, kind: input, shape index: {}]
  %s6 = inlined_call_operand.vmem [shape: f32[1,48], index: 6, kind: input, shape index: {}]
  %s7 = inlined_call_operand.vmem [shape: f32[2,64,18], index: 7, kind: input, shape index: {}]
  %s8 = inlined_call_operand.vmem [shape: f32[48,128], index: 8, kind: input, shape index: {}]
  %s9 = inlined_call_operand.vmem [shape: f32[18,1], index: 9, kind: input, shape index: {}]
  %s10 = inlined_call_operand.vmem [shape: f32[128,128], index: 10, kind: output, shape index: {}]
  %s11 = sld [smem:[#allocation0]]
  $region85: #{forward.1} parent=0
    _
  %s13 = ssub.s32 1, %s11
  %s14 = scalar_select 0, %s13, %s11
  $region1: #{forward.1} parent=0
    #allocation5 [shape = 'u8[393216]{0}', space=vmem, size = 0x60000, scoped, tag = 'input window, operand 1, single buffered']
    #allocation6 [shape = 's32[2]{0}', space=sflag, size = 0x8, scoped, tag = 'scoped memory for forward.1']
    #allocation7 [shape = 'u8[786432]{0}', space=vmem, size = 0xc0000, scoped, tag = 'input window, operand 3, single buffered']
    #allocation8 [shape = 's32[1]{0}', space=sflag, size = 0x4, scoped, tag = 'scoped memory for forward.1']
    #allocation9 [shape = 'u8[1048576]{0}', space=vmem, size = 0x100000, scoped, tag = 'input window, operand 5, single buffered']
    %15 = vsyncpa [#allocation6], 0
    %16 = vsyncpa [#allocation8], 0
    loop: start=0, step=1, limit=4
    $region2: #{forward.1} parent=1 // loop_pre_header
      _
    $region3: #{forward.1} parent=1 // loop_header
      %s18 = sphi 0, %s22
      %p19 = scmp.ge.s32.totalorder %s18, 4
      %s28 = sphi 0, %s30
      %s31 = sphi 0, %s28
      %s32 = sphi 0, %s31
      %s48 = sphi 0, %s32
      %s52 = sphi 0, %s52
      %s54 = sphi 0, %s52
      %s55 = sphi 0, %s54
      %s69 = sphi 0, %s55
      %s73 = sphi 0, %s73
      %s75 = sphi 0, %s73
      %s76 = sphi 0, %s75
      %s90 = sphi 0, %s76
      %s94 = sphi 0, %s94
      %s96 = sphi 0, %s94
      %s97 = sphi 0, %s96
      %s111 = sphi 0, %s97
      %s115 = sphi 0, %s115
      %s117 = sphi 0, %s115
      %s118 = sphi 0, %s117
      %s132 = sphi 0, %s118
      %s136 = sphi 0, %s136
      %s138 = sphi 0, %s136
      %s139 = sphi 0, %s138
      %s153 = sphi 0, %s139
      %s157 = sphi 0, %s157
      %s159 = sphi 0, %s157
      %s160 = sphi 0, %s159
      %s174 = sphi 0, %s160
      %s178 = sphi 0, %s178
      %s180 = sphi 0, %s178
      %s181 = sphi 0, %s180
      %s195 = sphi 0, %s181
      %s199 = sphi 0, %s199
      %s201 = sphi 0, %s199
      %s202 = sphi 0, %s201
      %s216 = sphi 0, %s202
      %s220 = sphi 0, %s220
      %s222 = sphi 0, %s220
      %s223 = sphi 0, %s222
      %s237 = sphi 0, %s223
      %s243 = sphi 0, %s245
      %s246 = sphi 0, %s243
      %s247 = sphi 0, %s246
      %s263 = sphi 0, %s247
    $region4: #{forward.1} parent=1 // loop_header_branch
      %21 = sbr.rel (%p19) target = $region8
    $region5: #{forward.1} parent=1 // loop_body
      %s23 = ssub.s32 %s18, 1
      %s24 = ssub.s32 %s18, 2
      %s25 = sadd.s32 %s18, 1
      %s26 = ssub.s32 %s18, %s25
      %p27 = scmp.eq.s32.totalorder %s26, 0
      %s29 = sadd.s32 %s28, 1
      %s30 = scalar_select %p27, %s28, %s29
      %p33 = pneg %p27
      %p34 = scmp.eq.s32.totalorder %s18, 1
      %p35 = por %p33, %p34
      %p36 = scmp.ne.s32.totalorder %s28, %s31
      %p37 = scmp.eq.s32.totalorder %s18, 0
      %p38 = por %p36, %p37
      %p39 = scmp.ne.s32.totalorder %s28, %s31
      %p40 = scmp.eq.s32.totalorder %s23, 1
      %p41 = por %p39, %p40
      %p42 = scmp.ne.s32.totalorder %s31, %s32
      %p43 = scmp.eq.s32.totalorder %s23, 0
      %p44 = por %p42, %p43
      %p45 = scmp.ne.s32.totalorder %s31, %s32
      %p46 = scmp.eq.s32.totalorder %s24, 1
      %p47 = por %p45, %p46
      %p49 = scmp.ne.s32.totalorder %s32, %s48
      %p50 = scmp.eq.s32.totalorder %s24, 0
      %p51 = por %p49, %p50
      %s53 = sadd.s32 %s52, 1
      %p56 = scmp.eq.s32.totalorder %s18, 1
      %p57 = scmp.ne.s32.totalorder %s52, %s54
      %p58 = scmp.eq.s32.totalorder %s18, 0
      %p59 = por %p57, %p58
      %p60 = scmp.ne.s32.totalorder %s52, %s54
      %p61 = scmp.eq.s32.totalorder %s23, 1
      %p62 = por %p60, %p61
      %p63 = scmp.ne.s32.totalorder %s54, %s55
      %p64 = scmp.eq.s32.totalorder %s23, 0
      %p65 = por %p63, %p64
      %p66 = scmp.ne.s32.totalorder %s54, %s55
      %p67 = scmp.eq.s32.totalorder %s24, 1
      %p68 = por %p66, %p67
      %p70 = scmp.ne.s32.totalorder %s55, %s69
      %p71 = scmp.eq.s32.totalorder %s24, 0
      %p72 = por %p70, %p71
      %s74 = sadd.s32 %s73, 1
      %p77 = scmp.eq.s32.totalorder %s18, 1
      %p78 = scmp.ne.s32.totalorder %s73, %s75
      %p79 = scmp.eq.s32.totalorder %s18, 0
      %p80 = por %p78, %p79
      %p81 = scmp.ne.s32.totalorder %s73, %s75
      %p82 = scmp.eq.s32.totalorder %s23, 1
      %p83 = por %p81, %p82
      %p84 = scmp.ne.s32.totalorder %s75, %s76
      %p85 = scmp.eq.s32.totalorder %s23, 0
      %p86 = por %p84, %p85
      %p87 = scmp.ne.s32.totalorder %s75, %s76
      %p88 = scmp.eq.s32.totalorder %s24, 1
      %p89 = por %p87, %p88
      %p91 = scmp.ne.s32.totalorder %s76, %s90
      %p92 = scmp.eq.s32.totalorder %s24, 0
      %p93 = por %p91, %p92
      %s95 = sadd.s32 %s94, 1
      %p98 = scmp.eq.s32.totalorder %s18, 1
      %p99 = scmp.ne.s32.totalorder %s94, %s96
      %p100 = scmp.eq.s32.totalorder %s18, 0
      %p101 = por %p99, %p100
      %p102 = scmp.ne.s32.totalorder %s94, %s96
      %p103 = scmp.eq.s32.totalorder %s23, 1
      %p104 = por %p102, %p103
      %p105 = scmp.ne.s32.totalorder %s96, %s97
      %p106 = scmp.eq.s32.totalorder %s23, 0
      %p107 = por %p105, %p106
      %p108 = scmp.ne.s32.totalorder %s96, %s97
      %p109 = scmp.eq.s32.totalorder %s24, 1
      %p110 = por %p108, %p109
      %p112 = scmp.ne.s32.totalorder %s97, %s111
      %p113 = scmp.eq.s32.totalorder %s24, 0
      %p114 = por %p112, %p113
      %s116 = sadd.s32 %s115, 1
      %p119 = scmp.eq.s32.totalorder %s18, 1
      %p120 = scmp.ne.s32.totalorder %s115, %s117
      %p121 = scmp.eq.s32.totalorder %s18, 0
      %p122 = por %p120, %p121
      %p123 = scmp.ne.s32.totalorder %s115, %s117
      %p124 = scmp.eq.s32.totalorder %s23, 1
      %p125 = por %p123, %p124
      %p126 = scmp.ne.s32.totalorder %s117, %s118
      %p127 = scmp.eq.s32.totalorder %s23, 0
      %p128 = por %p126, %p127
      %p129 = scmp.ne.s32.totalorder %s117, %s118
      %p130 = scmp.eq.s32.totalorder %s24, 1
      %p131 = por %p129, %p130
      %p133 = scmp.ne.s32.totalorder %s118, %s132
      %p134 = scmp.eq.s32.totalorder %s24, 0
      %p135 = por %p133, %p134
      %s137 = sadd.s32 %s136, 1
      %p140 = scmp.eq.s32.totalorder %s18, 1
      %p141 = scmp.ne.s32.totalorder %s136, %s138
      %p142 = scmp.eq.s32.totalorder %s18, 0
      %p143 = por %p141, %p142
      %p144 = scmp.ne.s32.totalorder %s136, %s138
      %p145 = scmp.eq.s32.totalorder %s23, 1
      %p146 = por %p144, %p145
      %p147 = scmp.ne.s32.totalorder %s138, %s139
      %p148 = scmp.eq.s32.totalorder %s23, 0
      %p149 = por %p147, %p148
      %p150 = scmp.ne.s32.totalorder %s138, %s139
      %p151 = scmp.eq.s32.totalorder %s24, 1
      %p152 = por %p150, %p151
      %p154 = scmp.ne.s32.totalorder %s139, %s153
      %p155 = scmp.eq.s32.totalorder %s24, 0
      %p156 = por %p154, %p155
      %s158 = sadd.s32 %s157, 1
      %p161 = scmp.eq.s32.totalorder %s18, 1
      %p162 = scmp.ne.s32.totalorder %s157, %s159
      %p163 = scmp.eq.s32.totalorder %s18, 0
      %p164 = por %p162, %p163
      %p165 = scmp.ne.s32.totalorder %s157, %s159
      %p166 = scmp.eq.s32.totalorder %s23, 1
      %p167 = por %p165, %p166
      %p168 = scmp.ne.s32.totalorder %s159, %s160
      %p169 = scmp.eq.s32.totalorder %s23, 0
      %p170 = por %p168, %p169
      %p171 = scmp.ne.s32.totalorder %s159, %s160
      %p172 = scmp.eq.s32.totalorder %s24, 1
      %p173 = por %p171, %p172
      %p175 = scmp.ne.s32.totalorder %s160, %s174
      %p176 = scmp.eq.s32.totalorder %s24, 0
      %p177 = por %p175, %p176
      %s179 = sadd.s32 %s178, 1
      %p182 = scmp.eq.s32.totalorder %s18, 1
      %p183 = scmp.ne.s32.totalorder %s178, %s180
      %p184 = scmp.eq.s32.totalorder %s18, 0
      %p185 = por %p183, %p184
      %p186 = scmp.ne.s32.totalorder %s178, %s180
      %p187 = scmp.eq.s32.totalorder %s23, 1
      %p188 = por %p186, %p187
      %p189 = scmp.ne.s32.totalorder %s180, %s181
      %p190 = scmp.eq.s32.totalorder %s23, 0
      %p191 = por %p189, %p190
      %p192 = scmp.ne.s32.totalorder %s180, %s181
      %p193 = scmp.eq.s32.totalorder %s24, 1
      %p194 = por %p192, %p193
      %p196 = scmp.ne.s32.totalorder %s181, %s195
      %p197 = scmp.eq.s32.totalorder %s24, 0
      %p198 = por %p196, %p197
      %s200 = sadd.s32 %s199, 1
      %p203 = scmp.eq.s32.totalorder %s18, 1
      %p204 = scmp.ne.s32.totalorder %s199, %s201
      %p205 = scmp.eq.s32.totalorder %s18, 0
      %p206 = por %p204, %p205
      %p207 = scmp.ne.s32.totalorder %s199, %s201
      %p208 = scmp.eq.s32.totalorder %s23, 1
      %p209 = por %p207, %p208
      %p210 = scmp.ne.s32.totalorder %s201, %s202
      %p211 = scmp.eq.s32.totalorder %s23, 0
      %p212 = por %p210, %p211
      %p213 = scmp.ne.s32.totalorder %s201, %s202
      %p214 = scmp.eq.s32.totalorder %s24, 1
      %p215 = por %p213, %p214
      %p217 = scmp.ne.s32.totalorder %s202, %s216
      %p218 = scmp.eq.s32.totalorder %s24, 0
      %p219 = por %p217, %p218
      %s221 = sadd.s32 %s220, 1
      %p224 = scmp.eq.s32.totalorder %s18, 1
      %p225 = scmp.ne.s32.totalorder %s220, %s222
      %p226 = scmp.eq.s32.totalorder %s18, 0
      %p227 = por %p225, %p226
      %p228 = scmp.ne.s32.totalorder %s220, %s222
      %p229 = scmp.eq.s32.totalorder %s23, 1
      %p230 = por %p228, %p229
      %p231 = scmp.ne.s32.totalorder %s222, %s223
      %p232 = scmp.eq.s32.totalorder %s23, 0
      %p233 = por %p231, %p232
      %p234 = scmp.ne.s32.totalorder %s222, %s223
      %p235 = scmp.eq.s32.totalorder %s24, 1
      %p236 = por %p234, %p235
      %p238 = scmp.ne.s32.totalorder %s223, %s237
      %p239 = scmp.eq.s32.totalorder %s24, 0
      %p240 = por %p238, %p239
      %s241 = ssub.s32 %s18, %s25
      %p242 = scmp.eq.s32.totalorder %s241, 0
      %s244 = sadd.s32 %s243, 1
      %s245 = scalar_select %p242, %s243, %s244
      %p248 = pneg %p242
      %p249 = scmp.eq.s32.totalorder %s18, 1
      %p250 = por %p248, %p249
      %p251 = scmp.ne.s32.totalorder %s243, %s246
      %p252 = scmp.eq.s32.totalorder %s18, 0
      %p253 = por %p251, %p252
      %p254 = scmp.ne.s32.totalorder %s243, %s246
      %p255 = scmp.eq.s32.totalorder %s23, 1
      %p256 = por %p254, %p255
      %p257 = scmp.ne.s32.totalorder %s246, %s247
      %p258 = scmp.eq.s32.totalorder %s23, 0
      %p259 = por %p257, %p258
      %p260 = scmp.ne.s32.totalorder %s246, %s247
      %p261 = scmp.eq.s32.totalorder %s24, 1
      %p262 = por %p260, %p261
      %p264 = scmp.ne.s32.totalorder %s247, %s263
      %p265 = scmp.eq.s32.totalorder %s24, 0
      %p266 = por %p264, %p265
      %p267 = scmp.le.s32.totalorder 1, %s18
      %p268 = scmp.lt.s32.totalorder %s18, 3
      %p269 = pnand %p267, %p268
      %p270 = pneg %p269
      // Predicated region
      $region9: #{forward.1} parent=5 // pred_check
        _
      $region10: #{forward.1} parent=5 // pred_check_branch
        %272 = sbr.rel (%p269) target = $region12
      $region11: #{forward.1} parent=5 // pred_region
        %s273 = ssub.s32 %s18, 1
        // Predicated region
        $region13: #{forward.1} parent=11 // pred_check
          %p274 = pneg %p65
        $region14: #{forward.1} parent=11 // pred_check_branch
          %276 = sbr.rel (%p274) target = $region16
        $region15: #{forward.1} parent=11 // pred_region
          %s278 = ssub.s32 12288, 12288
          %279 = vsyncadd [#allocation6], %s278
          %s280 = sshll.u32 [#allocation5], 4
          %s281 = int_to_ptr.vmem [resolvable:$true] %s280
          %286 = dma.hbm_to_vmem [thread:$0]  %s1, 12288, %s281, [#allocation6], 128, 128, 8
        $region16: #{forward.1} parent=11 // pred_fallthru
          _
        // Predicated region
        $region17: #{forward.1} parent=11 // pred_check
          %p287 = pneg %p86
        $region18: #{forward.1} parent=11 // pred_check_branch
          %289 = sbr.rel (%p287) target = $region20
        $region19: #{forward.1} parent=11 // pred_region
          _
        $region20: #{forward.1} parent=11 // pred_fallthru
          _
        // Predicated region
        $region21: #{forward.1} parent=11 // pred_check
          %p290 = pneg %p107
        $region22: #{forward.1} parent=11 // pred_check_branch
          %292 = sbr.rel (%p290) target = $region24
        $region23: #{forward.1} parent=11 // pred_region
          %s294 = ssub.s32 24576, 24576
          %295 = vsyncadd [#allocation8], %s294
          %s296 = sshll.u32 [#allocation7], 4
          %s297 = int_to_ptr.vmem [resolvable:$true] %s296
          %302 = dma.hbm_to_vmem [thread:$0]  %s3, 24576, %s297, [#allocation8], 512, 512, 32
        $region24: #{forward.1} parent=11 // pred_fallthru
          _
        // Predicated region
        $region25: #{forward.1} parent=11 // pred_check
          %p303 = pneg %p128
        $region26: #{forward.1} parent=11 // pred_check_branch
          %305 = sbr.rel (%p303) target = $region28
        $region27: #{forward.1} parent=11 // pred_region
          _
        $region28: #{forward.1} parent=11 // pred_fallthru
          _
        // Predicated region
        $region29: #{forward.1} parent=11 // pred_check
          %p306 = pneg %p149
        $region30: #{forward.1} parent=11 // pred_check_branch
          %308 = sbr.rel (%p306) target = $region32
        $region31: #{forward.1} parent=11 // pred_region
          %s310 = ssub.s32 32768, 32768
          %311 = vsyncadd [#allocation8], %s310
          %s312 = sshll.u32 [#allocation9], 4
          %s313 = int_to_ptr.vmem [resolvable:$true] %s312
          %318 = dma.hbm_to_vmem [thread:$0]  %s5, 32768, %s313, [#allocation8], 128, 128, 8
        $region32: #{forward.1} parent=11 // pred_fallthru
          _
        // Predicated region
        $region33: #{forward.1} parent=11 // pred_check
          %p319 = pneg %p170
        $region34: #{forward.1} parent=11 // pred_check_branch
          %321 = sbr.rel (%p319) target = $region36
        $region35: #{forward.1} parent=11 // pred_region
          _
        $region36: #{forward.1} parent=11 // pred_fallthru
          _
        // Predicated region
        $region37: #{forward.1} parent=11 // pred_check
          %p322 = pneg %p191
        $region38: #{forward.1} parent=11 // pred_check_branch
          %324 = sbr.rel (%p322) target = $region40
        $region39: #{forward.1} parent=11 // pred_region
          _
        $region40: #{forward.1} parent=11 // pred_fallthru
          _
        // Predicated region
        $region41: #{forward.1} parent=11 // pred_check
          %p325 = pneg %p212
        $region42: #{forward.1} parent=11 // pred_check_branch
          %327 = sbr.rel (%p325) target = $region44
        $region43: #{forward.1} parent=11 // pred_region
          _
        $region44: #{forward.1} parent=11 // pred_fallthru
          _
        // Predicated region
        $region45: #{forward.1} parent=11 // pred_check
          %p328 = pneg %p233
        $region46: #{forward.1} parent=11 // pred_check_branch
          %330 = sbr.rel (%p328) target = $region48
        $region47: #{forward.1} parent=11 // pred_region
          _
        $region48: #{forward.1} parent=11 // pred_fallthru
          _
      $region12: #{forward.1} parent=5 // pred_fallthru
        _
      %p331 = scmp.lt.s32.totalorder %s18, 2
      // Predicated region
      $region49: #{forward.1} parent=5 // pred_check
        %p332 = pneg %p331
      $region50: #{forward.1} parent=5 // pred_check_branch
        %334 = sbr.rel (%p332) target = $region52
      $region51: #{forward.1} parent=5 // pred_region
        // Predicated region
        $region53: #{forward.1} parent=51 // pred_check
          %p335 = pneg %p38
        $region54: #{forward.1} parent=51 // pred_check_branch
          %337 = sbr.rel (%p335) target = $region56
        $region55: #{forward.1} parent=51 // pred_region
          %s338 = smul.u32 2, %s18
          %p339 = scmp.lt.s32.totalorder %s338, 3
          %s340 = scalar_select %p339, %s338, 3
          %s341 = smul.addr %s340, 2
          %s342 = smul.addr %s341, 8
          %s343 = scalar_lea.vmem %s0, %s342
          %s344 = smul.u32 2, %s18
        $region56: #{forward.1} parent=51 // pred_fallthru
          _
      $region52: #{forward.1} parent=5 // pred_fallthru
        _
      %p345 = scmp.le.s32.totalorder 1, %s18
      %p346 = scmp.lt.s32.totalorder %s18, 3
      %p347 = pnand %p345, %p346
      %p348 = pneg %p347
      // Predicated region
      $region57: #{forward.1} parent=5 // pred_check
        _
      $region58: #{forward.1} parent=5 // pred_check_branch
        %350 = sbr.rel (%p347) target = $region60
      $region59: #{forward.1} parent=5 // pred_region
        %s351 = ssub.s32 %s18, 1
        // Predicated region
        $region61: #{forward.1} parent=59 // pred_check
          %p352 = pneg %p65
        $region62: #{forward.1} parent=59 // pred_check_branch
          %354 = sbr.rel (%p352) target = $region64
        $region63: #{forward.1} parent=59 // pred_region
          %355 = dma.done [#allocation6], 12288
        $region64: #{forward.1} parent=59 // pred_fallthru
          _
        // Predicated region
        $region65: #{forward.1} parent=59 // pred_check
          %p356 = pneg %p107
        $region66: #{forward.1} parent=59 // pred_check_branch
          %358 = sbr.rel (%p356) target = $region68
        $region67: #{forward.1} parent=59 // pred_region
          %359 = dma.done [#allocation8], 24576
        $region68: #{forward.1} parent=59 // pred_fallthru
          _
        // Predicated region
        $region69: #{forward.1} parent=59 // pred_check
          %p360 = pneg %p149
        $region70: #{forward.1} parent=59 // pred_check_branch
          %362 = sbr.rel (%p360) target = $region72
        $region71: #{forward.1} parent=59 // pred_region
          %363 = dma.done [#allocation8], 32768
        $region72: #{forward.1} parent=59 // pred_fallthru
          _
        %s364 = smul.u32 2, %s23
        %p365 = scmp.lt.s32.totalorder %s364, 3
        %s366 = scalar_select %p365, %s364, 3
        %s367 = smul.addr %s366, 2
        %s368 = smul.addr %s367, 8
        %s369 = scalar_lea.vmem %s0, %s368
        %p370 = pneg %p44
        %p371 = pneg %p41
        %p372 = pneg %p65
        %p373 = pneg %p62
        %p374 = pneg %p86
        %p375 = pneg %p83
        %p376 = pneg %p107
        %p377 = pneg %p104
        %p378 = pneg %p128
        %p379 = pneg %p125
        %p380 = pneg %p149
        %p381 = pneg %p146
        %p382 = pneg %p170
        %p383 = pneg %p167
        %p384 = pneg %p191
        %p385 = pneg %p188
        %p386 = pneg %p212
        %p387 = pneg %p209
        %p388 = pneg %p233
        %p389 = pneg %p230
        %p390 = pneg %p259
        %p391 = pneg %p256
        %s392 = smul.u32 8, %s23
        %p393 = scmp.lt.s32.totalorder %s392, 15
        %s394 = scalar_select %p393, %s392, 15
        %s395 = smul.addr %s394, 8
        %s396 = scalar_lea.vmem %s10, %s395
        %s397 = smul.u32 2, %s23
        %p398 = scmp.lt.s32.totalorder %s397, 3
        %s399 = scalar_select %p398, %s397, 3
        %s400 = smul.addr %s399, 2
        %s401 = smul.addr %s400, 8
        %s402 = scalar_lea.vmem %s0, %s401
        %s403 = smul.u32 2, %s23
        %s404 = smul.u32 8, %s23
        %p405 = scmp.lt.s32.totalorder %s404, 15
        %s406 = scalar_select %p405, %s404, 15
        %s407 = smul.addr %s406, 8
        %s408 = scalar_lea.vmem %s10, %s407
        %s409 = smul.u32 8, %s23
        %v410 = vlaneseq
        %vm411 = vcmp.ge.s32.totalorder %v410, 0
        %vm412 = vcmp.lt.s32.totalorder %v410, 256
        %vm413 = vmand %vm411, %vm412
        %414 = vst.msk [vmem:[#allocation2] ss:$8 sm:$0x3] %vm413, 0.0
        %415 = vst.msk [vmem:[#allocation2] ss:$8 sm:$0x0] %vm413, 0.0
        %v416 = vld [vmem:[%s402] sm:$0xff]
        %v417 = vld [vmem:[%s402 + $0x8] sm:$0xff]
        %v420 = vrot.slane %v416, 7
        %v421 = vrot.slane %v417, 7
        %424 = vst [vmem:[#allocation2] sm:$0xfe] %v420
        %425 = vst [vmem:[#allocation2 + $0x8] sm:$0xfe] %v421
        %426 = vst [vmem:[#allocation2 + $0x10] sm:$0x1] %v420
        %427 = vst [vmem:[#allocation2 + $0x18] sm:$0x1] %v421
        %s428 = scalar_lea.vmem [#allocation2], 17
        %429 = vst.msk [vmem:[%s428] ss:$8 sm:$0x3] %vm413, 0.0
        %430 = vst.msk [vmem:[%s428] ss:$8 sm:$0x0] %vm413, 0.0
        %s431 = scalar_lea.vmem [#allocation2], 18
        %432 = vst.msk [vmem:[%s431] ss:$8 sm:$0x3] %vm413, 0.0
        %433 = vst.msk [vmem:[%s431] ss:$8 sm:$0x0] %vm413, 0.0
        %s434 = scalar_lea.vmem %s402, 16
        %v435 = vld [vmem:[%s434] sm:$0xff]
        %v436 = vld [vmem:[%s434 + $0x8] sm:$0xff]
        %v439 = vrot.slane %v435, 5
        %v440 = vrot.slane %v436, 5
        %443 = vst [vmem:[#allocation2 + $0x10] sm:$0xf8] %v439
        %444 = vst [vmem:[#allocation2 + $0x18] sm:$0xf8] %v440
        %445 = vst [vmem:[#allocation2 + $0x20] sm:$0x7] %v439
        %446 = vst [vmem:[#allocation2 + $0x28] sm:$0x7] %v440
        %s447 = scalar_lea.vmem [#allocation2], 35
        %448 = vst.msk [vmem:[%s447] ss:$8 sm:$0x3] %vm413, 0.0
        %449 = vst.msk [vmem:[%s447] ss:$8 sm:$0x0] %vm413, 0.0
        %v450 = vld [vmem:[%s9] sm:$0xff]
        %v451 = vld [vmem:[%s9 + $0x8] sm:$0xff]
        %v452 = vld [vmem:[%s9 + $0x10] sm:$0x3]
        %v453 = vld [vmem:[%s2] sm:$0x1]
        %v454 = vld [vmem:[#allocation2] sm:$0xff]
        %v455 = vld [vmem:[#allocation2 + $0x8] sm:$0xff]
        %v456 = vld [vmem:[#allocation2 + $0x10] sm:$0xff]
        %v457 = vld [vmem:[#allocation2 + $0x18] sm:$0xff]
        %v458 = vld [vmem:[#allocation2 + $0x20] sm:$0x3]
        %v459 = vld [vmem:[#allocation2 + $0x28] sm:$0x3]
        %v460 = vld [vmem:[#allocation5] sm:$0xff]
        %v461 = vld [vmem:[#allocation5 + $0x8] sm:$0xff]
        %v462 = vld [vmem:[#allocation5 + $0x10] sm:$0xff]
        %v463 = vld [vmem:[#allocation5 + $0x18] sm:$0xff]
        %v464 = vld [vmem:[#allocation5 + $0x20] sm:$0xff]
        %v465 = vld [vmem:[#allocation5 + $0x28] sm:$0xff]
        %v466 = vld [vmem:[#allocation5 + $0x30] sm:$0xff]
        %v467 = vld [vmem:[#allocation5 + $0x38] sm:$0xff]
        %v468 = vld [vmem:[#allocation5 + $0x40] sm:$0xff]
        %v469 = vld [vmem:[#allocation5 + $0x48] sm:$0xff]
        %v470 = vld [vmem:[#allocation5 + $0x50] sm:$0xff]
        %v471 = vld [vmem:[#allocation5 + $0x58] sm:$0xff]
        %v472 = vld [vmem:[#allocation5 + $0x60] sm:$0xff]
        %v473 = vld [vmem:[#allocation5 + $0x68] sm:$0xff]
        %v474 = vld [vmem:[#allocation5 + $0x70] sm:$0xff]
        %v475 = vld [vmem:[#allocation5 + $0x78] sm:$0xff]
        %v476 = vld [vmem:[#allocation5 + $0x80] sm:$0xff]
        %v477 = vld [vmem:[#allocation5 + $0x88] sm:$0xff]
        %v478 = vld [vmem:[#allocation5 + $0x90] sm:$0xff]
        %v479 = vld [vmem:[#allocation5 + $0x98] sm:$0xff]
        %v480 = vld [vmem:[#allocation5 + $0xa0] sm:$0xff]
        %v481 = vld [vmem:[#allocation5 + $0xa8] sm:$0xff]
        %v482 = vld [vmem:[#allocation5 + $0xb0] sm:$0xff]
        %v483 = vld [vmem:[#allocation5 + $0xb8] sm:$0xff]
        %v484 = vld [vmem:[#allocation5 + $0xc0] sm:$0xff]
        %v485 = vld [vmem:[#allocation5 + $0xc8] sm:$0xff]
        %v486 = vld [vmem:[#allocation5 + $0xd0] sm:$0xff]
        %v487 = vld [vmem:[#allocation5 + $0xd8] sm:$0xff]
        %v488 = vld [vmem:[#allocation5 + $0xe0] sm:$0xff]
        %v489 = vld [vmem:[#allocation5 + $0xe8] sm:$0xff]
        %v490 = vld [vmem:[#allocation5 + $0xf0] sm:$0xff]
        %v491 = vld [vmem:[#allocation5 + $0xf8] sm:$0xff]
        %492 = vmatprep.subr.mxu0 0.0
        %493 = vmatpush1.msra.mxu0 %v460
        %494 = vmatprep.subr.mxu0 0.0
        %495 = vmatpush1.msra.mxu0 %v461
        %496 = vmatprep.subr.mxu0 0.0
        %497 = vmatpush1.msra.mxu0 %v462
        %498 = vmatprep.subr.mxu0 0.0
        %499 = vmatpush1.msra.mxu0 %v463
        %500 = vmatprep.subr.mxu0 0.0
        %501 = vmatpush1.msra.mxu0 %v464
        %502 = vmatprep.subr.mxu0 0.0
        %503 = vmatpush1.msra.mxu0 %v465
        %504 = vmatprep.subr.mxu0 0.0
        %505 = vmatpush1.msra.mxu0 %v466
        %506 = vmatprep.subr.mxu0 0.0
        %507 = vmatpush1.msra.mxu0 %v467
        %508 = vmatprep.subr.mxu0 0.0
        %509 = vmatpush1.msra.mxu0 %v468
        %510 = vmatprep.subr.mxu0 0.0
        %511 = vmatpush1.msra.mxu0 %v469
        %512 = vmatprep.subr.mxu0 0.0
        %513 = vmatpush1.msra.mxu0 %v470
        %514 = vmatprep.subr.mxu0 0.0
        %515 = vmatpush1.msra.mxu0 %v471
        %516 = vmatprep.subr.mxu0 0.0
        %517 = vmatpush1.msra.mxu0 %v472
        %518 = vmatprep.subr.mxu0 0.0
        %519 = vmatpush1.msra.mxu0 %v473
        %520 = vmatprep.subr.mxu0 0.0
        %521 = vmatpush1.msra.mxu0 %v474
        %522 = vmatprep.subr.mxu0 0.0
        %523 = vmatpush1.msra.mxu0 %v475
        %524 = vmatprep.subr.mxu0 0.0
        %525 = vmatpush1.msra.mxu0 %v476
        %526 = vmatprep.subr.mxu0 0.0
        %527 = vmatpush1.msra.mxu0 %v477
        %528 = vmatprep.subr.mxu0 0.0
        %529 = vmatpush1.msra.mxu0 %v478
        %530 = vmatprep.subr.mxu0 0.0
        %531 = vmatpush1.msra.mxu0 %v479
        %532 = vmatprep.subr.mxu0 0.0
        %533 = vmatpush1.msra.mxu0 %v480
        %534 = vmatprep.subr.mxu0 0.0
        %535 = vmatpush1.msra.mxu0 %v481
        %536 = vmatprep.subr.mxu0 0.0
        %537 = vmatpush1.msra.mxu0 %v482
        %538 = vmatprep.subr.mxu0 0.0
        %539 = vmatpush1.msra.mxu0 %v483
        %540 = vmatprep.subr.mxu0 0.0
        %541 = vmatpush1.msra.mxu0 %v484
        %542 = vmatprep.subr.mxu0 0.0
        %543 = vmatpush1.msra.mxu0 %v485
        %544 = vmatprep.subr.mxu0 0.0
        %545 = vmatpush1.msra.mxu0 %v486
        %546 = vmatprep.subr.mxu0 0.0
        %547 = vmatpush1.msra.mxu0 %v487
        %548 = vmatprep.subr.mxu0 0.0
        %549 = vmatpush1.msra.mxu0 %v488
        %550 = vmatprep.subr.mxu0 0.0
        %551 = vmatpush1.msra.mxu0 %v489
        %552 = vmatprep.subr.mxu0 0.0
        %553 = vmatpush1.msra.mxu0 %v490
        %554 = vmatprep.subr.mxu0 0.0
        %555 = vmatpush1.msra.mxu0 %v491
        %556 = vmatprep.mubr.f32.mxu0 %v455
        %557 = vmatmul.mubr.f32.gmra.mrb[0].mxu0 %v454
        %v558 = vpop.f32.mrb[0].mxu0
        %v559 = vadd.f32 0.0, %v558
        %v560 = vpop.f32.mrb[0].mxu0
        %561 = vmatprep.mubr.f32.mxu0 %v457
        %562 = vmatmul.mubr.f32.gmra.mrb[0].mxu0 %v456
        %v563 = vpop.f32.mrb[0].mxu0
        %v564 = vadd.f32 0.0, %v563
        %v565 = vpop.f32.mrb[0].mxu0
        %566 = vmatprep.mubr.f32.mxu0 %v459
        %567 = vmatmul.mubr.f32.gmra.mrb[0].mxu0 %v458
        %v568 = vpop.f32.mrb[0].mxu0
        %v569 = vadd.f32 0.0, %v568
        %v570 = vpop.f32.mrb[0].mxu0
        %571 = vdwg.mxu0
        %v573 = vlaneseq
        %v574 = vshrl.u32 %v573, 7
        %v575 = vsub.s32 0, %v574
        %v576 = vrot.slane %v453, %v575
        %v578 = vadd.f32 %v576, %v559
        %v579 = vadd.f32 %v576, %v564
        %v580 = vadd.f32 %v576, %v569
        %v581 = vld [vmem:[#allocation2] sm:$0xfe]
        %v582 = vld [vmem:[#allocation2 + $0x8] sm:$0xfe]
        %v583 = vld [vmem:[#allocation2 + $0x20] sm:$0x7]
        %v584 = vld [vmem:[#allocation2 + $0x28] sm:$0x7]
        %s585 = scalar_lea.vmem [#allocation5], 256
        %v586 = vld [vmem:[%s585] sm:$0xff]
        %v587 = vld [vmem:[%s585 + $0x8] sm:$0xff]
        %v588 = vld [vmem:[%s585 + $0x10] sm:$0xff]
        %v589 = vld [vmem:[%s585 + $0x18] sm:$0xff]
        %v590 = vld [vmem:[%s585 + $0x20] sm:$0xff]
        %v591 = vld [vmem:[%s585 + $0x28] sm:$0xff]
        %v592 = vld [vmem:[%s585 + $0x30] sm:$0xff]
        %v593 = vld [vmem:[%s585 + $0x38] sm:$0xff]
        %v594 = vld [vmem:[%s585 + $0x40] sm:$0xff]
        %v595 = vld [vmem:[%s585 + $0x48] sm:$0xff]
        %v596 = vld [vmem:[%s585 + $0x50] sm:$0xff]
        %v597 = vld [vmem:[%s585 + $0x58] sm:$0xff]
        %v598 = vld [vmem:[%s585 + $0x60] sm:$0xff]
        %v599 = vld [vmem:[%s585 + $0x68] sm:$0xff]
        %v600 = vld [vmem:[%s585 + $0x70] sm:$0xff]
        %v601 = vld [vmem:[%s585 + $0x78] sm:$0xff]
        %v602 = vld [vmem:[%s585 + $0x80] sm:$0xff]
        %v603 = vld [vmem:[%s585 + $0x88] sm:$0xff]
        %v604 = vld [vmem:[%s585 + $0x90] sm:$0xff]
        %v605 = vld [vmem:[%s585 + $0x98] sm:$0xff]
        %v606 = vld [vmem:[%s585 + $0xa0] sm:$0xff]
        %v607 = vld [vmem:[%s585 + $0xa8] sm:$0xff]
        %v608 = vld [vmem:[%s585 + $0xb0] sm:$0xff]
        %v609 = vld [vmem:[%s585 + $0xb8] sm:$0xff]
        %v610 = vld [vmem:[%s585 + $0xc0] sm:$0xff]
        %v611 = vld [vmem:[%s585 + $0xc8] sm:$0xff]
        %v612 = vld [vmem:[%s585 + $0xd0] sm:$0xff]
        %v613 = vld [vmem:[%s585 + $0xd8] sm:$0xff]
        %v614 = vld [vmem:[%s585 + $0xe0] sm:$0xff]
        %v615 = vld [vmem:[%s585 + $0xe8] sm:$0xff]
        %v616 = vld [vmem:[%s585 + $0xf0] sm:$0xff]
        %v617 = vld [vmem:[%s585 + $0xf8] sm:$0xff]
        %vm624 = vcmask 1046528
        %v625 = vrot.slane %v581, 1
        %v626 = vrot.slane %v456, 1
        %v627 = vsel %vm624, %v625, %v626
        %v628 = vrot.slane %v582, 1
        %v629 = vrot.slane %v457, 1
        %v630 = vsel %vm624, %v628, %v629
        %v631 = vrot.slane %v583, 1
        %v632 = vsel %vm624, %v626, %v631
        %v633 = vrot.slane %v584, 1
        %v634 = vsel %vm624, %v629, %v633
        %641 = vmatprep.subr.mxu0 0.0
        %642 = vmatpush1.msra.mxu0 %v586
        %643 = vmatprep.subr.mxu0 0.0
        %644 = vmatpush1.msra.mxu0 %v587
        %645 = vmatprep.subr.mxu0 0.0
        %646 = vmatpush1.msra.mxu0 %v588
        %647 = vmatprep.subr.mxu0 0.0
        %648 = vmatpush1.msra.mxu0 %v589
        %649 = vmatprep.subr.mxu0 0.0
        %650 = vmatpush1.msra.mxu0 %v590
        %651 = vmatprep.subr.mxu0 0.0
        %652 = vmatpush1.msra.mxu0 %v591
        %653 = vmatprep.subr.mxu0 0.0
        %654 = vmatpush1.msra.mxu0 %v592
        %655 = vmatprep.subr.mxu0 0.0
        %656 = vmatpush1.msra.mxu0 %v593
        %657 = vmatprep.subr.mxu0 0.0
        %658 = vmatpush1.msra.mxu0 %v594
        %659 = vmatprep.subr.mxu0 0.0
        %660 = vmatpush1.msra.mxu0 %v595
        %661 = vmatprep.subr.mxu0 0.0
        %662 = vmatpush1.msra.mxu0 %v596
        %663 = vmatprep.subr.mxu0 0.0
        %664 = vmatpush1.msra.mxu0 %v597
        %665 = vmatprep.subr.mxu0 0.0
        %666 = vmatpush1.msra.mxu0 %v598
        %667 = vmatprep.subr.mxu0 0.0
        %668 = vmatpush1.msra.mxu0 %v599
        %669 = vmatprep.subr.mxu0 0.0
        %670 = vmatpush1.msra.mxu0 %v600
        %671 = vmatprep.subr.mxu0 0.0
        %672 = vmatpush1.msra.mxu0 %v601
        %673 = vmatprep.subr.mxu0 0.0
        %674 = vmatpush1.msra.mxu0 %v602
        %675 = vmatprep.subr.mxu0 0.0
        %676 = vmatpush1.msra.mxu0 %v603
        %677 = vmatprep.subr.mxu0 0.0
        %678 = vmatpush1.msra.mxu0 %v604
        %679 = vmatprep.subr.mxu0 0.0
        %680 = vmatpush1.msra.mxu0 %v605
        %681 = vmatprep.subr.mxu0 0.0
        %682 = vmatpush1.msra.mxu0 %v606
        %683 = vmatprep.subr.mxu0 0.0
        %684 = vmatpush1.msra.mxu0 %v607
        %685 = vmatprep.subr.mxu0 0.0
        %686 = vmatpush1.msra.mxu0 %v608
        %687 = vmatprep.subr.mxu0 0.0
        %688 = vmatpush1.msra.mxu0 %v609
        %689 = vmatprep.subr.mxu0 0.0
        %690 = vmatpush1.msra.mxu0 %v610
        %691 = vmatprep.subr.mxu0 0.0
        %692 = vmatpush1.msra.mxu0 %v611
        %693 = vmatprep.subr.mxu0 0.0
        %694 = vmatpush1.msra.mxu0 %v612
        %695 = vmatprep.subr.mxu0 0.0
        %696 = vmatpush1.msra.mxu0 %v613
        %697 = vmatprep.subr.mxu0 0.0
        %698 = vmatpush1.msra.mxu0 %v614
        %699 = vmatprep.subr.mxu0 0.0
        %700 = vmatpush1.msra.mxu0 %v615
        %701 = vmatprep.subr.mxu0 0.0
        %702 = vmatpush1.msra.mxu0 %v616
        %703 = vmatprep.subr.mxu0 0.0
        %704 = vmatpush1.msra.mxu0 %v617
        %705 = vmatprep.mubr.f32.mxu0 %v630
        %706 = vmatmul.mubr.f32.gmra.mrb[0].mxu0 %v627
        %v707 = vpop.f32.mrb[0].mxu0
        %v708 = vadd.f32 0.0, %v707
        %v709 = vpop.f32.mrb[0].mxu0
        %710 = vmatprep.mubr.f32.mxu0 %v634
        %711 = vmatmul.mubr.f32.gmra.mrb[0].mxu0 %v632
        %v712 = vpop.f32.mrb[0].mxu0
        %v713 = vadd.f32 0.0, %v712
        %v714 = vpop.f32.mrb[0].mxu0
        %715 = vmatprep.mubr.f32.mxu0 %v633
        %716 = vmatmul.mubr.f32.gmra.mrb[0].mxu0 %v631
        %v717 = vpop.f32.mrb[0].mxu0
        %v718 = vadd.f32 0.0, %v717
        %v719 = vpop.f32.mrb[0].mxu0
        %720 = vdwg.mxu0
        %v721 = vadd.f32 %v578, %v708
        %v722 = vadd.f32 %v579, %v713
        %v723 = vadd.f32 %v580, %v718
        %v724 = vld [vmem:[#allocation2] sm:$0xfc]
        %v725 = vld [vmem:[#allocation2 + $0x8] sm:$0xfc]
        %v726 = vld [vmem:[#allocation2 + $0x20] sm:$0xf]
        %v727 = vld [vmem:[#allocation2 + $0x28] sm:$0xf]
        %s728 = scalar_lea.vmem [#allocation5], 512
        %v729 = vld [vmem:[%s728] sm:$0xff]
        %v730 = vld [vmem:[%s728 + $0x8] sm:$0xff]
        %v731 = vld [vmem:[%s728 + $0x10] sm:$0xff]
        %v732 = vld [vmem:[%s728 + $0x18] sm:$0xff]
        %v733 = vld [vmem:[%s728 + $0x20] sm:$0xff]
        %v734 = vld [vmem:[%s728 + $0x28] sm:$0xff]
        %v735 = vld [vmem:[%s728 + $0x30] sm:$0xff]
        %v736 = vld [vmem:[%s728 + $0x38] sm:$0xff]
        %v737 = vld [vmem:[%s728 + $0x40] sm:$0xff]
        %v738 = vld [vmem:[%s728 + $0x48] sm:$0xff]
        %v739 = vld [vmem:[%s728 + $0x50] sm:$0xff]
        %v740 = vld [vmem:[%s728 + $0x58] sm:$0xff]
        %v741 = vld [vmem:[%s728 + $0x60] sm:$0xff]
        %v742 = vld [vmem:[%s728 + $0x68] sm:$0xff]
        %v743 = vld [vmem:[%s728 + $0x70] sm:$0xff]
        %v744 = vld [vmem:[%s728 + $0x78] sm:$0xff]
        %v745 = vld [vmem:[%s728 + $0x80] sm:$0xff]
        %v746 = vld [vmem:[%s728 + $0x88] sm:$0xff]
        %v747 = vld [vmem:[%s728 + $0x90] sm:$0xff]
        %v748 = vld [vmem:[%s728 + $0x98] sm:$0xff]
        %v749 = vld [vmem:[%s728 + $0xa0] sm:$0xff]
        %v750 = vld [vmem:[%s728 + $0xa8] sm:$0xff]
        %v751 = vld [vmem:[%s728 + $0xb0] sm:$0xff]
        %v752 = vld [vmem:[%s728 + $0xb8] sm:$0xff]
        %v753 = vld [vmem:[%s728 + $0xc0] sm:$0xff]
        %v754 = vld [vmem:[%s728 + $0xc8] sm:$0xff]
        %v755 = vld [vmem:[%s728 + $0xd0] sm:$0xff]
        %v756 = vld [vmem:[%s728 + $0xd8] sm:$0xff]
        %v757 = vld [vmem:[%s728 + $0xe0] sm:$0xff]
        %v758 = vld [vmem:[%s728 + $0xe8] sm:$0xff]
        %v759 = vld [vmem:[%s728 + $0xf0] sm:$0xff]
        %v760 = vld [vmem:[%s728 + $0xf8] sm:$0xff]
        %vm765 = vcmask 1045504
        %v766 = vrot.slane %v724, 2
        %v767 = vrot.slane %v456, 2
        %v768 = vsel %vm765, %v766, %v767
        %v769 = vrot.slane %v725, 2
        %v770 = vrot.slane %v457, 2
        %v771 = vsel %vm765, %v769, %v770
        %v772 = vrot.slane %v726, 2
        %v773 = vsel %vm765, %v767, %v772
        %v774 = vrot.slane %v727, 2
        %v775 = vsel %vm765, %v770, %v774
        %782 = vmatprep.subr.mxu0 0.0
        %783 = vmatpush1.msra.mxu0 %v729
        %784 = vmatprep.subr.mxu0 0.0
        %785 = vmatpush1.msra.mxu0 %v730
        %786 = vmatprep.subr.mxu0 0.0
        %787 = vmatpush1.msra.mxu0 %v731
        %788 = vmatprep.subr.mxu0 0.0
        %789 = vmatpush1.msra.mxu0 %v732
        %790 = vmatprep.subr.mxu0 0.0
        %791 = vmatpush1.msra.mxu0 %v733
        %792 = vmatprep.subr.mxu0 0.0
        %793 = vmatpush1.msra.mxu0 %v734
        %794 = vmatprep.subr.mxu0 0.0
        %795 = vmatpush1.msra.mxu0 %v735
        %796 = vmatprep.subr.mxu0 0.0
        %797 = vmatpush1.msra.mxu0 %v736
        %798 = vmatprep.subr.mxu0 0.0
        %799 = vmatpush1.msra.mxu0 %v737
        %800 = vmatprep.subr.mxu0 0.0
        %801 = vmatpush1.msra.mxu0 %v738
        %802 = vmatprep.subr.mxu0 0.0
        %803 = vmatpush1.msra.mxu0 %v739
        %804 = vmatprep.subr.mxu0 0.0
        %805 = vmatpush1.msra.mxu0 %v740
        %806 = vmatprep.subr.mxu0 0.0
        %807 = vmatpush1.msra.mxu0 %v741
        %808 = vmatprep.subr.mxu0 0.0
        %809 = vmatpush1.msra.mxu0 %v742
        %810 = vmatprep.subr.mxu0 0.0
        %811 = vmatpush1.msra.mxu0 %v743
        %812 = vmatprep.subr.mxu0 0.0
        %813 = vmatpush1.msra.mxu0 %v744
        %814 = vmatprep.subr.mxu0 0.0
        %815 = vmatpush1.msra.mxu0 %v745
        %816 = vmatprep.subr.mxu0 0.0
        %817 = vmatpush1.msra.mxu0 %v746
        %818 = vmatprep.subr.mxu0 0.0
        %819 = vmatpush1.msra.mxu0 %v747
        %820 = vmatprep.subr.mxu0 0.0
        %821 = vmatpush1.msra.mxu0 %v748
        %822 = vmatprep.subr.mxu0 0.0
        %823 = vmatpush1.msra.mxu0 %v749
        %824 = vmatprep.subr.mxu0 0.0
        %825 = vmatpush1.msra.mxu0 %v750
        %826 = vmatprep.subr.mxu0 0.0
        %827 = vmatpush1.msra.mxu0 %v751
        %828 = vmatprep.subr.mxu0 0.0
        %829 = vmatpush1.msra.mxu0 %v752
        %830 = vmatprep.subr.mxu0 0.0
        %831 = vmatpush1.msra.mxu0 %v753
        %832 = vmatprep.subr.mxu0 0.0
        %833 = vmatpush1.msra.mxu0 %v754
        %834 = vmatprep.subr.mxu0 0.0
        %835 = vmatpush1.msra.mxu0 %v755
        %836 = vmatprep.subr.mxu0 0.0
        %837 = vmatpush1.msra.mxu0 %v756
        %838 = vmatprep.subr.mxu0 0.0
        %839 = vmatpush1.msra.mxu0 %v757
        %840 = vmatprep.subr.mxu0 0.0
        %841 = vmatpush1.msra.mxu0 %v758
        %842 = vmatprep.subr.mxu0 0.0
        %843 = vmatpush1.msra.mxu0 %v759
        %844 = vmatprep.subr.mxu0 0.0
        %845 = vmatpush1.msra.mxu0 %v760
        %846 = vmatprep.mubr.f32.mxu0 %v771
        %847 = vmatmul.mubr.f32.gmra.mrb[0].mxu0 %v768
        %v848 = vpop.f32.mrb[0].mxu0
        %v849 = vadd.f32 0.0, %v848
        %v850 = vpop.f32.mrb[0].mxu0
        %851 = vmatprep.mubr.f32.mxu0 %v775
        %852 = vmatmul.mubr.f32.gmra.mrb[0].mxu0 %v773
        %v853 = vpop.f32.mrb[0].mxu0
        %v854 = vadd.f32 0.0, %v853
        %v855 = vpop.f32.mrb[0].mxu0
        %856 = vmatprep.mubr.f32.mxu0 %v774
        %857 = vmatmul.mubr.f32.gmra.mrb[0].mxu0 %v772
        %v858 = vpop.f32.mrb[0].mxu0
        %v859 = vadd.f32 0.0, %v858
        %v860 = vpop.f32.mrb[0].mxu0
        %861 = vdwg.mxu0
        %v862 = vadd.f32 %v721, %v849
        %v863 = vadd.f32 %v722, %v854
        %v864 = vadd.f32 %v723, %v859
        %vm865 = vcmp.ge.f32.partialorder %v862, 0.0
        %vm866 = vcmp.ge.f32.partialorder %v863, 0.0
        %vm867 = vcmp.ge.f32.partialorder %v864, 0.0
        %v868 = vmul.f32 %v862, 0.01
        %v869 = vmul.f32 %v863, 0.01
        %v870 = vmul.f32 %v864, 0.01
        %v871 = vsel %vm865, %v862, %v868
        %v872 = vsel %vm866, %v863, %v869
        %v873 = vsel %vm867, %v864, %v870
        %874 = vst [vmem:[#allocation3] sm:$0x1] 0.0
        %875 = vst [vmem:[#allocation3 + $0x13] sm:$0x1] 0.0
        %877 = vset.pattern.permute.xlu0 0
        %878 = vperm.xlu0 %877, %v450
        %v879 = vpop.permute.xlu0 %878
        %882 = vset.pattern.permute.xlu0 0
        %883 = vperm.xlu0 %882, %v451
        %v884 = vpop.permute.xlu0 %883
        %887 = vset.pattern.permute.xlu0 0
        %888 = vperm.xlu0 %887, %v452
        %v889 = vpop.permute.xlu0 %888
        %v891 = vmul.f32 %v871, %v879
        %v892 = vmul.f32 %v872, %v884
        %v893 = vmul.f32 %v873, %v889
        %894 = vst [vmem:[#allocation3 + $0x1] sm:$0xff] %v891
        %895 = vst [vmem:[#allocation3 + $0x9] sm:$0xff] %v892
        %896 = vst [vmem:[#allocation3 + $0x11] sm:$0x3] %v893
        %v897 = vld [vmem:[%s4] sm:$0xf]
        %v898 = vld [vmem:[#allocation3] sm:$0xff]
        %v899 = vld [vmem:[#allocation3 + $0x8] sm:$0xff]
        %v900 = vld [vmem:[#allocation3 + $0x10] sm:$0x3]
        %v901 = vld [vmem:[#allocation7] sm:$0xff]
        %v902 = vld [vmem:[#allocation7 + $0x8] sm:$0xff]
        %v903 = vld [vmem:[#allocation7 + $0x10] sm:$0xff]
        %v904 = vld [vmem:[#allocation7 + $0x18] sm:$0xff]
        %v905 = vld [vmem:[#allocation7 + $0x20] sm:$0xff]
        %v906 = vld [vmem:[#allocation7 + $0x28] sm:$0xff]
        %v907 = vld [vmem:[#allocation7 + $0x30] sm:$0xff]
        %v908 = vld [vmem:[#allocation7 + $0x38] sm:$0xff]
        %v909 = vld [vmem:[#allocation7 + $0x40] sm:$0xff]
        %v910 = vld [vmem:[#allocation7 + $0x48] sm:$0xff]
        %v911 = vld [vmem:[#allocation7 + $0x50] sm:$0xff]
        %v912 = vld [vmem:[#allocation7 + $0x58] sm:$0xff]
        %v913 = vld [vmem:[#allocation7 + $0x60] sm:$0xff]
        %v914 = vld [vmem:[#allocation7 + $0x68] sm:$0xff]
        %v915 = vld [vmem:[#allocation7 + $0x70] sm:$0xff]
        %v916 = vld [vmem:[#allocation7 + $0x78] sm:$0xff]
        %v917 = vld [vmem:[#allocation7 + $0x80] sm:$0xff]
        %v918 = vld [vmem:[#allocation7 + $0x88] sm:$0xff]
        %v919 = vld [vmem:[#allocation7 + $0x90] sm:$0xff]
        %v920 = vld [vmem:[#allocation7 + $0x98] sm:$0xff]
        %v921 = vld [vmem:[#allocation7 + $0xa0] sm:$0xff]
        %v922 = vld [vmem:[#allocation7 + $0xa8] sm:$0xff]
        %v923 = vld [vmem:[#allocation7 + $0xb0] sm:$0xff]
        %v924 = vld [vmem:[#allocation7 + $0xb8] sm:$0xff]
        %v925 = vld [vmem:[#allocation7 + $0xc0] sm:$0xff]
        %v926 = vld [vmem:[#allocation7 + $0xc8] sm:$0xff]
        %v927 = vld [vmem:[#allocation7 + $0xd0] sm:$0xff]
        %v928 = vld [vmem:[#allocation7 + $0xd8] sm:$0xff]
        %v929 = vld [vmem:[#allocation7 + $0xe0] sm:$0xff]
        %v930 = vld [vmem:[#allocation7 + $0xe8] sm:$0xff]
        %v931 = vld [vmem:[#allocation7 + $0xf0] sm:$0xff]
        %v932 = vld [vmem:[#allocation7 + $0xf8] sm:$0xff]
        %v933 = vld [vmem:[#allocation7 + $0x100] sm:$0xff]
        %v934 = vld [vmem:[#allocation7 + $0x108] sm:$0xff]
        %v935 = vld [vmem:[#allocation7 + $0x110] sm:$0xff]
        %v936 = vld [vmem:[#allocation7 + $0x118] sm:$0xff]
        %v937 = vld [vmem:[#allocation7 + $0x120] sm:$0xff]
        %v938 = vld [vmem:[#allocation7 + $0x128] sm:$0xff]
        %v939 = vld [vmem:[#allocation7 + $0x130] sm:$0xff]
        %v940 = vld [vmem:[#allocation7 + $0x138] sm:$0xff]
        %v941 = vld [vmem:[#allocation7 + $0x140] sm:$0xff]
        %v942 = vld [vmem:[#allocation7 + $0x148] sm:$0xff]
        %v943 = vld [vmem:[#allocation7 + $0x150] sm:$0xff]
        %v944 = vld [vmem:[#allocation7 + $0x158] sm:$0xff]
        %v945 = vld [vmem:[#allocation7 + $0x160] sm:$0xff]
        %v946 = vld [vmem:[#allocation7 + $0x168] sm:$0xff]
        %v947 = vld [vmem:[#allocation7 + $0x170] sm:$0xff]
        %v948 = vld [vmem:[#allocation7 + $0x178] sm:$0xff]
        %v949 = vld [vmem:[#allocation7 + $0x180] sm:$0xff]
        %v950 = vld [vmem:[#allocation7 + $0x188] sm:$0xff]
        %v951 = vld [vmem:[#allocation7 + $0x190] sm:$0xff]
        %v952 = vld [vmem:[#allocation7 + $0x198] sm:$0xff]
        %v953 = vld [vmem:[#allocation7 + $0x1a0] sm:$0xff]
        %v954 = vld [vmem:[#allocation7 + $0x1a8] sm:$0xff]
        %v955 = vld [vmem:[#allocation7 + $0x1b0] sm:$0xff]
        %v956 = vld [vmem:[#allocation7 + $0x1b8] sm:$0xff]
        %v957 = vld [vmem:[#allocation7 + $0x1c0] sm:$0xff]
        %v958 = vld [vmem:[#allocation7 + $0x1c8] sm:$0xff]
        %v959 = vld [vmem:[#allocation7 + $0x1d0] sm:$0xff]
        %v960 = vld [vmem:[#allocation7 + $0x1d8] sm:$0xff]
        %v961 = vld [vmem:[#allocation7 + $0x1e0] sm:$0xff]
        %v962 = vld [vmem:[#allocation7 + $0x1e8] sm:$0xff]
        %v963 = vld [vmem:[#allocation7 + $0x1f0] sm:$0xff]
        %v964 = vld [vmem:[#allocation7 + $0x1f8] sm:$0xff]
        %965 = vmatprep.subr.mxu0 %v902
        %966 = vmatpush1.msra.mxu0 %v901
        %967 = vmatprep.subr.mxu0 %v906
        %968 = vmatpush1.msra.mxu0 %v905
        %969 = vmatprep.subr.mxu0 %v910
        %970 = vmatpush1.msra.mxu0 %v909
        %971 = vmatprep.subr.mxu0 %v914
        %972 = vmatpush1.msra.mxu0 %v913
        %973 = vmatprep.subr.mxu0 %v918
        %974 = vmatpush1.msra.mxu0 %v917
        %975 = vmatprep.subr.mxu0 %v922
        %976 = vmatpush1.msra.mxu0 %v921
        %977 = vmatprep.subr.mxu0 %v926
        %978 = vmatpush1.msra.mxu0 %v925
        %979 = vmatprep.subr.mxu0 %v930
        %980 = vmatpush1.msra.mxu0 %v929
        %981 = vmatprep.subr.mxu0 %v934
        %982 = vmatpush1.msra.mxu0 %v933
        %983 = vmatprep.subr.mxu0 %v938
        %984 = vmatpush1.msra.mxu0 %v937
        %985 = vmatprep.subr.mxu0 %v942
        %986 = vmatpush1.msra.mxu0 %v941
        %987 = vmatprep.subr.mxu0 %v946
        %988 = vmatpush1.msra.mxu0 %v945
        %989 = vmatprep.subr.mxu0 %v950
        %990 = vmatpush1.msra.mxu0 %v949
        %991 = vmatprep.subr.mxu0 %v954
        %992 = vmatpush1.msra.mxu0 %v953
        %993 = vmatprep.subr.mxu0 %v958
        %994 = vmatpush1.msra.mxu0 %v957
        %995 = vmatprep.subr.mxu0 %v962
        %996 = vmatpush1.msra.mxu0 %v961
        %997 = vmatprep.subr.mxu0 0.0
        %998 = vmatpush1.msra.mxu0 0.0
        %999 = vmatprep.subr.mxu0 0.0
        %1000 = vmatpush1.msra.mxu0 0.0
        %1001 = vmatprep.subr.mxu0 0.0
        %1002 = vmatpush1.msra.mxu0 0.0
        %1003 = vmatprep.subr.mxu0 0.0
        %1004 = vmatpush1.msra.mxu0 0.0
        %1005 = vmatprep.subr.mxu0 0.0
        %1006 = vmatpush1.msra.mxu0 0.0
        %1007 = vmatprep.subr.mxu0 0.0
        %1008 = vmatpush1.msra.mxu0 0.0
        %1009 = vmatprep.subr.mxu0 0.0
        %1010 = vmatpush1.msra.mxu0 0.0
        %1011 = vmatprep.subr.mxu0 0.0
        %1012 = vmatpush1.msra.mxu0 0.0
        %1013 = vmatprep.subr.mxu0 0.0
        %1014 = vmatpush1.msra.mxu0 0.0
        %1015 = vmatprep.subr.mxu0 0.0
        %1016 = vmatpush1.msra.mxu0 0.0
        %1017 = vmatprep.subr.mxu0 0.0
        %1018 = vmatpush1.msra.mxu0 0.0
        %1019 = vmatprep.subr.mxu0 0.0
        %1020 = vmatpush1.msra.mxu0 0.0
        %1021 = vmatprep.subr.mxu0 0.0
        %1022 = vmatpush1.msra.mxu0 0.0
        %1023 = vmatprep.subr.mxu0 0.0
        %1024 = vmatpush1.msra.mxu0 0.0
        %1025 = vmatprep.subr.mxu0 0.0
        %1026 = vmatpush1.msra.mxu0 0.0
        %1027 = vmatprep.subr.mxu0 0.0
        %1028 = vmatpush1.msra.mxu0 0.0
        %1029 = vmatprep.mubr.f32.mxu0 0.0
        %1030 = vmatmul.mubr.f32.gmra.mrb[0].mxu0 %v898
        %v1031 = vpop.f32.mrb[0].mxu0
        %v1032 = vadd.f32 0.0, %v1031
        %v1033 = vpop.f32.mrb[0].mxu0
        %v1034 = vadd.f32 0.0, %v1033
        %1035 = vmatprep.mubr.f32.mxu0 0.0
        %1036 = vmatmul.mubr.f32.gmra.mrb[0].mxu0 %v899
        %v1037 = vpop.f32.mrb[0].mxu0
        %v1038 = vadd.f32 0.0, %v1037
        %v1039 = vpop.f32.mrb[0].mxu0
        %v1040 = vadd.f32 0.0, %v1039
        %1041 = vmatprep.mubr.f32.mxu0 0.0
        %1042 = vmatmul.mubr.f32.gmra.mrb[0].mxu0 %v900
        %v1043 = vpop.f32.mrb[0].mxu0
        %v1044 = vadd.f32 0.0, %v1043
        %v1045 = vpop.f32.mrb[0].mxu0
        %v1046 = vadd.f32 0.0, %v1045
        %1047 = vdwg.mxu0
        %1048 = vmatprep.subr.mxu0 %v904
        %1049 = vmatpush1.msra.mxu0 %v903
        %1050 = vmatprep.subr.mxu0 %v908
        %1051 = vmatpush1.msra.mxu0 %v907
        %1052 = vmatprep.subr.mxu0 %v912
        %1053 = vmatpush1.msra.mxu0 %v911
        %1054 = vmatprep.subr.mxu0 %v916
        %1055 = vmatpush1.msra.mxu0 %v915
        %1056 = vmatprep.subr.mxu0 %v920
        %1057 = vmatpush1.msra.mxu0 %v919
        %1058 = vmatprep.subr.mxu0 %v924
        %1059 = vmatpush1.msra.mxu0 %v923
        %1060 = vmatprep.subr.mxu0 %v928
        %1061 = vmatpush1.msra.mxu0 %v927
        %1062 = vmatprep.subr.mxu0 %v932
        %1063 = vmatpush1.msra.mxu0 %v931
        %1064 = vmatprep.subr.mxu0 %v936
        %1065 = vmatpush1.msra.mxu0 %v935
        %1066 = vmatprep.subr.mxu0 %v940
        %1067 = vmatpush1.msra.mxu0 %v939
        %1068 = vmatprep.subr.mxu0 %v944
        %1069 = vmatpush1.msra.mxu0 %v943
        %1070 = vmatprep.subr.mxu0 %v948
        %1071 = vmatpush1.msra.mxu0 %v947
        %1072 = vmatprep.subr.mxu0 %v952
        %1073 = vmatpush1.msra.mxu0 %v951
        %1074 = vmatprep.subr.mxu0 %v956
        %1075 = vmatpush1.msra.mxu0 %v955
        %1076 = vmatprep.subr.mxu0 %v960
        %1077 = vmatpush1.msra.mxu0 %v959
        %1078 = vmatprep.subr.mxu0 %v964
        %1079 = vmatpush1.msra.mxu0 %v963
        %1080 = vmatprep.subr.mxu0 0.0
        %1081 = vmatpush1.msra.mxu0 0.0
        %1082 = vmatprep.subr.mxu0 0.0
        %1083 = vmatpush1.msra.mxu0 0.0
        %1084 = vmatprep.subr.mxu0 0.0
        %1085 = vmatpush1.msra.mxu0 0.0
        %1086 = vmatprep.subr.mxu0 0.0
        %1087 = vmatpush1.msra.mxu0 0.0
        %1088 = vmatprep.subr.mxu0 0.0
        %1089 = vmatpush1.msra.mxu0 0.0
        %1090 = vmatprep.subr.mxu0 0.0
        %1091 = vmatpush1.msra.mxu0 0.0
        %1092 = vmatprep.subr.mxu0 0.0
        %1093 = vmatpush1.msra.mxu0 0.0
        %1094 = vmatprep.subr.mxu0 0.0
        %1095 = vmatpush1.msra.mxu0 0.0
        %1096 = vmatprep.subr.mxu0 0.0
        %1097 = vmatpush1.msra.mxu0 0.0
        %1098 = vmatprep.subr.mxu0 0.0
        %1099 = vmatpush1.msra.mxu0 0.0
        %1100 = vmatprep.subr.mxu0 0.0
        %1101 = vmatpush1.msra.mxu0 0.0
        %1102 = vmatprep.subr.mxu0 0.0
        %1103 = vmatpush1.msra.mxu0 0.0
        %1104 = vmatprep.subr.mxu0 0.0
        %1105 = vmatpush1.msra.mxu0 0.0
        %1106 = vmatprep.subr.mxu0 0.0
        %1107 = vmatpush1.msra.mxu0 0.0
        %1108 = vmatprep.subr.mxu0 0.0
        %1109 = vmatpush1.msra.mxu0 0.0
        %1110 = vmatprep.subr.mxu0 0.0
        %1111 = vmatpush1.msra.mxu0 0.0
        %1112 = vmatprep.mubr.f32.mxu0 0.0
        %1113 = vmatmul.mubr.f32.gmra.mrb[0].mxu0 %v898
        %v1114 = vpop.f32.mrb[0].mxu0
        %v1115 = vadd.f32 0.0, %v1114
        %v1116 = vpop.f32.mrb[0].mxu0
        %v1117 = vadd.f32 0.0, %v1116
        %1118 = vmatprep.mubr.f32.mxu0 0.0
        %1119 = vmatmul.mubr.f32.gmra.mrb[0].mxu0 %v899
        %v1120 = vpop.f32.mrb[0].mxu0
        %v1121 = vadd.f32 0.0, %v1120
        %v1122 = vpop.f32.mrb[0].mxu0
        %v1123 = vadd.f32 0.0, %v1122
        %1124 = vmatprep.mubr.f32.mxu0 0.0
        %1125 = vmatmul.mubr.f32.gmra.mrb[0].mxu0 %v900
        %v1126 = vpop.f32.mrb[0].mxu0
        %v1127 = vadd.f32 0.0, %v1126
        %v1128 = vpop.f32.mrb[0].mxu0
        %v1129 = vadd.f32 0.0, %v1128
        %1130 = vdwg.mxu0
        %v1132 = vlaneseq
        %v1133 = vshrl.u32 %v1132, 7
        %v1134 = vsub.s32 0, %v1133
        %v1135 = vrot.slane %v897, %v1134
        %v1136 = vlaneseq
        %v1137 = vshrl.u32 %v1136, 7
        %v1138 = vsub.s32 1, %v1137
        %v1139 = vrot.slane %v897, %v1138
        %v1140 = vlaneseq
        %v1141 = vshrl.u32 %v1140, 7
        %v1142 = vsub.s32 2, %v1141
        %v1143 = vrot.slane %v897, %v1142
        %v1144 = vlaneseq
        %v1145 = vshrl.u32 %v1144, 7
        %v1146 = vsub.s32 3, %v1145
        %v1147 = vrot.slane %v897, %v1146
        %v1152 = vadd.f32 %v1135, %v1032
        %v1153 = vadd.f32 %v1139, %v1034
        %v1154 = vadd.f32 %v1143, %v1115
        %v1155 = vadd.f32 %v1147, %v1117
        %v1156 = vadd.f32 %v1135, %v1038
        %v1157 = vadd.f32 %v1139, %v1040
        %v1158 = vadd.f32 %v1143, %v1121
        %v1159 = vadd.f32 %v1147, %v1123
        %v1160 = vadd.f32 %v1135, %v1044
        %v1161 = vadd.f32 %v1139, %v1046
        %v1162 = vadd.f32 %v1143, %v1127
        %v1163 = vadd.f32 %v1147, %v1129
        %v1164 = vld [vmem:[#allocation3 + $0x1] sm:$0xff]
        %v1165 = vld [vmem:[#allocation3 + $0x9] sm:$0xff]
        %v1166 = vld [vmem:[#allocation3 + $0x11] sm:$0x3]
        %s1167 = scalar_lea.vmem [#allocation7], 512
        %v1168 = vld [vmem:[%s1167] sm:$0xff]
        %v1169 = vld [vmem:[%s1167 + $0x8] sm:$0xff]
        %v1170 = vld [vmem:[%s1167 + $0x10] sm:$0xff]
        %v1171 = vld [vmem:[%s1167 + $0x18] sm:$0xff]
        %v1172 = vld [vmem:[%s1167 + $0x20] sm:$0xff]
        %v1173 = vld [vmem:[%s1167 + $0x28] sm:$0xff]
        %v1174 = vld [vmem:[%s1167 + $0x30] sm:$0xff]
        %v1175 = vld [vmem:[%s1167 + $0x38] sm:$0xff]
        %v1176 = vld [vmem:[%s1167 + $0x40] sm:$0xff]
        %v1177 = vld [vmem:[%s1167 + $0x48] sm:$0xff]
        %v1178 = vld [vmem:[%s1167 + $0x50] sm:$0xff]
        %v1179 = vld [vmem:[%s1167 + $0x58] sm:$0xff]
        %v1180 = vld [vmem:[%s1167 + $0x60] sm:$0xff]
        %v1181 = vld [vmem:[%s1167 + $0x68] sm:$0xff]
        %v1182 = vld [vmem:[%s1167 + $0x70] sm:$0xff]
        %v1183 = vld [vmem:[%s1167 + $0x78] sm:$0xff]
        %v1184 = vld [vmem:[%s1167 + $0x80] sm:$0xff]
        %v1185 = vld [vmem:[%s1167 + $0x88] sm:$0xff]
        %v1186 = vld [vmem:[%s1167 + $0x90] sm:$0xff]
        %v1187 = vld [vmem:[%s1167 + $0x98] sm:$0xff]
        %v1188 = vld [vmem:[%s1167 + $0xa0] sm:$0xff]
        %v1189 = vld [vmem:[%s1167 + $0xa8] sm:$0xff]
        %v1190 = vld [vmem:[%s1167 + $0xb0] sm:$0xff]
        %v1191 = vld [vmem:[%s1167 + $0xb8] sm:$0xff]
        %v1192 = vld [vmem:[%s1167 + $0xc0] sm:$0xff]
        %v1193 = vld [vmem:[%s1167 + $0xc8] sm:$0xff]
        %v1194 = vld [vmem:[%s1167 + $0xd0] sm:$0xff]
        %v1195 = vld [vmem:[%s1167 + $0xd8] sm:$0xff]
        %v1196 = vld [vmem:[%s1167 + $0xe0] sm:$0xff]
        %v1197 = vld [vmem:[%s1167 + $0xe8] sm:$0xff]
        %v1198 = vld [vmem:[%s1167 + $0xf0] sm:$0xff]
        %v1199 = vld [vmem:[%s1167 + $0xf8] sm:$0xff]
        %v1200 = vld [vmem:[%s1167 + $0x100] sm:$0xff]
        %v1201 = vld [vmem:[%s1167 + $0x108] sm:$0xff]
        %v1202 = vld [vmem:[%s1167 + $0x110] sm:$0xff]
        %v1203 = vld [vmem:[%s1167 + $0x118] sm:$0xff]
        %v1204 = vld [vmem:[%s1167 + $0x120] sm:$0xff]
        %v1205 = vld [vmem:[%s1167 + $0x128] sm:$0xff]
        %v1206 = vld [vmem:[%s1167 + $0x130] sm:$0xff]
        %v1207 = vld [vmem:[%s1167 + $0x138] sm:$0xff]
        %v1208 = vld [vmem:[%s1167 + $0x140] sm:$0xff]
        %v1209 = vld [vmem:[%s1167 + $0x148] sm:$0xff]
        %v1210 = vld [vmem:[%s1167 + $0x150] sm:$0xff]
        %v1211 = vld [vmem:[%s1167 + $0x158] sm:$0xff]
        %v1212 = vld [vmem:[%s1167 + $0x160] sm:$0xff]
        %v1213 = vld [vmem:[%s1167 + $0x168] sm:$0xff]
        %v1214 = vld [vmem:[%s1167 + $0x170] sm:$0xff]
        %v1215 = vld [vmem:[%s1167 + $0x178] sm:$0xff]
        %v1216 = vld [vmem:[%s1167 + $0x180] sm:$0xff]
        %v1217 = vld [vmem:[%s1167 + $0x188] sm:$0xff]
        %v1218 = vld [vmem:[%s1167 + $0x190] sm:$0xff]
        %v1219 = vld [vmem:[%s1167 + $0x198] sm:$0xff]
        %v1220 = vld [vmem:[%s1167 + $0x1a0] sm:$0xff]
        %v1221 = vld [vmem:[%s1167 + $0x1a8] sm:$0xff]
        %v1222 = vld [vmem:[%s1167 + $0x1b0] sm:$0xff]
        %v1223 = vld [vmem:[%s1167 + $0x1b8] sm:$0xff]
        %v1224 = vld [vmem:[%s1167 + $0x1c0] sm:$0xff]
        %v1225 = vld [vmem:[%s1167 + $0x1c8] sm:$0xff]
        %v1226 = vld [vmem:[%s1167 + $0x1d0] sm:$0xff]
        %v1227 = vld [vmem:[%s1167 + $0x1d8] sm:$0xff]
        %v1228 = vld [vmem:[%s1167 + $0x1e0] sm:$0xff]
        %v1229 = vld [vmem:[%s1167 + $0x1e8] sm:$0xff]
        %v1230 = vld [vmem:[%s1167 + $0x1f0] sm:$0xff]
        %v1231 = vld [vmem:[%s1167 + $0x1f8] sm:$0xff]
        %1232 = vmatprep.subr.mxu0 %v1169
        %1233 = vmatpush1.msra.mxu0 %v1168
        %1234 = vmatprep.subr.mxu0 %v1173
        %1235 = vmatpush1.msra.mxu0 %v1172
        %1236 = vmatprep.subr.mxu0 %v1177
        %1237 = vmatpush1.msra.mxu0 %v1176
        %1238 = vmatprep.subr.mxu0 %v1181
        %1239 = vmatpush1.msra.mxu0 %v1180
        %1240 = vmatprep.subr.mxu0 %v1185
        %1241 = vmatpush1.msra.mxu0 %v1184
        %1242 = vmatprep.subr.mxu0 %v1189
        %1243 = vmatpush1.msra.mxu0 %v1188
        %1244 = vmatprep.subr.mxu0 %v1193
        %1245 = vmatpush1.msra.mxu0 %v1192
        %1246 = vmatprep.subr.mxu0 %v1197
        %1247 = vmatpush1.msra.mxu0 %v1196
        %1248 = vmatprep.subr.mxu0 %v1201
        %1249 = vmatpush1.msra.mxu0 %v1200
        %1250 = vmatprep.subr.mxu0 %v1205
        %1251 = vmatpush1.msra.mxu0 %v1204
        %1252 = vmatprep.subr.mxu0 %v1209
        %1253 = vmatpush1.msra.mxu0 %v1208
        %1254 = vmatprep.subr.mxu0 %v1213
        %1255 = vmatpush1.msra.mxu0 %v1212
        %1256 = vmatprep.subr.mxu0 %v1217
        %1257 = vmatpush1.msra.mxu0 %v1216
        %1258 = vmatprep.subr.mxu0 %v1221
        %1259 = vmatpush1.msra.mxu0 %v1220
        %1260 = vmatprep.subr.mxu0 %v1225
        %1261 = vmatpush1.msra.mxu0 %v1224
        %1262 = vmatprep.subr.mxu0 %v1229
        %1263 = vmatpush1.msra.mxu0 %v1228
        %1264 = vmatprep.subr.mxu0 0.0
        %1265 = vmatpush1.msra.mxu0 0.0
        %1266 = vmatprep.subr.mxu0 0.0
        %1267 = vmatpush1.msra.mxu0 0.0
        %1268 = vmatprep.subr.mxu0 0.0
        %1269 = vmatpush1.msra.mxu0 0.0
        %1270 = vmatprep.subr.mxu0 0.0
        %1271 = vmatpush1.msra.mxu0 0.0
        %1272 = vmatprep.subr.mxu0 0.0
        %1273 = vmatpush1.msra.mxu0 0.0
        %1274 = vmatprep.subr.mxu0 0.0
        %1275 = vmatpush1.msra.mxu0 0.0
        %1276 = vmatprep.subr.mxu0 0.0
        %1277 = vmatpush1.msra.mxu0 0.0
        %1278 = vmatprep.subr.mxu0 0.0
        %1279 = vmatpush1.msra.mxu0 0.0
        %1280 = vmatprep.subr.mxu0 0.0
        %1281 = vmatpush1.msra.mxu0 0.0
        %1282 = vmatprep.subr.mxu0 0.0
        %1283 = vmatpush1.msra.mxu0 0.0
        %1284 = vmatprep.subr.mxu0 0.0
        %1285 = vmatpush1.msra.mxu0 0.0
        %1286 = vmatprep.subr.mxu0 0.0
        %1287 = vmatpush1.msra.mxu0 0.0
        %1288 = vmatprep.subr.mxu0 0.0
        %1289 = vmatpush1.msra.mxu0 0.0
        %1290 = vmatprep.subr.mxu0 0.0
        %1291 = vmatpush1.msra.mxu0 0.0
        %1292 = vmatprep.subr.mxu0 0.0
        %1293 = vmatpush1.msra.mxu0 0.0
        %1294 = vmatprep.subr.mxu0 0.0
        %1295 = vmatpush1.msra.mxu0 0.0
        %1296 = vmatprep.mubr.f32.mxu0 0.0
        %1297 = vmatmul.mubr.f32.gmra.mrb[0].mxu0 %v1164
        %v1298 = vpop.f32.mrb[0].mxu0
        %v1299 = vadd.f32 0.0, %v1298
        %v1300 = vpop.f32.mrb[0].mxu0
        %v1301 = vadd.f32 0.0, %v1300
        %1302 = vmatprep.mubr.f32.mxu0 0.0
        %1303 = vmatmul.mubr.f32.gmra.mrb[0].mxu0 %v1165
        %v1304 = vpop.f32.mrb[0].mxu0
        %v1305 = vadd.f32 0.0, %v1304
        %v1306 = vpop.f32.mrb[0].mxu0
        %v1307 = vadd.f32 0.0, %v1306
        %1308 = vmatprep.mubr.f32.mxu0 0.0
        %1309 = vmatmul.mubr.f32.gmra.mrb[0].mxu0 %v1166
        %v1310 = vpop.f32.mrb[0].mxu0
        %v1311 = vadd.f32 0.0, %v1310
        %v1312 = vpop.f32.mrb[0].mxu0
        %v1313 = vadd.f32 0.0, %v1312
        %1314 = vdwg.mxu0
        %1315 = vmatprep.subr.mxu0 %v1171
        %1316 = vmatpush1.msra.mxu0 %v1170
        %1317 = vmatprep.subr.mxu0 %v1175
        %1318 = vmatpush1.msra.mxu0 %v1174
        %1319 = vmatprep.subr.mxu0 %v1179
        %1320 = vmatpush1.msra.mxu0 %v1178
        %1321 = vmatprep.subr.mxu0 %v1183
        %1322 = vmatpush1.msra.mxu0 %v1182
        %1323 = vmatprep.subr.mxu0 %v1187
        %1324 = vmatpush1.msra.mxu0 %v1186
        %1325 = vmatprep.subr.mxu0 %v1191
        %1326 = vmatpush1.msra.mxu0 %v1190
        %1327 = vmatprep.subr.mxu0 %v1195
        %1328 = vmatpush1.msra.mxu0 %v1194
        %1329 = vmatprep.subr.mxu0 %v1199
        %1330 = vmatpush1.msra.mxu0 %v1198
        %1331 = vmatprep.subr.mxu0 %v1203
        %1332 = vmatpush1.msra.mxu0 %v1202
        %1333 = vmatprep.subr.mxu0 %v1207
        %1334 = vmatpush1.msra.mxu0 %v1206
        %1335 = vmatprep.subr.mxu0 %v1211
        %1336 = vmatpush1.msra.mxu0 %v1210
        %1337 = vmatprep.subr.mxu0 %v1215
        %1338 = vmatpush1.msra.mxu0 %v1214
        %1339 = vmatprep.subr.mxu0 %v1219
        %1340 = vmatpush1.msra.mxu0 %v1218
        %1341 = vmatprep.subr.mxu0 %v1223
        %1342 = vmatpush1.msra.mxu0 %v1222
        %1343 = vmatprep.subr.mxu0 %v1227
        %1344 = vmatpush1.msra.mxu0 %v1226
        %1345 = vmatprep.subr.mxu0 %v1231
        %1346 = vmatpush1.msra.mxu0 %v1230
        %1347 = vmatprep.subr.mxu0 0.0
        %1348 = vmatpush1.msra.mxu0 0.0
        %1349 = vmatprep.subr.mxu0 0.0
        %1350 = vmatpush1.msra.mxu0 0.0
        %1351 = vmatprep.subr.mxu0 0.0
        %1352 = vmatpush1.msra.mxu0 0.0
        %1353 = vmatprep.subr.mxu0 0.0
        %1354 = vmatpush1.msra.mxu0 0.0
        %1355 = vmatprep.subr.mxu0 0.0
        %1356 = vmatpush1.msra.mxu0 0.0
        %1357 = vmatprep.subr.mxu0 0.0
        %1358 = vmatpush1.msra.mxu0 0.0
        %1359 = vmatprep.subr.mxu0 0.0
        %1360 = vmatpush1.msra.mxu0 0.0
        %1361 = vmatprep.subr.mxu0 0.0
        %1362 = vmatpush1.msra.mxu0 0.0
        %1363 = vmatprep.subr.mxu0 0.0
        %1364 = vmatpush1.msra.mxu0 0.0
        %1365 = vmatprep.subr.mxu0 0.0
        %1366 = vmatpush1.msra.mxu0 0.0
        %1367 = vmatprep.subr.mxu0 0.0
        %1368 = vmatpush1.msra.mxu0 0.0
        %1369 = vmatprep.subr.mxu0 0.0
        %1370 = vmatpush1.msra.mxu0 0.0
        %1371 = vmatprep.subr.mxu0 0.0
        %1372 = vmatpush1.msra.mxu0 0.0
        %1373 = vmatprep.subr.mxu0 0.0
        %1374 = vmatpush1.msra.mxu0 0.0
        %1375 = vmatprep.subr.mxu0 0.0
        %1376 = vmatpush1.msra.mxu0 0.0
        %1377 = vmatprep.subr.mxu0 0.0
        %1378 = vmatpush1.msra.mxu0 0.0
        %1379 = vmatprep.mubr.f32.mxu0 0.0
        %1380 = vmatmul.mubr.f32.gmra.mrb[0].mxu0 %v1164
        %v1381 = vpop.f32.mrb[0].mxu0
        %v1382 = vadd.f32 0.0, %v1381
        %v1383 = vpop.f32.mrb[0].mxu0
        %v1384 = vadd.f32 0.0, %v1383
        %1385 = vmatprep.mubr.f32.mxu0 0.0
        %1386 = vmatmul.mubr.f32.gmra.mrb[0].mxu0 %v1165
        %v1387 = vpop.f32.mrb[0].mxu0
        %v1388 = vadd.f32 0.0, %v1387
        %v1389 = vpop.f32.mrb[0].mxu0
        %v1390 = vadd.f32 0.0, %v1389
        %1391 = vmatprep.mubr.f32.mxu0 0.0
        %1392 = vmatmul.mubr.f32.gmra.mrb[0].mxu0 %v1166
        %v1393 = vpop.f32.mrb[0].mxu0
        %v1394 = vadd.f32 0.0, %v1393
        %v1395 = vpop.f32.mrb[0].mxu0
        %v1396 = vadd.f32 0.0, %v1395
        %1397 = vdwg.mxu0
        %v1398 = vadd.f32 %v1152, %v1299
        %v1399 = vadd.f32 %v1153, %v1301
        %v1400 = vadd.f32 %v1154, %v1382
        %v1401 = vadd.f32 %v1155, %v1384
        %v1402 = vadd.f32 %v1156, %v1305
        %v1403 = vadd.f32 %v1157, %v1307
        %v1404 = vadd.f32 %v1158, %v1388
        %v1405 = vadd.f32 %v1159, %v1390
        %v1406 = vadd.f32 %v1160, %v1311
        %v1407 = vadd.f32 %v1161, %v1313
        %v1408 = vadd.f32 %v1162, %v1394
        %v1409 = vadd.f32 %v1163, %v1396
        %v1410 = vld [vmem:[#allocation3 + $0x2] sm:$0xff]
        %v1411 = vld [vmem:[#allocation3 + $0xa] sm:$0xff]
        %v1412 = vld [vmem:[#allocation3 + $0x12] sm:$0x3]
        %s1413 = scalar_lea.vmem [#allocation7], 1024
        %v1414 = vld [vmem:[%s1413] sm:$0xff]
        %v1415 = vld [vmem:[%s1413 + $0x8] sm:$0xff]
        %v1416 = vld [vmem:[%s1413 + $0x10] sm:$0xff]
        %v1417 = vld [vmem:[%s1413 + $0x18] sm:$0xff]
        %v1418 = vld [vmem:[%s1413 + $0x20] sm:$0xff]
        %v1419 = vld [vmem:[%s1413 + $0x28] sm:$0xff]
        %v1420 = vld [vmem:[%s1413 + $0x30] sm:$0xff]
        %v1421 = vld [vmem:[%s1413 + $0x38] sm:$0xff]
        %v1422 = vld [vmem:[%s1413 + $0x40] sm:$0xff]
        %v1423 = vld [vmem:[%s1413 + $0x48] sm:$0xff]
        %v1424 = vld [vmem:[%s1413 + $0x50] sm:$0xff]
        %v1425 = vld [vmem:[%s1413 + $0x58] sm:$0xff]
        %v1426 = vld [vmem:[%s1413 + $0x60] sm:$0xff]
        %v1427 = vld [vmem:[%s1413 + $0x68] sm:$0xff]
        %v1428 = vld [vmem:[%s1413 + $0x70] sm:$0xff]
        %v1429 = vld [vmem:[%s1413 + $0x78] sm:$0xff]
        %v1430 = vld [vmem:[%s1413 + $0x80] sm:$0xff]
        %v1431 = vld [vmem:[%s1413 + $0x88] sm:$0xff]
        %v1432 = vld [vmem:[%s1413 + $0x90] sm:$0xff]
        %v1433 = vld [vmem:[%s1413 + $0x98] sm:$0xff]
        %v1434 = vld [vmem:[%s1413 + $0xa0] sm:$0xff]
        %v1435 = vld [vmem:[%s1413 + $0xa8] sm:$0xff]
        %v1436 = vld [vmem:[%s1413 + $0xb0] sm:$0xff]
        %v1437 = vld [vmem:[%s1413 + $0xb8] sm:$0xff]
        %v1438 = vld [vmem:[%s1413 + $0xc0] sm:$0xff]
        %v1439 = vld [vmem:[%s1413 + $0xc8] sm:$0xff]
        %v1440 = vld [vmem:[%s1413 + $0xd0] sm:$0xff]
        %v1441 = vld [vmem:[%s1413 + $0xd8] sm:$0xff]
        %v1442 = vld [vmem:[%s1413 + $0xe0] sm:$0xff]
        %v1443 = vld [vmem:[%s1413 + $0xe8] sm:$0xff]
        %v1444 = vld [vmem:[%s1413 + $0xf0] sm:$0xff]
        %v1445 = vld [vmem:[%s1413 + $0xf8] sm:$0xff]
        %v1446 = vld [vmem:[%s1413 + $0x100] sm:$0xff]
        %v1447 = vld [vmem:[%s1413 + $0x108] sm:$0xff]
        %v1448 = vld [vmem:[%s1413 + $0x110] sm:$0xff]
        %v1449 = vld [vmem:[%s1413 + $0x118] sm:$0xff]
        %v1450 = vld [vmem:[%s1413 + $0x120] sm:$0xff]
        %v1451 = vld [vmem:[%s1413 + $0x128] sm:$0xff]
        %v1452 = vld [vmem:[%s1413 + $0x130] sm:$0xff]
        %v1453 = vld [vmem:[%s1413 + $0x138] sm:$0xff]
        %v1454 = vld [vmem:[%s1413 + $0x140] sm:$0xff]
        %v1455 = vld [vmem:[%s1413 + $0x148] sm:$0xff]
        %v1456 = vld [vmem:[%s1413 + $0x150] sm:$0xff]
        %v1457 = vld [vmem:[%s1413 + $0x158] sm:$0xff]
        %v1458 = vld [vmem:[%s1413 + $0x160] sm:$0xff]
        %v1459 = vld [vmem:[%s1413 + $0x168] sm:$0xff]
        %v1460 = vld [vmem:[%s1413 + $0x170] sm:$0xff]
        %v1461 = vld [vmem:[%s1413 + $0x178] sm:$0xff]
        %v1462 = vld [vmem:[%s1413 + $0x180] sm:$0xff]
        %v1463 = vld [vmem:[%s1413 + $0x188] sm:$0xff]
        %v1464 = vld [vmem:[%s1413 + $0x190] sm:$0xff]
        %v1465 = vld [vmem:[%s1413 + $0x198] sm:$0xff]
        %v1466 = vld [vmem:[%s1413 + $0x1a0] sm:$0xff]
        %v1467 = vld [vmem:[%s1413 + $0x1a8] sm:$0xff]
        %v1468 = vld [vmem:[%s1413 + $0x1b0] sm:$0xff]
        %v1469 = vld [vmem:[%s1413 + $0x1b8] sm:$0xff]
        %v1470 = vld [vmem:[%s1413 + $0x1c0] sm:$0xff]
        %v1471 = vld [vmem:[%s1413 + $0x1c8] sm:$0xff]
        %v1472 = vld [vmem:[%s1413 + $0x1d0] sm:$0xff]
        %v1473 = vld [vmem:[%s1413 + $0x1d8] sm:$0xff]
        %v1474 = vld [vmem:[%s1413 + $0x1e0] sm:$0xff]
        %v1475 = vld [vmem:[%s1413 + $0x1e8] sm:$0xff]
        %v1476 = vld [vmem:[%s1413 + $0x1f0] sm:$0xff]
        %v1477 = vld [vmem:[%s1413 + $0x1f8] sm:$0xff]
        %1478 = vmatprep.subr.mxu0 %v1415
        %1479 = vmatpush1.msra.mxu0 %v1414
        %1480 = vmatprep.subr.mxu0 %v1419
        %1481 = vmatpush1.msra.mxu0 %v1418
        %1482 = vmatprep.subr.mxu0 %v1423
        %1483 = vmatpush1.msra.mxu0 %v1422
        %1484 = vmatprep.subr.mxu0 %v1427
        %1485 = vmatpush1.msra.mxu0 %v1426
        %1486 = vmatprep.subr.mxu0 %v1431
        %1487 = vmatpush1.msra.mxu0 %v1430
        %1488 = vmatprep.subr.mxu0 %v1435
        %1489 = vmatpush1.msra.mxu0 %v1434
        %1490 = vmatprep.subr.mxu0 %v1439
        %1491 = vmatpush1.msra.mxu0 %v1438
        %1492 = vmatprep.subr.mxu0 %v1443
        %1493 = vmatpush1.msra.mxu0 %v1442
        %1494 = vmatprep.subr.mxu0 %v1447
        %1495 = vmatpush1.msra.mxu0 %v1446
        %1496 = vmatprep.subr.mxu0 %v1451
        %1497 = vmatpush1.msra.mxu0 %v1450
        %1498 = vmatprep.subr.mxu0 %v1455
        %1499 = vmatpush1.msra.mxu0 %v1454
        %1500 = vmatprep.subr.mxu0 %v1459
        %1501 = vmatpush1.msra.mxu0 %v1458
        %1502 = vmatprep.subr.mxu0 %v1463
        %1503 = vmatpush1.msra.mxu0 %v1462
        %1504 = vmatprep.subr.mxu0 %v1467
        %1505 = vmatpush1.msra.mxu0 %v1466
        %1506 = vmatprep.subr.mxu0 %v1471
        %1507 = vmatpush1.msra.mxu0 %v1470
        %1508 = vmatprep.subr.mxu0 %v1475
        %1509 = vmatpush1.msra.mxu0 %v1474
        %1510 = vmatprep.subr.mxu0 0.0
        %1511 = vmatpush1.msra.mxu0 0.0
        %1512 = vmatprep.subr.mxu0 0.0
        %1513 = vmatpush1.msra.mxu0 0.0
        %1514 = vmatprep.subr.mxu0 0.0
        %1515 = vmatpush1.msra.mxu0 0.0
        %1516 = vmatprep.subr.mxu0 0.0
        %1517 = vmatpush1.msra.mxu0 0.0
        %1518 = vmatprep.subr.mxu0 0.0
        %1519 = vmatpush1.msra.mxu0 0.0
        %1520 = vmatprep.subr.mxu0 0.0
        %1521 = vmatpush1.msra.mxu0 0.0
        %1522 = vmatprep.subr.mxu0 0.0
        %1523 = vmatpush1.msra.mxu0 0.0
        %1524 = vmatprep.subr.mxu0 0.0
        %1525 = vmatpush1.msra.mxu0 0.0
        %1526 = vmatprep.subr.mxu0 0.0
        %1527 = vmatpush1.msra.mxu0 0.0
        %1528 = vmatprep.subr.mxu0 0.0
        %1529 = vmatpush1.msra.mxu0 0.0
        %1530 = vmatprep.subr.mxu0 0.0
        %1531 = vmatpush1.msra.mxu0 0.0
        %1532 = vmatprep.subr.mxu0 0.0
        %1533 = vmatpush1.msra.mxu0 0.0
        %1534 = vmatprep.subr.mxu0 0.0
        %1535 = vmatpush1.msra.mxu0 0.0
        %1536 = vmatprep.subr.mxu0 0.0
        %1537 = vmatpush1.msra.mxu0 0.0
        %1538 = vmatprep.subr.mxu0 0.0
        %1539 = vmatpush1.msra.mxu0 0.0
        %1540 = vmatprep.subr.mxu0 0.0
        %1541 = vmatpush1.msra.mxu0 0.0
        %1542 = vmatprep.mubr.f32.mxu0 0.0
        %1543 = vmatmul.mubr.f32.gmra.mrb[0].mxu0 %v1410
        %v1544 = vpop.f32.mrb[0].mxu0
        %v1545 = vadd.f32 0.0, %v1544
        %v1546 = vpop.f32.mrb[0].mxu0
        %v1547 = vadd.f32 0.0, %v1546
        %1548 = vmatprep.mubr.f32.mxu0 0.0
        %1549 = vmatmul.mubr.f32.gmra.mrb[0].mxu0 %v1411
        %v1550 = vpop.f32.mrb[0].mxu0
        %v1551 = vadd.f32 0.0, %v1550
        %v1552 = vpop.f32.mrb[0].mxu0
        %v1553 = vadd.f32 0.0, %v1552
        %1554 = vmatprep.mubr.f32.mxu0 0.0
        %1555 = vmatmul.mubr.f32.gmra.mrb[0].mxu0 %v1412
        %v1556 = vpop.f32.mrb[0].mxu0
        %v1557 = vadd.f32 0.0, %v1556
        %v1558 = vpop.f32.mrb[0].mxu0
        %v1559 = vadd.f32 0.0, %v1558
        %1560 = vdwg.mxu0
        %1561 = vmatprep.subr.mxu0 %v1417
        %1562 = vmatpush1.msra.mxu0 %v1416
        %1563 = vmatprep.subr.mxu0 %v1421
        %1564 = vmatpush1.msra.mxu0 %v1420
        %1565 = vmatprep.subr.mxu0 %v1425
        %1566 = vmatpush1.msra.mxu0 %v1424
        %1567 = vmatprep.subr.mxu0 %v1429
        %1568 = vmatpush1.msra.mxu0 %v1428
        %1569 = vmatprep.subr.mxu0 %v1433
        %1570 = vmatpush1.msra.mxu0 %v1432
        %1571 = vmatprep.subr.mxu0 %v1437
        %1572 = vmatpush1.msra.mxu0 %v1436
        %1573 = vmatprep.subr.mxu0 %v1441
        %1574 = vmatpush1.msra.mxu0 %v1440
        %1575 = vmatprep.subr.mxu0 %v1445
        %1576 = vmatpush1.msra.mxu0 %v1444
        %1577 = vmatprep.subr.mxu0 %v1449
        %1578 = vmatpush1.msra.mxu0 %v1448
        %1579 = vmatprep.subr.mxu0 %v1453
        %1580 = vmatpush1.msra.mxu0 %v1452
        %1581 = vmatprep.subr.mxu0 %v1457
        %1582 = vmatpush1.msra.mxu0 %v1456
        %1583 = vmatprep.subr.mxu0 %v1461
        %1584 = vmatpush1.msra.mxu0 %v1460
        %1585 = vmatprep.subr.mxu0 %v1465
        %1586 = vmatpush1.msra.mxu0 %v1464
        %1587 = vmatprep.subr.mxu0 %v1469
        %1588 = vmatpush1.msra.mxu0 %v1468
        %1589 = vmatprep.subr.mxu0 %v1473
        %1590 = vmatpush1.msra.mxu0 %v1472
        %1591 = vmatprep.subr.mxu0 %v1477
        %1592 = vmatpush1.msra.mxu0 %v1476
        %1593 = vmatprep.subr.mxu0 0.0
        %1594 = vmatpush1.msra.mxu0 0.0
        %1595 = vmatprep.subr.mxu0 0.0
        %1596 = vmatpush1.msra.mxu0 0.0
        %1597 = vmatprep.subr.mxu0 0.0
        %1598 = vmatpush1.msra.mxu0 0.0
        %1599 = vmatprep.subr.mxu0 0.0
        %1600 = vmatpush1.msra.mxu0 0.0
        %1601 = vmatprep.subr.mxu0 0.0
        %1602 = vmatpush1.msra.mxu0 0.0
        %1603 = vmatprep.subr.mxu0 0.0
        %1604 = vmatpush1.msra.mxu0 0.0
        %1605 = vmatprep.subr.mxu0 0.0
        %1606 = vmatpush1.msra.mxu0 0.0
        %1607 = vmatprep.subr.mxu0 0.0
        %1608 = vmatpush1.msra.mxu0 0.0
        %1609 = vmatprep.subr.mxu0 0.0
        %1610 = vmatpush1.msra.mxu0 0.0
        %1611 = vmatprep.subr.mxu0 0.0
        %1612 = vmatpush1.msra.mxu0 0.0
        %1613 = vmatprep.subr.mxu0 0.0
        %1614 = vmatpush1.msra.mxu0 0.0
        %1615 = vmatprep.subr.mxu0 0.0
        %1616 = vmatpush1.msra.mxu0 0.0
        %1617 = vmatprep.subr.mxu0 0.0
        %1618 = vmatpush1.msra.mxu0 0.0
        %1619 = vmatprep.subr.mxu0 0.0
        %1620 = vmatpush1.msra.mxu0 0.0
        %1621 = vmatprep.subr.mxu0 0.0
        %1622 = vmatpush1.msra.mxu0 0.0
        %1623 = vmatprep.subr.mxu0 0.0
        %1624 = vmatpush1.msra.mxu0 0.0
        %1625 = vmatprep.mubr.f32.mxu0 0.0
        %1626 = vmatmul.mubr.f32.gmra.mrb[0].mxu0 %v1410
        %v1627 = vpop.f32.mrb[0].mxu0
        %v1628 = vadd.f32 0.0, %v1627
        %v1629 = vpop.f32.mrb[0].mxu0
        %v1630 = vadd.f32 0.0, %v1629
        %1631 = vmatprep.mubr.f32.mxu0 0.0
        %1632 = vmatmul.mubr.f32.gmra.mrb[0].mxu0 %v1411
        %v1633 = vpop.f32.mrb[0].mxu0
        %v1634 = vadd.f32 0.0, %v1633
        %v1635 = vpop.f32.mrb[0].mxu0
        %v1636 = vadd.f32 0.0, %v1635
        %1637 = vmatprep.mubr.f32.mxu0 0.0
        %1638 = vmatmul.mubr.f32.gmra.mrb[0].mxu0 %v1412
        %v1639 = vpop.f32.mrb[0].mxu0
        %v1640 = vadd.f32 0.0, %v1639
        %v1641 = vpop.f32.mrb[0].mxu0
        %v1642 = vadd.f32 0.0, %v1641
        %1643 = vdwg.mxu0
        %v1644 = vadd.f32 %v1398, %v1545
        %v1645 = vadd.f32 %v1399, %v1547
        %v1646 = vadd.f32 %v1400, %v1628
        %v1647 = vadd.f32 %v1401, %v1630
        %v1648 = vadd.f32 %v1402, %v1551
        %v1649 = vadd.f32 %v1403, %v1553
        %v1650 = vadd.f32 %v1404, %v1634
        %v1651 = vadd.f32 %v1405, %v1636
        %v1652 = vadd.f32 %v1406, %v1557
        %v1653 = vadd.f32 %v1407, %v1559
        %v1654 = vadd.f32 %v1408, %v1640
        %v1655 = vadd.f32 %v1409, %v1642
        %vm1656 = vcmp.lt.s32.totalorder %v410, 512
        %vm1657 = vmand %vm411, %vm1656
        %1658 = vst.msk [vmem:[#allocation4] ss:$8 sm:$0xf] %vm1657, 0.0
        %1659 = vst.msk [vmem:[#allocation4] ss:$8 sm:$0x0] %vm1657, 0.0
        %s1660 = scalar_lea.vmem [#allocation4], 67
        %1661 = vst.msk [vmem:[%s1660] ss:$8 sm:$0xf] %vm1657, 0.0
        %1662 = vst.msk [vmem:[%s1660] ss:$8 sm:$0x0] %vm1657, 0.0
        %v1663 = vmul.f32 %v1644, %v879
        %v1664 = vmul.f32 %v1645, %v879
        %v1665 = vmul.f32 %v1646, %v879
        %v1666 = vmul.f32 %v1647, %v879
        %v1667 = vmul.f32 %v1648, %v884
        %v1668 = vmul.f32 %v1649, %v884
        %v1669 = vmul.f32 %v1650, %v884
        %v1670 = vmul.f32 %v1651, %v884
        %v1671 = vmul.f32 %v1652, %v889
        %v1672 = vmul.f32 %v1653, %v889
        %v1673 = vmul.f32 %v1654, %v889
        %v1674 = vmul.f32 %v1655, %v889
        %vm1687 = vcmask 1040384
        %v1688 = vrot.slane %v1663, 7
        %v1689 = vrot.slane %v1664, 7
        %v1690 = vrot.slane %v1665, 7
        %v1691 = vrot.slane %v1666, 7
        %v1692 = vrot.slane %v1667, 7
        %v1693 = vsel %vm1687, %v1688, %v1692
        %v1694 = vrot.slane %v1668, 7
        %v1695 = vsel %vm1687, %v1689, %v1694
        %v1696 = vrot.slane %v1669, 7
        %v1697 = vsel %vm1687, %v1690, %v1696
        %v1698 = vrot.slane %v1670, 7
        %v1699 = vsel %vm1687, %v1691, %v1698
        %v1700 = vrot.slane %v1671, 7
        %v1701 = vsel %vm1687, %v1692, %v1700
        %v1702 = vrot.slane %v1672, 7
        %v1703 = vsel %vm1687, %v1694, %v1702
        %v1704 = vrot.slane %v1673, 7
        %v1705 = vsel %vm1687, %v1696, %v1704
        %v1706 = vrot.slane %v1674, 7
        %v1707 = vsel %vm1687, %v1698, %v1706
        %1720 = vst [vmem:[#allocation4] sm:$0xfe] %v1688
        %1721 = vst [vmem:[#allocation4 + $0x8] sm:$0xfe] %v1689
        %1722 = vst [vmem:[#allocation4 + $0x10] sm:$0xfe] %v1690
        %1723 = vst [vmem:[#allocation4 + $0x18] sm:$0xfe] %v1691
        %1724 = vst [vmem:[#allocation4 + $0x20] sm:$0xff] %v1693
        %1725 = vst [vmem:[#allocation4 + $0x28] sm:$0xff] %v1695
        %1726 = vst [vmem:[#allocation4 + $0x30] sm:$0xff] %v1697
        %1727 = vst [vmem:[#allocation4 + $0x38] sm:$0xff] %v1699
        %1728 = vst [vmem:[#allocation4 + $0x40] sm:$0x7] %v1701
        %1729 = vst [vmem:[#allocation4 + $0x48] sm:$0x7] %v1703
        %1730 = vst [vmem:[#allocation4 + $0x50] sm:$0x7] %v1705
        %1731 = vst [vmem:[#allocation4 + $0x58] sm:$0x7] %v1707
        %v1732 = vld [vmem:[%s6] sm:$0x1]
        %v1733 = vld [vmem:[#allocation4] sm:$0xff]
        %v1734 = vld [vmem:[#allocation4 + $0x8] sm:$0xff]
        %v1735 = vld [vmem:[#allocation4 + $0x10] sm:$0xff]
        %v1736 = vld [vmem:[#allocation4 + $0x18] sm:$0xff]
        %v1737 = vld [vmem:[#allocation4 + $0x20] sm:$0xff]
        %v1738 = vld [vmem:[#allocation4 + $0x28] sm:$0xff]
        %v1739 = vld [vmem:[#allocation4 + $0x30] sm:$0xff]
        %v1740 = vld [vmem:[#allocation4 + $0x38] sm:$0xff]
        %v1741 = vld [vmem:[#allocation4 + $0x40] sm:$0x3]
        %v1742 = vld [vmem:[#allocation4 + $0x48] sm:$0x3]
        %v1743 = vld [vmem:[#allocation4 + $0x50] sm:$0x3]
        %v1744 = vld [vmem:[#allocation4 + $0x58] sm:$0x3]
        %v1745 = vld [vmem:[#allocation9] sm:$0xff]
        %v1746 = vld [vmem:[#allocation9 + $0x8] sm:$0xff]
        %v1747 = vld [vmem:[#allocation9 + $0x10] sm:$0xff]
        %v1748 = vld [vmem:[#allocation9 + $0x18] sm:$0xff]
        %v1749 = vld [vmem:[#allocation9 + $0x20] sm:$0xff]
        %v1750 = vld [vmem:[#allocation9 + $0x28] sm:$0xff]
        %v1751 = vld [vmem:[#allocation9 + $0x30] sm:$0xff]
        %v1752 = vld [vmem:[#allocation9 + $0x38] sm:$0xff]
        %v1753 = vld [vmem:[#allocation9 + $0x40] sm:$0xff]
        %v1754 = vld [vmem:[#allocation9 + $0x48] sm:$0xff]
        %v1755 = vld [vmem:[#allocation9 + $0x50] sm:$0xff]
        %v1756 = vld [vmem:[#allocation9 + $0x58] sm:$0xff]
        %v1757 = vld [vmem:[#allocation9 + $0x60] sm:$0xff]
        %v1758 = vld [vmem:[#allocation9 + $0x68] sm:$0xff]
        %v1759 = vld [vmem:[#allocation9 + $0x70] sm:$0xff]
        %v1760 = vld [vmem:[#allocation9 + $0x78] sm:$0xff]
        %v1761 = vld [vmem:[#allocation9 + $0x80] sm:$0xff]
        %v1762 = vld [vmem:[#allocation9 + $0x88] sm:$0xff]
        %v1763 = vld [vmem:[#allocation9 + $0x90] sm:$0xff]
        %v1764 = vld [vmem:[#allocation9 + $0x98] sm:$0xff]
        %v1765 = vld [vmem:[#allocation9 + $0xa0] sm:$0xff]
        %v1766 = vld [vmem:[#allocation9 + $0xa8] sm:$0xff]
        %v1767 = vld [vmem:[#allocation9 + $0xb0] sm:$0xff]
        %v1768 = vld [vmem:[#allocation9 + $0xb8] sm:$0xff]
        %v1769 = vld [vmem:[#allocation9 + $0xc0] sm:$0xff]
        %v1770 = vld [vmem:[#allocation9 + $0xc8] sm:$0xff]
        %v1771 = vld [vmem:[#allocation9 + $0xd0] sm:$0xff]
        %v1772 = vld [vmem:[#allocation9 + $0xd8] sm:$0xff]
        %v1773 = vld [vmem:[#allocation9 + $0xe0] sm:$0xff]
        %v1774 = vld [vmem:[#allocation9 + $0xe8] sm:$0xff]
        %v1775 = vld [vmem:[#allocation9 + $0xf0] sm:$0xff]
        %v1776 = vld [vmem:[#allocation9 + $0xf8] sm:$0xff]
        %v1777 = vld [vmem:[#allocation9 + $0x100] sm:$0xff]
        %v1778 = vld [vmem:[#allocation9 + $0x108] sm:$0xff]
        %v1779 = vld [vmem:[#allocation9 + $0x110] sm:$0xff]
        %v1780 = vld [vmem:[#allocation9 + $0x118] sm:$0xff]
        %v1781 = vld [vmem:[#allocation9 + $0x120] sm:$0xff]
        %v1782 = vld [vmem:[#allocation9 + $0x128] sm:$0xff]
        %v1783 = vld [vmem:[#allocation9 + $0x130] sm:$0xff]
        %v1784 = vld [vmem:[#allocation9 + $0x138] sm:$0xff]
        %v1785 = vld [vmem:[#allocation9 + $0x140] sm:$0xff]
        %v1786 = vld [vmem:[#allocation9 + $0x148] sm:$0xff]
        %v1787 = vld [vmem:[#allocation9 + $0x150] sm:$0xff]
        %v1788 = vld [vmem:[#allocation9 + $0x158] sm:$0xff]
        %v1789 = vld [vmem:[#allocation9 + $0x160] sm:$0xff]
        %v1790 = vld [vmem:[#allocation9 + $0x168] sm:$0xff]
        %v1791 = vld [vmem:[#allocation9 + $0x170] sm:$0xff]
        %v1792 = vld [vmem:[#allocation9 + $0x178] sm:$0xff]
        %v1793 = vld [vmem:[#allocation9 + $0x180] sm:$0xff]
        %v1794 = vld [vmem:[#allocation9 + $0x188] sm:$0xff]
        %v1795 = vld [vmem:[#allocation9 + $0x190] sm:$0xff]
        %v1796 = vld [vmem:[#allocation9 + $0x198] sm:$0xff]
        %v1797 = vld [vmem:[#allocation9 + $0x1a0] sm:$0xff]
        %v1798 = vld [vmem:[#allocation9 + $0x1a8] sm:$0xff]
        %v1799 = vld [vmem:[#allocation9 + $0x1b0] sm:$0xff]
        %v1800 = vld [vmem:[#allocation9 + $0x1b8] sm:$0xff]
        %v1801 = vld [vmem:[#allocation9 + $0x1c0] sm:$0xff]
        %v1802 = vld [vmem:[#allocation9 + $0x1c8] sm:$0xff]
        %v1803 = vld [vmem:[#allocation9 + $0x1d0] sm:$0xff]
        %v1804 = vld [vmem:[#allocation9 + $0x1d8] sm:$0xff]
        %v1805 = vld [vmem:[#allocation9 + $0x1e0] sm:$0xff]
        %v1806 = vld [vmem:[#allocation9 + $0x1e8] sm:$0xff]
        %v1807 = vld [vmem:[#allocation9 + $0x1f0] sm:$0xff]
        %v1808 = vld [vmem:[#allocation9 + $0x1f8] sm:$0xff]
        %1809 = vmatprep.subr.mxu0 0.0
        %1810 = vmatpush1.msra.mxu0 %v1745
        %1811 = vmatprep.subr.mxu0 0.0
        %1812 = vmatpush1.msra.mxu0 %v1746
        %1813 = vmatprep.subr.mxu0 0.0
        %1814 = vmatpush1.msra.mxu0 %v1747
        %1815 = vmatprep.subr.mxu0 0.0
        %1816 = vmatpush1.msra.mxu0 %v1748
        %1817 = vmatprep.subr.mxu0 0.0
        %1818 = vmatpush1.msra.mxu0 %v1749
        %1819 = vmatprep.subr.mxu0 0.0
        %1820 = vmatpush1.msra.mxu0 %v1750
        %1821 = vmatprep.subr.mxu0 0.0
        %1822 = vmatpush1.msra.mxu0 %v1751
        %1823 = vmatprep.subr.mxu0 0.0
        %1824 = vmatpush1.msra.mxu0 %v1752
        %1825 = vmatprep.subr.mxu0 0.0
        %1826 = vmatpush1.msra.mxu0 %v1753
        %1827 = vmatprep.subr.mxu0 0.0
        %1828 = vmatpush1.msra.mxu0 %v1754
        %1829 = vmatprep.subr.mxu0 0.0
        %1830 = vmatpush1.msra.mxu0 %v1755
        %1831 = vmatprep.subr.mxu0 0.0
        %1832 = vmatpush1.msra.mxu0 %v1756
        %1833 = vmatprep.subr.mxu0 0.0
        %1834 = vmatpush1.msra.mxu0 %v1757
        %1835 = vmatprep.subr.mxu0 0.0
        %1836 = vmatpush1.msra.mxu0 %v1758
        %1837 = vmatprep.subr.mxu0 0.0
        %1838 = vmatpush1.msra.mxu0 %v1759
        %1839 = vmatprep.subr.mxu0 0.0
        %1840 = vmatpush1.msra.mxu0 %v1760
        %1841 = vmatprep.subr.mxu0 0.0
        %1842 = vmatpush1.msra.mxu0 %v1761
        %1843 = vmatprep.subr.mxu0 0.0
        %1844 = vmatpush1.msra.mxu0 %v1762
        %1845 = vmatprep.subr.mxu0 0.0
        %1846 = vmatpush1.msra.mxu0 %v1763
        %1847 = vmatprep.subr.mxu0 0.0
        %1848 = vmatpush1.msra.mxu0 %v1764
        %1849 = vmatprep.subr.mxu0 0.0
        %1850 = vmatpush1.msra.mxu0 %v1765
        %1851 = vmatprep.subr.mxu0 0.0
        %1852 = vmatpush1.msra.mxu0 %v1766
        %1853 = vmatprep.subr.mxu0 0.0
        %1854 = vmatpush1.msra.mxu0 %v1767
        %1855 = vmatprep.subr.mxu0 0.0
        %1856 = vmatpush1.msra.mxu0 %v1768
        %1857 = vmatprep.subr.mxu0 0.0
        %1858 = vmatpush1.msra.mxu0 %v1769
        %1859 = vmatprep.subr.mxu0 0.0
        %1860 = vmatpush1.msra.mxu0 %v1770
        %1861 = vmatprep.subr.mxu0 0.0
        %1862 = vmatpush1.msra.mxu0 %v1771
        %1863 = vmatprep.subr.mxu0 0.0
        %1864 = vmatpush1.msra.mxu0 %v1772
        %1865 = vmatprep.subr.mxu0 0.0
        %1866 = vmatpush1.msra.mxu0 %v1773
        %1867 = vmatprep.subr.mxu0 0.0
        %1868 = vmatpush1.msra.mxu0 %v1774
        %1869 = vmatprep.subr.mxu0 0.0
        %1870 = vmatpush1.msra.mxu0 %v1775
        %1871 = vmatprep.subr.mxu0 0.0
        %1872 = vmatpush1.msra.mxu0 %v1776
        %1873 = vmatprep.mubr.f32.mxu0 %v1734
        %1874 = vmatmul.mubr.f32.gmra.mrb[0].mxu0 %v1733
        %v1875 = vpop.f32.mrb[0].mxu0
        %v1876 = vadd.f32 0.0, %v1875
        %v1877 = vpop.f32.mrb[0].mxu0
        %1878 = vmatprep.mubr.f32.mxu0 %v1738
        %1879 = vmatmul.mubr.f32.gmra.mrb[0].mxu0 %v1737
        %v1880 = vpop.f32.mrb[0].mxu0
        %v1881 = vadd.f32 0.0, %v1880
        %v1882 = vpop.f32.mrb[0].mxu0
        %1883 = vmatprep.mubr.f32.mxu0 %v1742
        %1884 = vmatmul.mubr.f32.gmra.mrb[0].mxu0 %v1741
        %v1885 = vpop.f32.mrb[0].mxu0
        %v1886 = vadd.f32 0.0, %v1885
        %v1887 = vpop.f32.mrb[0].mxu0
        %1888 = vdwg.mxu0
        %1889 = vmatprep.subr.mxu0 0.0
        %1890 = vmatpush1.msra.mxu0 %v1777
        %1891 = vmatprep.subr.mxu0 0.0
        %1892 = vmatpush1.msra.mxu0 %v1778
        %1893 = vmatprep.subr.mxu0 0.0
        %1894 = vmatpush1.msra.mxu0 %v1779
        %1895 = vmatprep.subr.mxu0 0.0
        %1896 = vmatpush1.msra.mxu0 %v1780
        %1897 = vmatprep.subr.mxu0 0.0
        %1898 = vmatpush1.msra.mxu0 %v1781
        %1899 = vmatprep.subr.mxu0 0.0
        %1900 = vmatpush1.msra.mxu0 %v1782
        %1901 = vmatprep.subr.mxu0 0.0
        %1902 = vmatpush1.msra.mxu0 %v1783
        %1903 = vmatprep.subr.mxu0 0.0
        %1904 = vmatpush1.msra.mxu0 %v1784
        %1905 = vmatprep.subr.mxu0 0.0
        %1906 = vmatpush1.msra.mxu0 %v1785
        %1907 = vmatprep.subr.mxu0 0.0
        %1908 = vmatpush1.msra.mxu0 %v1786
        %1909 = vmatprep.subr.mxu0 0.0
        %1910 = vmatpush1.msra.mxu0 %v1787
        %1911 = vmatprep.subr.mxu0 0.0
        %1912 = vmatpush1.msra.mxu0 %v1788
        %1913 = vmatprep.subr.mxu0 0.0
        %1914 = vmatpush1.msra.mxu0 %v1789
        %1915 = vmatprep.subr.mxu0 0.0
        %1916 = vmatpush1.msra.mxu0 %v1790
        %1917 = vmatprep.subr.mxu0 0.0
        %1918 = vmatpush1.msra.mxu0 %v1791
        %1919 = vmatprep.subr.mxu0 0.0
        %1920 = vmatpush1.msra.mxu0 %v1792
        %1921 = vmatprep.subr.mxu0 0.0
        %1922 = vmatpush1.msra.mxu0 %v1793
        %1923 = vmatprep.subr.mxu0 0.0
        %1924 = vmatpush1.msra.mxu0 %v1794
        %1925 = vmatprep.subr.mxu0 0.0
        %1926 = vmatpush1.msra.mxu0 %v1795
        %1927 = vmatprep.subr.mxu0 0.0
        %1928 = vmatpush1.msra.mxu0 %v1796
        %1929 = vmatprep.subr.mxu0 0.0
        %1930 = vmatpush1.msra.mxu0 %v1797
        %1931 = vmatprep.subr.mxu0 0.0
        %1932 = vmatpush1.msra.mxu0 %v1798
        %1933 = vmatprep.subr.mxu0 0.0
        %1934 = vmatpush1.msra.mxu0 %v1799
        %1935 = vmatprep.subr.mxu0 0.0
        %1936 = vmatpush1.msra.mxu0 %v1800
        %1937 = vmatprep.subr.mxu0 0.0
        %1938 = vmatpush1.msra.mxu0 %v1801
        %1939 = vmatprep.subr.mxu0 0.0
        %1940 = vmatpush1.msra.mxu0 %v1802
        %1941 = vmatprep.subr.mxu0 0.0
        %1942 = vmatpush1.msra.mxu0 %v1803
        %1943 = vmatprep.subr.mxu0 0.0
        %1944 = vmatpush1.msra.mxu0 %v1804
        %1945 = vmatprep.subr.mxu0 0.0
        %1946 = vmatpush1.msra.mxu0 %v1805
        %1947 = vmatprep.subr.mxu0 0.0
        %1948 = vmatpush1.msra.mxu0 %v1806
        %1949 = vmatprep.subr.mxu0 0.0
        %1950 = vmatpush1.msra.mxu0 %v1807
        %1951 = vmatprep.subr.mxu0 0.0
        %1952 = vmatpush1.msra.mxu0 %v1808
        %1953 = vmatprep.mubr.f32.mxu0 %v1736
        %1954 = vmatmul.mubr.f32.gmra.mrb[0].mxu0 %v1735
        %v1955 = vpop.f32.mrb[0].mxu0
        %v1956 = vadd.f32 %v1876, %v1955
        %v1957 = vpop.f32.mrb[0].mxu0
        %1958 = vmatprep.mubr.f32.mxu0 %v1740
        %1959 = vmatmul.mubr.f32.gmra.mrb[0].mxu0 %v1739
        %v1960 = vpop.f32.mrb[0].mxu0
        %v1961 = vadd.f32 %v1881, %v1960
        %v1962 = vpop.f32.mrb[0].mxu0
        %1963 = vmatprep.mubr.f32.mxu0 %v1744
        %1964 = vmatmul.mubr.f32.gmra.mrb[0].mxu0 %v1743
        %v1965 = vpop.f32.mrb[0].mxu0
        %v1966 = vadd.f32 %v1886, %v1965
        %v1967 = vpop.f32.mrb[0].mxu0
        %1968 = vdwg.mxu0
        %v1970 = vlaneseq
        %v1971 = vshrl.u32 %v1970, 7
        %v1972 = vsub.s32 0, %v1971
        %v1973 = vrot.slane %v1732, %v1972
        %v1975 = vadd.f32 %v1973, %v1956
        %v1976 = vadd.f32 %v1973, %v1961
        %v1977 = vadd.f32 %v1973, %v1966
        %v1978 = vld [vmem:[#allocation4] sm:$0xfe]
        %v1979 = vld [vmem:[#allocation4 + $0x8] sm:$0xfe]
        %v1980 = vld [vmem:[#allocation4 + $0x10] sm:$0xfe]
        %v1981 = vld [vmem:[#allocation4 + $0x18] sm:$0xfe]
        %v1982 = vld [vmem:[#allocation4 + $0x40] sm:$0x7]
        %v1983 = vld [vmem:[#allocation4 + $0x48] sm:$0x7]
        %v1984 = vld [vmem:[#allocation4 + $0x50] sm:$0x7]
        %v1985 = vld [vmem:[#allocation4 + $0x58] sm:$0x7]
        %s1986 = scalar_lea.vmem [#allocation9], 512
        %v1987 = vld [vmem:[%s1986] sm:$0xff]
        %v1988 = vld [vmem:[%s1986 + $0x8] sm:$0xff]
        %v1989 = vld [vmem:[%s1986 + $0x10] sm:$0xff]
        %v1990 = vld [vmem:[%s1986 + $0x18] sm:$0xff]
        %v1991 = vld [vmem:[%s1986 + $0x20] sm:$0xff]
        %v1992 = vld [vmem:[%s1986 + $0x28] sm:$0xff]
        %v1993 = vld [vmem:[%s1986 + $0x30] sm:$0xff]
        %v1994 = vld [vmem:[%s1986 + $0x38] sm:$0xff]
        %v1995 = vld [vmem:[%s1986 + $0x40] sm:$0xff]
        %v1996 = vld [vmem:[%s1986 + $0x48] sm:$0xff]
        %v1997 = vld [vmem:[%s1986 + $0x50] sm:$0xff]
        %v1998 = vld [vmem:[%s1986 + $0x58] sm:$0xff]
        %v1999 = vld [vmem:[%s1986 + $0x60] sm:$0xff]
        %v2000 = vld [vmem:[%s1986 + $0x68] sm:$0xff]
        %v2001 = vld [vmem:[%s1986 + $0x70] sm:$0xff]
        %v2002 = vld [vmem:[%s1986 + $0x78] sm:$0xff]
        %v2003 = vld [vmem:[%s1986 + $0x80] sm:$0xff]
        %v2004 = vld [vmem:[%s1986 + $0x88] sm:$0xff]
        %v2005 = vld [vmem:[%s1986 + $0x90] sm:$0xff]
        %v2006 = vld [vmem:[%s1986 + $0x98] sm:$0xff]
        %v2007 = vld [vmem:[%s1986 + $0xa0] sm:$0xff]
        %v2008 = vld [vmem:[%s1986 + $0xa8] sm:$0xff]
        %v2009 = vld [vmem:[%s1986 + $0xb0] sm:$0xff]
        %v2010 = vld [vmem:[%s1986 + $0xb8] sm:$0xff]
        %v2011 = vld [vmem:[%s1986 + $0xc0] sm:$0xff]
        %v2012 = vld [vmem:[%s1986 + $0xc8] sm:$0xff]
        %v2013 = vld [vmem:[%s1986 + $0xd0] sm:$0xff]
        %v2014 = vld [vmem:[%s1986 + $0xd8] sm:$0xff]
        %v2015 = vld [vmem:[%s1986 + $0xe0] sm:$0xff]
        %v2016 = vld [vmem:[%s1986 + $0xe8] sm:$0xff]
        %v2017 = vld [vmem:[%s1986 + $0xf0] sm:$0xff]
        %v2018 = vld [vmem:[%s1986 + $0xf8] sm:$0xff]
        %v2019 = vld [vmem:[%s1986 + $0x100] sm:$0xff]
        %v2020 = vld [vmem:[%s1986 + $0x108] sm:$0xff]
        %v2021 = vld [vmem:[%s1986 + $0x110] sm:$0xff]
        %v2022 = vld [vmem:[%s1986 + $0x118] sm:$0xff]
        %v2023 = vld [vmem:[%s1986 + $0x120] sm:$0xff]
        %v2024 = vld [vmem:[%s1986 + $0x128] sm:$0xff]
        %v2025 = vld [vmem:[%s1986 + $0x130] sm:$0xff]
        %v2026 = vld [vmem:[%s1986 + $0x138] sm:$0xff]
        %v2027 = vld [vmem:[%s1986 + $0x140] sm:$0xff]
        %v2028 = vld [vmem:[%s1986 + $0x148] sm:$0xff]
        %v2029 = vld [vmem:[%s1986 + $0x150] sm:$0xff]
        %v2030 = vld [vmem:[%s1986 + $0x158] sm:$0xff]
        %v2031 = vld [vmem:[%s1986 + $0x160] sm:$0xff]
        %v2032 = vld [vmem:[%s1986 + $0x168] sm:$0xff]
        %v2033 = vld [vmem:[%s1986 + $0x170] sm:$0xff]
        %v2034 = vld [vmem:[%s1986 + $0x178] sm:$0xff]
        %v2035 = vld [vmem:[%s1986 + $0x180] sm:$0xff]
        %v2036 = vld [vmem:[%s1986 + $0x188] sm:$0xff]
        %v2037 = vld [vmem:[%s1986 + $0x190] sm:$0xff]
        %v2038 = vld [vmem:[%s1986 + $0x198] sm:$0xff]
        %v2039 = vld [vmem:[%s1986 + $0x1a0] sm:$0xff]
        %v2040 = vld [vmem:[%s1986 + $0x1a8] sm:$0xff]
        %v2041 = vld [vmem:[%s1986 + $0x1b0] sm:$0xff]
        %v2042 = vld [vmem:[%s1986 + $0x1b8] sm:$0xff]
        %v2043 = vld [vmem:[%s1986 + $0x1c0] sm:$0xff]
        %v2044 = vld [vmem:[%s1986 + $0x1c8] sm:$0xff]
        %v2045 = vld [vmem:[%s1986 + $0x1d0] sm:$0xff]
        %v2046 = vld [vmem:[%s1986 + $0x1d8] sm:$0xff]
        %v2047 = vld [vmem:[%s1986 + $0x1e0] sm:$0xff]
        %v2048 = vld [vmem:[%s1986 + $0x1e8] sm:$0xff]
        %v2049 = vld [vmem:[%s1986 + $0x1f0] sm:$0xff]
        %v2050 = vld [vmem:[%s1986 + $0x1f8] sm:$0xff]
        %v2063 = vrot.slane %v1978, 1
        %v2064 = vrot.slane %v1737, 1
        %v2065 = vsel %vm624, %v2063, %v2064
        %v2066 = vrot.slane %v1979, 1
        %v2067 = vrot.slane %v1738, 1
        %v2068 = vsel %vm624, %v2066, %v2067
        %v2069 = vrot.slane %v1980, 1
        %v2070 = vrot.slane %v1739, 1
        %v2071 = vsel %vm624, %v2069, %v2070
        %v2072 = vrot.slane %v1981, 1
        %v2073 = vrot.slane %v1740, 1
        %v2074 = vsel %vm624, %v2072, %v2073
        %v2075 = vrot.slane %v1982, 1
        %v2076 = vsel %vm624, %v2064, %v2075
        %v2077 = vrot.slane %v1983, 1
        %v2078 = vsel %vm624, %v2067, %v2077
        %v2079 = vrot.slane %v1984, 1
        %v2080 = vsel %vm624, %v2070, %v2079
        %v2081 = vrot.slane %v1985, 1
        %v2082 = vsel %vm624, %v2073, %v2081
        %2095 = vmatprep.subr.mxu0 0.0
        %2096 = vmatpush1.msra.mxu0 %v1987
        %2097 = vmatprep.subr.mxu0 0.0
        %2098 = vmatpush1.msra.mxu0 %v1988
        %2099 = vmatprep.subr.mxu0 0.0
        %2100 = vmatpush1.msra.mxu0 %v1989
        %2101 = vmatprep.subr.mxu0 0.0
        %2102 = vmatpush1.msra.mxu0 %v1990
        %2103 = vmatprep.subr.mxu0 0.0
        %2104 = vmatpush1.msra.mxu0 %v1991
        %2105 = vmatprep.subr.mxu0 0.0
        %2106 = vmatpush1.msra.mxu0 %v1992
        %2107 = vmatprep.subr.mxu0 0.0
        %2108 = vmatpush1.msra.mxu0 %v1993
        %2109 = vmatprep.subr.mxu0 0.0
        %2110 = vmatpush1.msra.mxu0 %v1994
        %2111 = vmatprep.subr.mxu0 0.0
        %2112 = vmatpush1.msra.mxu0 %v1995
        %2113 = vmatprep.subr.mxu0 0.0
        %2114 = vmatpush1.msra.mxu0 %v1996
        %2115 = vmatprep.subr.mxu0 0.0
        %2116 = vmatpush1.msra.mxu0 %v1997
        %2117 = vmatprep.subr.mxu0 0.0
        %2118 = vmatpush1.msra.mxu0 %v1998
        %2119 = vmatprep.subr.mxu0 0.0
        %2120 = vmatpush1.msra.mxu0 %v1999
        %2121 = vmatprep.subr.mxu0 0.0
        %2122 = vmatpush1.msra.mxu0 %v2000
        %2123 = vmatprep.subr.mxu0 0.0
        %2124 = vmatpush1.msra.mxu0 %v2001
        %2125 = vmatprep.subr.mxu0 0.0
        %2126 = vmatpush1.msra.mxu0 %v2002
        %2127 = vmatprep.subr.mxu0 0.0
        %2128 = vmatpush1.msra.mxu0 %v2003
        %2129 = vmatprep.subr.mxu0 0.0
        %2130 = vmatpush1.msra.mxu0 %v2004
        %2131 = vmatprep.subr.mxu0 0.0
        %2132 = vmatpush1.msra.mxu0 %v2005
        %2133 = vmatprep.subr.mxu0 0.0
        %2134 = vmatpush1.msra.mxu0 %v2006
        %2135 = vmatprep.subr.mxu0 0.0
        %2136 = vmatpush1.msra.mxu0 %v2007
        %2137 = vmatprep.subr.mxu0 0.0
        %2138 = vmatpush1.msra.mxu0 %v2008
        %2139 = vmatprep.subr.mxu0 0.0
        %2140 = vmatpush1.msra.mxu0 %v2009
        %2141 = vmatprep.subr.mxu0 0.0
        %2142 = vmatpush1.msra.mxu0 %v2010
        %2143 = vmatprep.subr.mxu0 0.0
        %2144 = vmatpush1.msra.mxu0 %v2011
        %2145 = vmatprep.subr.mxu0 0.0
        %2146 = vmatpush1.msra.mxu0 %v2012
        %2147 = vmatprep.subr.mxu0 0.0
        %2148 = vmatpush1.msra.mxu0 %v2013
        %2149 = vmatprep.subr.mxu0 0.0
        %2150 = vmatpush1.msra.mxu0 %v2014
        %2151 = vmatprep.subr.mxu0 0.0
        %2152 = vmatpush1.msra.mxu0 %v2015
        %2153 = vmatprep.subr.mxu0 0.0
        %2154 = vmatpush1.msra.mxu0 %v2016
        %2155 = vmatprep.subr.mxu0 0.0
        %2156 = vmatpush1.msra.mxu0 %v2017
        %2157 = vmatprep.subr.mxu0 0.0
        %2158 = vmatpush1.msra.mxu0 %v2018
        %2159 = vmatprep.mubr.f32.mxu0 %v2068
        %2160 = vmatmul.mubr.f32.gmra.mrb[0].mxu0 %v2065
        %v2161 = vpop.f32.mrb[0].mxu0
        %v2162 = vadd.f32 0.0, %v2161
        %v2163 = vpop.f32.mrb[0].mxu0
        %2164 = vmatprep.mubr.f32.mxu0 %v2078
        %2165 = vmatmul.mubr.f32.gmra.mrb[0].mxu0 %v2076
        %v2166 = vpop.f32.mrb[0].mxu0
        %v2167 = vadd.f32 0.0, %v2166
        %v2168 = vpop.f32.mrb[0].mxu0
        %2169 = vmatprep.mubr.f32.mxu0 %v2077
        %2170 = vmatmul.mubr.f32.gmra.mrb[0].mxu0 %v2075
        %v2171 = vpop.f32.mrb[0].mxu0
        %v2172 = vadd.f32 0.0, %v2171
        %v2173 = vpop.f32.mrb[0].mxu0
        %2174 = vdwg.mxu0
        %2175 = vmatprep.subr.mxu0 0.0
        %2176 = vmatpush1.msra.mxu0 %v2019
        %2177 = vmatprep.subr.mxu0 0.0
        %2178 = vmatpush1.msra.mxu0 %v2020
        %2179 = vmatprep.subr.mxu0 0.0
        %2180 = vmatpush1.msra.mxu0 %v2021
        %2181 = vmatprep.subr.mxu0 0.0
        %2182 = vmatpush1.msra.mxu0 %v2022
        %2183 = vmatprep.subr.mxu0 0.0
        %2184 = vmatpush1.msra.mxu0 %v2023
        %2185 = vmatprep.subr.mxu0 0.0
        %2186 = vmatpush1.msra.mxu0 %v2024
        %2187 = vmatprep.subr.mxu0 0.0
        %2188 = vmatpush1.msra.mxu0 %v2025
        %2189 = vmatprep.subr.mxu0 0.0
        %2190 = vmatpush1.msra.mxu0 %v2026
        %2191 = vmatprep.subr.mxu0 0.0
        %2192 = vmatpush1.msra.mxu0 %v2027
        %2193 = vmatprep.subr.mxu0 0.0
        %2194 = vmatpush1.msra.mxu0 %v2028
        %2195 = vmatprep.subr.mxu0 0.0
        %2196 = vmatpush1.msra.mxu0 %v2029
        %2197 = vmatprep.subr.mxu0 0.0
        %2198 = vmatpush1.msra.mxu0 %v2030
        %2199 = vmatprep.subr.mxu0 0.0
        %2200 = vmatpush1.msra.mxu0 %v2031
        %2201 = vmatprep.subr.mxu0 0.0
        %2202 = vmatpush1.msra.mxu0 %v2032
        %2203 = vmatprep.subr.mxu0 0.0
        %2204 = vmatpush1.msra.mxu0 %v2033
        %2205 = vmatprep.subr.mxu0 0.0
        %2206 = vmatpush1.msra.mxu0 %v2034
        %2207 = vmatprep.subr.mxu0 0.0
        %2208 = vmatpush1.msra.mxu0 %v2035
        %2209 = vmatprep.subr.mxu0 0.0
        %2210 = vmatpush1.msra.mxu0 %v2036
        %2211 = vmatprep.subr.mxu0 0.0
        %2212 = vmatpush1.msra.mxu0 %v2037
        %2213 = vmatprep.subr.mxu0 0.0
        %2214 = vmatpush1.msra.mxu0 %v2038
        %2215 = vmatprep.subr.mxu0 0.0
        %2216 = vmatpush1.msra.mxu0 %v2039
        %2217 = vmatprep.subr.mxu0 0.0
        %2218 = vmatpush1.msra.mxu0 %v2040
        %2219 = vmatprep.subr.mxu0 0.0
        %2220 = vmatpush1.msra.mxu0 %v2041
        %2221 = vmatprep.subr.mxu0 0.0
        %2222 = vmatpush1.msra.mxu0 %v2042
        %2223 = vmatprep.subr.mxu0 0.0
        %2224 = vmatpush1.msra.mxu0 %v2043
        %2225 = vmatprep.subr.mxu0 0.0
        %2226 = vmatpush1.msra.mxu0 %v2044
        %2227 = vmatprep.subr.mxu0 0.0
        %2228 = vmatpush1.msra.mxu0 %v2045
        %2229 = vmatprep.subr.mxu0 0.0
        %2230 = vmatpush1.msra.mxu0 %v2046
        %2231 = vmatprep.subr.mxu0 0.0
        %2232 = vmatpush1.msra.mxu0 %v2047
        %2233 = vmatprep.subr.mxu0 0.0
        %2234 = vmatpush1.msra.mxu0 %v2048
        %2235 = vmatprep.subr.mxu0 0.0
        %2236 = vmatpush1.msra.mxu0 %v2049
        %2237 = vmatprep.subr.mxu0 0.0
        %2238 = vmatpush1.msra.mxu0 %v2050
        %2239 = vmatprep.mubr.f32.mxu0 %v2074
        %2240 = vmatmul.mubr.f32.gmra.mrb[0].mxu0 %v2071
        %v2241 = vpop.f32.mrb[0].mxu0
        %v2242 = vadd.f32 %v2162, %v2241
        %v2243 = vpop.f32.mrb[0].mxu0
        %2244 = vmatprep.mubr.f32.mxu0 %v2082
        %2245 = vmatmul.mubr.f32.gmra.mrb[0].mxu0 %v2080
        %v2246 = vpop.f32.mrb[0].mxu0
        %v2247 = vadd.f32 %v2167, %v2246
        %v2248 = vpop.f32.mrb[0].mxu0
        %2249 = vmatprep.mubr.f32.mxu0 %v2081
        %2250 = vmatmul.mubr.f32.gmra.mrb[0].mxu0 %v2079
        %v2251 = vpop.f32.mrb[0].mxu0
        %v2252 = vadd.f32 %v2172, %v2251
        %v2253 = vpop.f32.mrb[0].mxu0
        %2254 = vdwg.mxu0
        %v2255 = vadd.f32 %v1975, %v2242
        %v2256 = vadd.f32 %v1976, %v2247
        %v2257 = vadd.f32 %v1977, %v2252
        %s2258 = scalar_lea.vmem [#allocation9], 1024
        %v2259 = vld [vmem:[%s2258] sm:$0xff]
        %v2260 = vld [vmem:[%s2258 + $0x8] sm:$0xff]
        %v2261 = vld [vmem:[%s2258 + $0x10] sm:$0xff]
        %v2262 = vld [vmem:[%s2258 + $0x18] sm:$0xff]
        %v2263 = vld [vmem:[%s2258 + $0x20] sm:$0xff]
        %v2264 = vld [vmem:[%s2258 + $0x28] sm:$0xff]
        %v2265 = vld [vmem:[%s2258 + $0x30] sm:$0xff]
        %v2266 = vld [vmem:[%s2258 + $0x38] sm:$0xff]
        %v2267 = vld [vmem:[%s2258 + $0x40] sm:$0xff]
        %v2268 = vld [vmem:[%s2258 + $0x48] sm:$0xff]
        %v2269 = vld [vmem:[%s2258 + $0x50] sm:$0xff]
        %v2270 = vld [vmem:[%s2258 + $0x58] sm:$0xff]
        %v2271 = vld [vmem:[%s2258 + $0x60] sm:$0xff]
        %v2272 = vld [vmem:[%s2258 + $0x68] sm:$0xff]
        %v2273 = vld [vmem:[%s2258 + $0x70] sm:$0xff]
        %v2274 = vld [vmem:[%s2258 + $0x78] sm:$0xff]
        %v2275 = vld [vmem:[%s2258 + $0x80] sm:$0xff]
        %v2276 = vld [vmem:[%s2258 + $0x88] sm:$0xff]
        %v2277 = vld [vmem:[%s2258 + $0x90] sm:$0xff]
        %v2278 = vld [vmem:[%s2258 + $0x98] sm:$0xff]
        %v2279 = vld [vmem:[%s2258 + $0xa0] sm:$0xff]
        %v2280 = vld [vmem:[%s2258 + $0xa8] sm:$0xff]
        %v2281 = vld [vmem:[%s2258 + $0xb0] sm:$0xff]
        %v2282 = vld [vmem:[%s2258 + $0xb8] sm:$0xff]
        %v2283 = vld [vmem:[%s2258 + $0xc0] sm:$0xff]
        %v2284 = vld [vmem:[%s2258 + $0xc8] sm:$0xff]
        %v2285 = vld [vmem:[%s2258 + $0xd0] sm:$0xff]
        %v2286 = vld [vmem:[%s2258 + $0xd8] sm:$0xff]
        %v2287 = vld [vmem:[%s2258 + $0xe0] sm:$0xff]
        %v2288 = vld [vmem:[%s2258 + $0xe8] sm:$0xff]
        %v2289 = vld [vmem:[%s2258 + $0xf0] sm:$0xff]
        %v2290 = vld [vmem:[%s2258 + $0xf8] sm:$0xff]
        %v2291 = vld [vmem:[%s2258 + $0x100] sm:$0xff]
        %v2292 = vld [vmem:[%s2258 + $0x108] sm:$0xff]
        %v2293 = vld [vmem:[%s2258 + $0x110] sm:$0xff]
        %v2294 = vld [vmem:[%s2258 + $0x118] sm:$0xff]
        %v2295 = vld [vmem:[%s2258 + $0x120] sm:$0xff]
        %v2296 = vld [vmem:[%s2258 + $0x128] sm:$0xff]
        %v2297 = vld [vmem:[%s2258 + $0x130] sm:$0xff]
        %v2298 = vld [vmem:[%s2258 + $0x138] sm:$0xff]
        %v2299 = vld [vmem:[%s2258 + $0x140] sm:$0xff]
        %v2300 = vld [vmem:[%s2258 + $0x148] sm:$0xff]
        %v2301 = vld [vmem:[%s2258 + $0x150] sm:$0xff]
        %v2302 = vld [vmem:[%s2258 + $0x158] sm:$0xff]
        %v2303 = vld [vmem:[%s2258 + $0x160] sm:$0xff]
        %v2304 = vld [vmem:[%s2258 + $0x168] sm:$0xff]
        %v2305 = vld [vmem:[%s2258 + $0x170] sm:$0xff]
        %v2306 = vld [vmem:[%s2258 + $0x178] sm:$0xff]
        %v2307 = vld [vmem:[%s2258 + $0x180] sm:$0xff]
        %v2308 = vld [vmem:[%s2258 + $0x188] sm:$0xff]
        %v2309 = vld [vmem:[%s2258 + $0x190] sm:$0xff]
        %v2310 = vld [vmem:[%s2258 + $0x198] sm:$0xff]
        %v2311 = vld [vmem:[%s2258 + $0x1a0] sm:$0xff]
        %v2312 = vld [vmem:[%s2258 + $0x1a8] sm:$0xff]
        %v2313 = vld [vmem:[%s2258 + $0x1b0] sm:$0xff]
        %v2314 = vld [vmem:[%s2258 + $0x1b8] sm:$0xff]
        %v2315 = vld [vmem:[%s2258 + $0x1c0] sm:$0xff]
        %v2316 = vld [vmem:[%s2258 + $0x1c8] sm:$0xff]
        %v2317 = vld [vmem:[%s2258 + $0x1d0] sm:$0xff]
        %v2318 = vld [vmem:[%s2258 + $0x1d8] sm:$0xff]
        %v2319 = vld [vmem:[%s2258 + $0x1e0] sm:$0xff]
        %v2320 = vld [vmem:[%s2258 + $0x1e8] sm:$0xff]
        %v2321 = vld [vmem:[%s2258 + $0x1f0] sm:$0xff]
        %v2322 = vld [vmem:[%s2258 + $0x1f8] sm:$0xff]
        %2323 = vmatprep.subr.mxu0 0.0
        %2324 = vmatpush1.msra.mxu0 %v2259
        %2325 = vmatprep.subr.mxu0 0.0
        %2326 = vmatpush1.msra.mxu0 %v2260
        %2327 = vmatprep.subr.mxu0 0.0
        %2328 = vmatpush1.msra.mxu0 %v2261
        %2329 = vmatprep.subr.mxu0 0.0
        %2330 = vmatpush1.msra.mxu0 %v2262
        %2331 = vmatprep.subr.mxu0 0.0
        %2332 = vmatpush1.msra.mxu0 %v2263
        %2333 = vmatprep.subr.mxu0 0.0
        %2334 = vmatpush1.msra.mxu0 %v2264
        %2335 = vmatprep.subr.mxu0 0.0
        %2336 = vmatpush1.msra.mxu0 %v2265
        %2337 = vmatprep.subr.mxu0 0.0
        %2338 = vmatpush1.msra.mxu0 %v2266
        %2339 = vmatprep.subr.mxu0 0.0
        %2340 = vmatpush1.msra.mxu0 %v2267
        %2341 = vmatprep.subr.mxu0 0.0
        %2342 = vmatpush1.msra.mxu0 %v2268
        %2343 = vmatprep.subr.mxu0 0.0
        %2344 = vmatpush1.msra.mxu0 %v2269
        %2345 = vmatprep.subr.mxu0 0.0
        %2346 = vmatpush1.msra.mxu0 %v2270
        %2347 = vmatprep.subr.mxu0 0.0
        %2348 = vmatpush1.msra.mxu0 %v2271
        %2349 = vmatprep.subr.mxu0 0.0
        %2350 = vmatpush1.msra.mxu0 %v2272
        %2351 = vmatprep.subr.mxu0 0.0
        %2352 = vmatpush1.msra.mxu0 %v2273
        %2353 = vmatprep.subr.mxu0 0.0
        %2354 = vmatpush1.msra.mxu0 %v2274
        %2355 = vmatprep.subr.mxu0 0.0
        %2356 = vmatpush1.msra.mxu0 %v2275
        %2357 = vmatprep.subr.mxu0 0.0
        %2358 = vmatpush1.msra.mxu0 %v2276
        %2359 = vmatprep.subr.mxu0 0.0
        %2360 = vmatpush1.msra.mxu0 %v2277
        %2361 = vmatprep.subr.mxu0 0.0
        %2362 = vmatpush1.msra.mxu0 %v2278
        %2363 = vmatprep.subr.mxu0 0.0
        %2364 = vmatpush1.msra.mxu0 %v2279
        %2365 = vmatprep.subr.mxu0 0.0
        %2366 = vmatpush1.msra.mxu0 %v2280
        %2367 = vmatprep.subr.mxu0 0.0
        %2368 = vmatpush1.msra.mxu0 %v2281
        %2369 = vmatprep.subr.mxu0 0.0
        %2370 = vmatpush1.msra.mxu0 %v2282
        %2371 = vmatprep.subr.mxu0 0.0
        %2372 = vmatpush1.msra.mxu0 %v2283
        %2373 = vmatprep.subr.mxu0 0.0
        %2374 = vmatpush1.msra.mxu0 %v2284
        %2375 = vmatprep.subr.mxu0 0.0
        %2376 = vmatpush1.msra.mxu0 %v2285
        %2377 = vmatprep.subr.mxu0 0.0
        %2378 = vmatpush1.msra.mxu0 %v2286
        %2379 = vmatprep.subr.mxu0 0.0
        %2380 = vmatpush1.msra.mxu0 %v2287
        %2381 = vmatprep.subr.mxu0 0.0
        %2382 = vmatpush1.msra.mxu0 %v2288
        %2383 = vmatprep.subr.mxu0 0.0
        %2384 = vmatpush1.msra.mxu0 %v2289
        %2385 = vmatprep.subr.mxu0 0.0
        %2386 = vmatpush1.msra.mxu0 %v2290
        %2387 = vmatprep.mubr.f32.mxu0 %v2068
        %2388 = vmatmul.mubr.f32.gmra.mrb[0].mxu0 %v2065
        %v2389 = vpop.f32.mrb[0].mxu0
        %v2390 = vadd.f32 0.0, %v2389
        %v2391 = vpop.f32.mrb[0].mxu0
        %2392 = vmatprep.mubr.f32.mxu0 %v2078
        %2393 = vmatmul.mubr.f32.gmra.mrb[0].mxu0 %v2076
        %v2394 = vpop.f32.mrb[0].mxu0
        %v2395 = vadd.f32 0.0, %v2394
        %v2396 = vpop.f32.mrb[0].mxu0
        %2397 = vmatprep.mubr.f32.mxu0 %v2077
        %2398 = vmatmul.mubr.f32.gmra.mrb[0].mxu0 %v2075
        %v2399 = vpop.f32.mrb[0].mxu0
        %v2400 = vadd.f32 0.0, %v2399
        %v2401 = vpop.f32.mrb[0].mxu0
        %2402 = vdwg.mxu0
        %2403 = vmatprep.subr.mxu0 0.0
        %2404 = vmatpush1.msra.mxu0 %v2291
        %2405 = vmatprep.subr.mxu0 0.0
        %2406 = vmatpush1.msra.mxu0 %v2292
        %2407 = vmatprep.subr.mxu0 0.0
        %2408 = vmatpush1.msra.mxu0 %v2293
        %2409 = vmatprep.subr.mxu0 0.0
        %2410 = vmatpush1.msra.mxu0 %v2294
        %2411 = vmatprep.subr.mxu0 0.0
        %2412 = vmatpush1.msra.mxu0 %v2295
        %2413 = vmatprep.subr.mxu0 0.0
        %2414 = vmatpush1.msra.mxu0 %v2296
        %2415 = vmatprep.subr.mxu0 0.0
        %2416 = vmatpush1.msra.mxu0 %v2297
        %2417 = vmatprep.subr.mxu0 0.0
        %2418 = vmatpush1.msra.mxu0 %v2298
        %2419 = vmatprep.subr.mxu0 0.0
        %2420 = vmatpush1.msra.mxu0 %v2299
        %2421 = vmatprep.subr.mxu0 0.0
        %2422 = vmatpush1.msra.mxu0 %v2300
        %2423 = vmatprep.subr.mxu0 0.0
        %2424 = vmatpush1.msra.mxu0 %v2301
        %2425 = vmatprep.subr.mxu0 0.0
        %2426 = vmatpush1.msra.mxu0 %v2302
        %2427 = vmatprep.subr.mxu0 0.0
        %2428 = vmatpush1.msra.mxu0 %v2303
        %2429 = vmatprep.subr.mxu0 0.0
        %2430 = vmatpush1.msra.mxu0 %v2304
        %2431 = vmatprep.subr.mxu0 0.0
        %2432 = vmatpush1.msra.mxu0 %v2305
        %2433 = vmatprep.subr.mxu0 0.0
        %2434 = vmatpush1.msra.mxu0 %v2306
        %2435 = vmatprep.subr.mxu0 0.0
        %2436 = vmatpush1.msra.mxu0 %v2307
        %2437 = vmatprep.subr.mxu0 0.0
        %2438 = vmatpush1.msra.mxu0 %v2308
        %2439 = vmatprep.subr.mxu0 0.0
        %2440 = vmatpush1.msra.mxu0 %v2309
        %2441 = vmatprep.subr.mxu0 0.0
        %2442 = vmatpush1.msra.mxu0 %v2310
        %2443 = vmatprep.subr.mxu0 0.0
        %2444 = vmatpush1.msra.mxu0 %v2311
        %2445 = vmatprep.subr.mxu0 0.0
        %2446 = vmatpush1.msra.mxu0 %v2312
        %2447 = vmatprep.subr.mxu0 0.0
        %2448 = vmatpush1.msra.mxu0 %v2313
        %2449 = vmatprep.subr.mxu0 0.0
        %2450 = vmatpush1.msra.mxu0 %v2314
        %2451 = vmatprep.subr.mxu0 0.0
        %2452 = vmatpush1.msra.mxu0 %v2315
        %2453 = vmatprep.subr.mxu0 0.0
        %2454 = vmatpush1.msra.mxu0 %v2316
        %2455 = vmatprep.subr.mxu0 0.0
        %2456 = vmatpush1.msra.mxu0 %v2317
        %2457 = vmatprep.subr.mxu0 0.0
        %2458 = vmatpush1.msra.mxu0 %v2318
        %2459 = vmatprep.subr.mxu0 0.0
        %2460 = vmatpush1.msra.mxu0 %v2319
        %2461 = vmatprep.subr.mxu0 0.0
        %2462 = vmatpush1.msra.mxu0 %v2320
        %2463 = vmatprep.subr.mxu0 0.0
        %2464 = vmatpush1.msra.mxu0 %v2321
        %2465 = vmatprep.subr.mxu0 0.0
        %2466 = vmatpush1.msra.mxu0 %v2322
        %2467 = vmatprep.mubr.f32.mxu0 %v2074
        %2468 = vmatmul.mubr.f32.gmra.mrb[0].mxu0 %v2071
        %v2469 = vpop.f32.mrb[0].mxu0
        %v2470 = vadd.f32 %v2390, %v2469
        %v2471 = vpop.f32.mrb[0].mxu0
        %2472 = vmatprep.mubr.f32.mxu0 %v2082
        %2473 = vmatmul.mubr.f32.gmra.mrb[0].mxu0 %v2080
        %v2474 = vpop.f32.mrb[0].mxu0
        %v2475 = vadd.f32 %v2395, %v2474
        %v2476 = vpop.f32.mrb[0].mxu0
        %2477 = vmatprep.mubr.f32.mxu0 %v2081
        %2478 = vmatmul.mubr.f32.gmra.mrb[0].mxu0 %v2079
        %v2479 = vpop.f32.mrb[0].mxu0
        %v2480 = vadd.f32 %v2400, %v2479
        %v2481 = vpop.f32.mrb[0].mxu0
        %2482 = vdwg.mxu0
        %v2483 = vadd.f32 %v1973, %v2470
        %v2484 = vadd.f32 %v1973, %v2475
        %v2485 = vadd.f32 %v1973, %v2480
        %v2486 = vld [vmem:[#allocation4] sm:$0xfc]
        %v2487 = vld [vmem:[#allocation4 + $0x8] sm:$0xfc]
        %v2488 = vld [vmem:[#allocation4 + $0x10] sm:$0xfc]
        %v2489 = vld [vmem:[#allocation4 + $0x18] sm:$0xfc]
        %v2490 = vld [vmem:[#allocation4 + $0x40] sm:$0xf]
        %v2491 = vld [vmem:[#allocation4 + $0x48] sm:$0xf]
        %v2492 = vld [vmem:[#allocation4 + $0x50] sm:$0xf]
        %v2493 = vld [vmem:[#allocation4 + $0x58] sm:$0xf]
        %s2494 = scalar_lea.vmem [#allocation9], 1536
        %v2495 = vld [vmem:[%s2494] sm:$0xff]
        %v2496 = vld [vmem:[%s2494 + $0x8] sm:$0xff]
        %v2497 = vld [vmem:[%s2494 + $0x10] sm:$0xff]
        %v2498 = vld [vmem:[%s2494 + $0x18] sm:$0xff]
        %v2499 = vld [vmem:[%s2494 + $0x20] sm:$0xff]
        %v2500 = vld [vmem:[%s2494 + $0x28] sm:$0xff]
        %v2501 = vld [vmem:[%s2494 + $0x30] sm:$0xff]
        %v2502 = vld [vmem:[%s2494 + $0x38] sm:$0xff]
        %v2503 = vld [vmem:[%s2494 + $0x40] sm:$0xff]
        %v2504 = vld [vmem:[%s2494 + $0x48] sm:$0xff]
        %v2505 = vld [vmem:[%s2494 + $0x50] sm:$0xff]
        %v2506 = vld [vmem:[%s2494 + $0x58] sm:$0xff]
        %v2507 = vld [vmem:[%s2494 + $0x60] sm:$0xff]
        %v2508 = vld [vmem:[%s2494 + $0x68] sm:$0xff]
        %v2509 = vld [vmem:[%s2494 + $0x70] sm:$0xff]
        %v2510 = vld [vmem:[%s2494 + $0x78] sm:$0xff]
        %v2511 = vld [vmem:[%s2494 + $0x80] sm:$0xff]
        %v2512 = vld [vmem:[%s2494 + $0x88] sm:$0xff]
        %v2513 = vld [vmem:[%s2494 + $0x90] sm:$0xff]
        %v2514 = vld [vmem:[%s2494 + $0x98] sm:$0xff]
        %v2515 = vld [vmem:[%s2494 + $0xa0] sm:$0xff]
        %v2516 = vld [vmem:[%s2494 + $0xa8] sm:$0xff]
        %v2517 = vld [vmem:[%s2494 + $0xb0] sm:$0xff]
        %v2518 = vld [vmem:[%s2494 + $0xb8] sm:$0xff]
        %v2519 = vld [vmem:[%s2494 + $0xc0] sm:$0xff]
        %v2520 = vld [vmem:[%s2494 + $0xc8] sm:$0xff]
        %v2521 = vld [vmem:[%s2494 + $0xd0] sm:$0xff]
        %v2522 = vld [vmem:[%s2494 + $0xd8] sm:$0xff]
        %v2523 = vld [vmem:[%s2494 + $0xe0] sm:$0xff]
        %v2524 = vld [vmem:[%s2494 + $0xe8] sm:$0xff]
        %v2525 = vld [vmem:[%s2494 + $0xf0] sm:$0xff]
        %v2526 = vld [vmem:[%s2494 + $0xf8] sm:$0xff]
        %v2527 = vld [vmem:[%s2494 + $0x100] sm:$0xff]
        %v2528 = vld [vmem:[%s2494 + $0x108] sm:$0xff]
        %v2529 = vld [vmem:[%s2494 + $0x110] sm:$0xff]
        %v2530 = vld [vmem:[%s2494 + $0x118] sm:$0xff]
        %v2531 = vld [vmem:[%s2494 + $0x120] sm:$0xff]
        %v2532 = vld [vmem:[%s2494 + $0x128] sm:$0xff]
        %v2533 = vld [vmem:[%s2494 + $0x130] sm:$0xff]
        %v2534 = vld [vmem:[%s2494 + $0x138] sm:$0xff]
        %v2535 = vld [vmem:[%s2494 + $0x140] sm:$0xff]
        %v2536 = vld [vmem:[%s2494 + $0x148] sm:$0xff]
        %v2537 = vld [vmem:[%s2494 + $0x150] sm:$0xff]
        %v2538 = vld [vmem:[%s2494 + $0x158] sm:$0xff]
        %v2539 = vld [vmem:[%s2494 + $0x160] sm:$0xff]
        %v2540 = vld [vmem:[%s2494 + $0x168] sm:$0xff]
        %v2541 = vld [vmem:[%s2494 + $0x170] sm:$0xff]
        %v2542 = vld [vmem:[%s2494 + $0x178] sm:$0xff]
        %v2543 = vld [vmem:[%s2494 + $0x180] sm:$0xff]
        %v2544 = vld [vmem:[%s2494 + $0x188] sm:$0xff]
        %v2545 = vld [vmem:[%s2494 + $0x190] sm:$0xff]
        %v2546 = vld [vmem:[%s2494 + $0x198] sm:$0xff]
        %v2547 = vld [vmem:[%s2494 + $0x1a0] sm:$0xff]
        %v2548 = vld [vmem:[%s2494 + $0x1a8] sm:$0xff]
        %v2549 = vld [vmem:[%s2494 + $0x1b0] sm:$0xff]
        %v2550 = vld [vmem:[%s2494 + $0x1b8] sm:$0xff]
        %v2551 = vld [vmem:[%s2494 + $0x1c0] sm:$0xff]
        %v2552 = vld [vmem:[%s2494 + $0x1c8] sm:$0xff]
        %v2553 = vld [vmem:[%s2494 + $0x1d0] sm:$0xff]
        %v2554 = vld [vmem:[%s2494 + $0x1d8] sm:$0xff]
        %v2555 = vld [vmem:[%s2494 + $0x1e0] sm:$0xff]
        %v2556 = vld [vmem:[%s2494 + $0x1e8] sm:$0xff]
        %v2557 = vld [vmem:[%s2494 + $0x1f0] sm:$0xff]
        %v2558 = vld [vmem:[%s2494 + $0x1f8] sm:$0xff]
        %v2567 = vrot.slane %v2486, 2
        %v2568 = vrot.slane %v1737, 2
        %v2569 = vsel %vm765, %v2567, %v2568
        %v2570 = vrot.slane %v2487, 2
        %v2571 = vrot.slane %v1738, 2
        %v2572 = vsel %vm765, %v2570, %v2571
        %v2573 = vrot.slane %v2488, 2
        %v2574 = vrot.slane %v1739, 2
        %v2575 = vsel %vm765, %v2573, %v2574
        %v2576 = vrot.slane %v2489, 2
        %v2577 = vrot.slane %v1740, 2
        %v2578 = vsel %vm765, %v2576, %v2577
        %v2579 = vrot.slane %v2490, 2
        %v2580 = vsel %vm765, %v2568, %v2579
        %v2581 = vrot.slane %v2491, 2
        %v2582 = vsel %vm765, %v2571, %v2581
        %v2583 = vrot.slane %v2492, 2
        %v2584 = vsel %vm765, %v2574, %v2583
        %v2585 = vrot.slane %v2493, 2
        %v2586 = vsel %vm765, %v2577, %v2585
        %2599 = vmatprep.subr.mxu0 0.0
        %2600 = vmatpush1.msra.mxu0 %v2495
        %2601 = vmatprep.subr.mxu0 0.0
        %2602 = vmatpush1.msra.mxu0 %v2496
        %2603 = vmatprep.subr.mxu0 0.0
        %2604 = vmatpush1.msra.mxu0 %v2497
        %2605 = vmatprep.subr.mxu0 0.0
        %2606 = vmatpush1.msra.mxu0 %v2498
        %2607 = vmatprep.subr.mxu0 0.0
        %2608 = vmatpush1.msra.mxu0 %v2499
        %2609 = vmatprep.subr.mxu0 0.0
        %2610 = vmatpush1.msra.mxu0 %v2500
        %2611 = vmatprep.subr.mxu0 0.0
        %2612 = vmatpush1.msra.mxu0 %v2501
        %2613 = vmatprep.subr.mxu0 0.0
        %2614 = vmatpush1.msra.mxu0 %v2502
        %2615 = vmatprep.subr.mxu0 0.0
        %2616 = vmatpush1.msra.mxu0 %v2503
        %2617 = vmatprep.subr.mxu0 0.0
        %2618 = vmatpush1.msra.mxu0 %v2504
        %2619 = vmatprep.subr.mxu0 0.0
        %2620 = vmatpush1.msra.mxu0 %v2505
        %2621 = vmatprep.subr.mxu0 0.0
        %2622 = vmatpush1.msra.mxu0 %v2506
        %2623 = vmatprep.subr.mxu0 0.0
        %2624 = vmatpush1.msra.mxu0 %v2507
        %2625 = vmatprep.subr.mxu0 0.0
        %2626 = vmatpush1.msra.mxu0 %v2508
        %2627 = vmatprep.subr.mxu0 0.0
        %2628 = vmatpush1.msra.mxu0 %v2509
        %2629 = vmatprep.subr.mxu0 0.0
        %2630 = vmatpush1.msra.mxu0 %v2510
        %2631 = vmatprep.subr.mxu0 0.0
        %2632 = vmatpush1.msra.mxu0 %v2511
        %2633 = vmatprep.subr.mxu0 0.0
        %2634 = vmatpush1.msra.mxu0 %v2512
        %2635 = vmatprep.subr.mxu0 0.0
        %2636 = vmatpush1.msra.mxu0 %v2513
        %2637 = vmatprep.subr.mxu0 0.0
        %2638 = vmatpush1.msra.mxu0 %v2514
        %2639 = vmatprep.subr.mxu0 0.0
        %2640 = vmatpush1.msra.mxu0 %v2515
        %2641 = vmatprep.subr.mxu0 0.0
        %2642 = vmatpush1.msra.mxu0 %v2516
        %2643 = vmatprep.subr.mxu0 0.0
        %2644 = vmatpush1.msra.mxu0 %v2517
        %2645 = vmatprep.subr.mxu0 0.0
        %2646 = vmatpush1.msra.mxu0 %v2518
        %2647 = vmatprep.subr.mxu0 0.0
        %2648 = vmatpush1.msra.mxu0 %v2519
        %2649 = vmatprep.subr.mxu0 0.0
        %2650 = vmatpush1.msra.mxu0 %v2520
        %2651 = vmatprep.subr.mxu0 0.0
        %2652 = vmatpush1.msra.mxu0 %v2521
        %2653 = vmatprep.subr.mxu0 0.0
        %2654 = vmatpush1.msra.mxu0 %v2522
        %2655 = vmatprep.subr.mxu0 0.0
        %2656 = vmatpush1.msra.mxu0 %v2523
        %2657 = vmatprep.subr.mxu0 0.0
        %2658 = vmatpush1.msra.mxu0 %v2524
        %2659 = vmatprep.subr.mxu0 0.0
        %2660 = vmatpush1.msra.mxu0 %v2525
        %2661 = vmatprep.subr.mxu0 0.0
        %2662 = vmatpush1.msra.mxu0 %v2526
        %2663 = vmatprep.mubr.f32.mxu0 %v2572
        %2664 = vmatmul.mubr.f32.gmra.mrb[0].mxu0 %v2569
        %v2665 = vpop.f32.mrb[0].mxu0
        %v2666 = vadd.f32 0.0, %v2665
        %v2667 = vpop.f32.mrb[0].mxu0
        %2668 = vmatprep.mubr.f32.mxu0 %v2582
        %2669 = vmatmul.mubr.f32.gmra.mrb[0].mxu0 %v2580
        %v2670 = vpop.f32.mrb[0].mxu0
        %v2671 = vadd.f32 0.0, %v2670
        %v2672 = vpop.f32.mrb[0].mxu0
        %2673 = vmatprep.mubr.f32.mxu0 %v2581
        %2674 = vmatmul.mubr.f32.gmra.mrb[0].mxu0 %v2579
        %v2675 = vpop.f32.mrb[0].mxu0
        %v2676 = vadd.f32 0.0, %v2675
        %v2677 = vpop.f32.mrb[0].mxu0
        %2678 = vdwg.mxu0
        %2679 = vmatprep.subr.mxu0 0.0
        %2680 = vmatpush1.msra.mxu0 %v2527
        %2681 = vmatprep.subr.mxu0 0.0
        %2682 = vmatpush1.msra.mxu0 %v2528
        %2683 = vmatprep.subr.mxu0 0.0
        %2684 = vmatpush1.msra.mxu0 %v2529
        %2685 = vmatprep.subr.mxu0 0.0
        %2686 = vmatpush1.msra.mxu0 %v2530
        %2687 = vmatprep.subr.mxu0 0.0
        %2688 = vmatpush1.msra.mxu0 %v2531
        %2689 = vmatprep.subr.mxu0 0.0
        %2690 = vmatpush1.msra.mxu0 %v2532
        %2691 = vmatprep.subr.mxu0 0.0
        %2692 = vmatpush1.msra.mxu0 %v2533
        %2693 = vmatprep.subr.mxu0 0.0
        %2694 = vmatpush1.msra.mxu0 %v2534
        %2695 = vmatprep.subr.mxu0 0.0
        %2696 = vmatpush1.msra.mxu0 %v2535
        %2697 = vmatprep.subr.mxu0 0.0
        %2698 = vmatpush1.msra.mxu0 %v2536
        %2699 = vmatprep.subr.mxu0 0.0
        %2700 = vmatpush1.msra.mxu0 %v2537
        %2701 = vmatprep.subr.mxu0 0.0
        %2702 = vmatpush1.msra.mxu0 %v2538
        %2703 = vmatprep.subr.mxu0 0.0
        %2704 = vmatpush1.msra.mxu0 %v2539
        %2705 = vmatprep.subr.mxu0 0.0
        %2706 = vmatpush1.msra.mxu0 %v2540
        %2707 = vmatprep.subr.mxu0 0.0
        %2708 = vmatpush1.msra.mxu0 %v2541
        %2709 = vmatprep.subr.mxu0 0.0
        %2710 = vmatpush1.msra.mxu0 %v2542
        %2711 = vmatprep.subr.mxu0 0.0
        %2712 = vmatpush1.msra.mxu0 %v2543
        %2713 = vmatprep.subr.mxu0 0.0
        %2714 = vmatpush1.msra.mxu0 %v2544
        %2715 = vmatprep.subr.mxu0 0.0
        %2716 = vmatpush1.msra.mxu0 %v2545
        %2717 = vmatprep.subr.mxu0 0.0
        %2718 = vmatpush1.msra.mxu0 %v2546
        %2719 = vmatprep.subr.mxu0 0.0
        %2720 = vmatpush1.msra.mxu0 %v2547
        %2721 = vmatprep.subr.mxu0 0.0
        %2722 = vmatpush1.msra.mxu0 %v2548
        %2723 = vmatprep.subr.mxu0 0.0
        %2724 = vmatpush1.msra.mxu0 %v2549
        %2725 = vmatprep.subr.mxu0 0.0
        %2726 = vmatpush1.msra.mxu0 %v2550
        %2727 = vmatprep.subr.mxu0 0.0
        %2728 = vmatpush1.msra.mxu0 %v2551
        %2729 = vmatprep.subr.mxu0 0.0
        %2730 = vmatpush1.msra.mxu0 %v2552
        %2731 = vmatprep.subr.mxu0 0.0
        %2732 = vmatpush1.msra.mxu0 %v2553
        %2733 = vmatprep.subr.mxu0 0.0
        %2734 = vmatpush1.msra.mxu0 %v2554
        %2735 = vmatprep.subr.mxu0 0.0
        %2736 = vmatpush1.msra.mxu0 %v2555
        %2737 = vmatprep.subr.mxu0 0.0
        %2738 = vmatpush1.msra.mxu0 %v2556
        %2739 = vmatprep.subr.mxu0 0.0
        %2740 = vmatpush1.msra.mxu0 %v2557
        %2741 = vmatprep.subr.mxu0 0.0
        %2742 = vmatpush1.msra.mxu0 %v2558
        %2743 = vmatprep.mubr.f32.mxu0 %v2578
        %2744 = vmatmul.mubr.f32.gmra.mrb[0].mxu0 %v2575
        %v2745 = vpop.f32.mrb[0].mxu0
        %v2746 = vadd.f32 %v2666, %v2745
        %v2747 = vpop.f32.mrb[0].mxu0
        %2748 = vmatprep.mubr.f32.mxu0 %v2586
        %2749 = vmatmul.mubr.f32.gmra.mrb[0].mxu0 %v2584
        %v2750 = vpop.f32.mrb[0].mxu0
        %v2751 = vadd.f32 %v2671, %v2750
        %v2752 = vpop.f32.mrb[0].mxu0
        %2753 = vmatprep.mubr.f32.mxu0 %v2585
        %2754 = vmatmul.mubr.f32.gmra.mrb[0].mxu0 %v2583
        %v2755 = vpop.f32.mrb[0].mxu0
        %v2756 = vadd.f32 %v2676, %v2755
        %v2757 = vpop.f32.mrb[0].mxu0
        %2758 = vdwg.mxu0
        %v2759 = vadd.f32 %v2483, %v2746
        %v2760 = vadd.f32 %v2484, %v2751
        %v2761 = vadd.f32 %v2485, %v2756
        %v2762 = vld [vmem:[%s7] sm:$0xff]
        %v2763 = vld [vmem:[%s7 + $0x8] sm:$0xff]
        %v2764 = vld [vmem:[%s7 + $0x10] sm:$0xff]
        %v2765 = vld [vmem:[%s7 + $0x18] sm:$0xff]
        %v2766 = vld [vmem:[%s7 + $0x20] sm:$0xff]
        %v2767 = vld [vmem:[%s7 + $0x28] sm:$0xff]
        %v2768 = vld [vmem:[%s7 + $0x30] sm:$0xff]
        %v2769 = vld [vmem:[%s7 + $0x38] sm:$0xff]
        %s2770 = scalar_lea.vmem %s7, 64
        %v2771 = vld [vmem:[%s2770] sm:$0xff]
        %v2772 = vld [vmem:[%s2770 + $0x8] sm:$0xff]
        %v2773 = vld [vmem:[%s2770 + $0x10] sm:$0xff]
        %v2774 = vld [vmem:[%s2770 + $0x18] sm:$0xff]
        %v2775 = vld [vmem:[%s2770 + $0x20] sm:$0xff]
        %v2776 = vld [vmem:[%s2770 + $0x28] sm:$0xff]
        %v2777 = vld [vmem:[%s2770 + $0x30] sm:$0xff]
        %v2778 = vld [vmem:[%s2770 + $0x38] sm:$0xff]
        %vm2779 = vcmask 146432
        %v2781 = vsel %vm2779, %v2771, 0
        %v2784 = vsel %vm2779, %v2772, 0
        %v2787 = vsel %vm2779, %v2773, 0
        %v2790 = vsel %vm2779, %v2774, 0
        %v2793 = vsel %vm2779, %v2775, 0
        %v2796 = vsel %vm2779, %v2776, 0
        %v2799 = vsel %vm2779, %v2777, 0
        %v2802 = vsel %vm2779, %v2778, 0
        %vm2804 = vcmask 1041408
        %v2806 = vsel %vm2804, %v2761, 0
        %2808 = vmatprep.subr.mxu0 0.0
        %2809 = vmatpush1.msra.mxu0 %v2759
        %2810 = vmatprep.subr.mxu0 0.0
        %2811 = vmatpush1.msra.mxu0 %v2760
        %2812 = vmatprep.subr.mxu0 0.0
        %2813 = vmatpush1.msra.mxu0 %v2806
        %2814 = vmatprep.subr.mxu0 0.0
        %2815 = vmatpush1.msra.mxu0 0.0
        %2816 = vmatprep.subr.mxu0 0.0
        %2817 = vmatpush1.msra.mxu0 0.0
        %2818 = vmatprep.subr.mxu0 0.0
        %2819 = vmatpush1.msra.mxu0 0.0
        %2820 = vmatprep.subr.mxu0 0.0
        %2821 = vmatpush1.msra.mxu0 0.0
        %2822 = vmatprep.subr.mxu0 0.0
        %2823 = vmatpush1.msra.mxu0 0.0
        %2824 = vmatprep.subr.mxu0 0.0
        %2825 = vmatpush1.msra.mxu0 0.0
        %2826 = vmatprep.subr.mxu0 0.0
        %2827 = vmatpush1.msra.mxu0 0.0
        %2828 = vmatprep.subr.mxu0 0.0
        %2829 = vmatpush1.msra.mxu0 0.0
        %2830 = vmatprep.subr.mxu0 0.0
        %2831 = vmatpush1.msra.mxu0 0.0
        %2832 = vmatprep.subr.mxu0 0.0
        %2833 = vmatpush1.msra.mxu0 0.0
        %2834 = vmatprep.subr.mxu0 0.0
        %2835 = vmatpush1.msra.mxu0 0.0
        %2836 = vmatprep.subr.mxu0 0.0
        %2837 = vmatpush1.msra.mxu0 0.0
        %2838 = vmatprep.subr.mxu0 0.0
        %2839 = vmatpush1.msra.mxu0 0.0
        %2840 = vmatprep.subr.mxu0 0.0
        %2841 = vmatpush1.msra.mxu0 0.0
        %2842 = vmatprep.subr.mxu0 0.0
        %2843 = vmatpush1.msra.mxu0 0.0
        %2844 = vmatprep.subr.mxu0 0.0
        %2845 = vmatpush1.msra.mxu0 0.0
        %2846 = vmatprep.subr.mxu0 0.0
        %2847 = vmatpush1.msra.mxu0 0.0
        %2848 = vmatprep.subr.mxu0 0.0
        %2849 = vmatpush1.msra.mxu0 0.0
        %2850 = vmatprep.subr.mxu0 0.0
        %2851 = vmatpush1.msra.mxu0 0.0
        %2852 = vmatprep.subr.mxu0 0.0
        %2853 = vmatpush1.msra.mxu0 0.0
        %2854 = vmatprep.subr.mxu0 0.0
        %2855 = vmatpush1.msra.mxu0 0.0
        %2856 = vmatprep.subr.mxu0 0.0
        %2857 = vmatpush1.msra.mxu0 0.0
        %2858 = vmatprep.subr.mxu0 0.0
        %2859 = vmatpush1.msra.mxu0 0.0
        %2860 = vmatprep.subr.mxu0 0.0
        %2861 = vmatpush1.msra.mxu0 0.0
        %2862 = vmatprep.subr.mxu0 0.0
        %2863 = vmatpush1.msra.mxu0 0.0
        %2864 = vmatprep.subr.mxu0 0.0
        %2865 = vmatpush1.msra.mxu0 0.0
        %2866 = vmatprep.subr.mxu0 0.0
        %2867 = vmatpush1.msra.mxu0 0.0
        %2868 = vmatprep.subr.mxu0 0.0
        %2869 = vmatpush1.msra.mxu0 0.0
        %2870 = vmatprep.subr.mxu0 0.0
        %2871 = vmatpush1.msra.mxu0 0.0
        %2872 = vmatprep.mubr.f32.mxu0 0.0
        %2873 = vmatmul.mubr.f32.gmra.mrb[0].mxu0 %v2781
        %v2874 = vpop.f32.mrb[0].mxu0
        %v2875 = vadd.f32 0.0, %v2874
        %v2876 = vpop.f32.mrb[0].mxu0
        %2877 = vmatprep.mubr.f32.mxu0 0.0
        %2878 = vmatmul.mubr.f32.gmra.mrb[0].mxu0 %v2784
        %v2879 = vpop.f32.mrb[0].mxu0
        %v2880 = vadd.f32 0.0, %v2879
        %v2881 = vpop.f32.mrb[0].mxu0
        %2882 = vmatprep.mubr.f32.mxu0 0.0
        %2883 = vmatmul.mubr.f32.gmra.mrb[0].mxu0 %v2787
        %v2884 = vpop.f32.mrb[0].mxu0
        %v2885 = vadd.f32 0.0, %v2884
        %v2886 = vpop.f32.mrb[0].mxu0
        %2887 = vmatprep.mubr.f32.mxu0 0.0
        %2888 = vmatmul.mubr.f32.gmra.mrb[0].mxu0 %v2790
        %v2889 = vpop.f32.mrb[0].mxu0
        %v2890 = vadd.f32 0.0, %v2889
        %v2891 = vpop.f32.mrb[0].mxu0
        %2892 = vmatprep.mubr.f32.mxu0 0.0
        %2893 = vmatmul.mubr.f32.gmra.mrb[0].mxu0 %v2793
        %v2894 = vpop.f32.mrb[0].mxu0
        %v2895 = vadd.f32 0.0, %v2894
        %v2896 = vpop.f32.mrb[0].mxu0
        %2897 = vmatprep.mubr.f32.mxu0 0.0
        %2898 = vmatmul.mubr.f32.gmra.mrb[0].mxu0 %v2796
        %v2899 = vpop.f32.mrb[0].mxu0
        %v2900 = vadd.f32 0.0, %v2899
        %v2901 = vpop.f32.mrb[0].mxu0
        %2902 = vmatprep.mubr.f32.mxu0 0.0
        %2903 = vmatmul.mubr.f32.gmra.mrb[0].mxu0 %v2799
        %v2904 = vpop.f32.mrb[0].mxu0
        %v2905 = vadd.f32 0.0, %v2904
        %v2906 = vpop.f32.mrb[0].mxu0
        %2907 = vmatprep.mubr.f32.mxu0 0.0
        %2908 = vmatmul.mubr.f32.gmra.mrb[0].mxu0 %v2802
        %v2909 = vpop.f32.mrb[0].mxu0
        %v2910 = vadd.f32 0.0, %v2909
        %v2911 = vpop.f32.mrb[0].mxu0
        %2912 = vdwg.mxu0
        %v2914 = vsel %vm2779, %v2762, 0
        %v2917 = vsel %vm2779, %v2763, 0
        %v2920 = vsel %vm2779, %v2764, 0
        %v2923 = vsel %vm2779, %v2765, 0
        %v2926 = vsel %vm2779, %v2766, 0
        %v2929 = vsel %vm2779, %v2767, 0
        %v2932 = vsel %vm2779, %v2768, 0
        %v2935 = vsel %vm2779, %v2769, 0
        %v2938 = vsel %vm2804, %v2257, 0
        %2940 = vmatprep.subr.mxu0 0.0
        %2941 = vmatpush1.msra.mxu0 %v2255
        %2942 = vmatprep.subr.mxu0 0.0
        %2943 = vmatpush1.msra.mxu0 %v2256
        %2944 = vmatprep.subr.mxu0 0.0
        %2945 = vmatpush1.msra.mxu0 %v2938
        %2946 = vmatprep.subr.mxu0 0.0
        %2947 = vmatpush1.msra.mxu0 0.0
        %2948 = vmatprep.subr.mxu0 0.0
        %2949 = vmatpush1.msra.mxu0 0.0
        %2950 = vmatprep.subr.mxu0 0.0
        %2951 = vmatpush1.msra.mxu0 0.0
        %2952 = vmatprep.subr.mxu0 0.0
        %2953 = vmatpush1.msra.mxu0 0.0
        %2954 = vmatprep.subr.mxu0 0.0
        %2955 = vmatpush1.msra.mxu0 0.0
        %2956 = vmatprep.subr.mxu0 0.0
        %2957 = vmatpush1.msra.mxu0 0.0
        %2958 = vmatprep.subr.mxu0 0.0
        %2959 = vmatpush1.msra.mxu0 0.0
        %2960 = vmatprep.subr.mxu0 0.0
        %2961 = vmatpush1.msra.mxu0 0.0
        %2962 = vmatprep.subr.mxu0 0.0
        %2963 = vmatpush1.msra.mxu0 0.0
        %2964 = vmatprep.subr.mxu0 0.0
        %2965 = vmatpush1.msra.mxu0 0.0
        %2966 = vmatprep.subr.mxu0 0.0
        %2967 = vmatpush1.msra.mxu0 0.0
        %2968 = vmatprep.subr.mxu0 0.0
        %2969 = vmatpush1.msra.mxu0 0.0
        %2970 = vmatprep.subr.mxu0 0.0
        %2971 = vmatpush1.msra.mxu0 0.0
        %2972 = vmatprep.subr.mxu0 0.0
        %2973 = vmatpush1.msra.mxu0 0.0
        %2974 = vmatprep.subr.mxu0 0.0
        %2975 = vmatpush1.msra.mxu0 0.0
        %2976 = vmatprep.subr.mxu0 0.0
        %2977 = vmatpush1.msra.mxu0 0.0
        %2978 = vmatprep.subr.mxu0 0.0
        %2979 = vmatpush1.msra.mxu0 0.0
        %2980 = vmatprep.subr.mxu0 0.0
        %2981 = vmatpush1.msra.mxu0 0.0
        %2982 = vmatprep.subr.mxu0 0.0
        %2983 = vmatpush1.msra.mxu0 0.0
        %2984 = vmatprep.subr.mxu0 0.0
        %2985 = vmatpush1.msra.mxu0 0.0
        %2986 = vmatprep.subr.mxu0 0.0
        %2987 = vmatpush1.msra.mxu0 0.0
        %2988 = vmatprep.subr.mxu0 0.0
        %2989 = vmatpush1.msra.mxu0 0.0
        %2990 = vmatprep.subr.mxu0 0.0
        %2991 = vmatpush1.msra.mxu0 0.0
        %2992 = vmatprep.subr.mxu0 0.0
        %2993 = vmatpush1.msra.mxu0 0.0
        %2994 = vmatprep.subr.mxu0 0.0
        %2995 = vmatpush1.msra.mxu0 0.0
        %2996 = vmatprep.subr.mxu0 0.0
        %2997 = vmatpush1.msra.mxu0 0.0
        %2998 = vmatprep.subr.mxu0 0.0
        %2999 = vmatpush1.msra.mxu0 0.0
        %3000 = vmatprep.subr.mxu0 0.0
        %3001 = vmatpush1.msra.mxu0 0.0
        %3002 = vmatprep.subr.mxu0 0.0
        %3003 = vmatpush1.msra.mxu0 0.0
        %3004 = vmatprep.mubr.f32.mxu0 0.0
        %3005 = vmatmul.mubr.f32.gmra.mrb[0].mxu0 %v2914
        %v3006 = vpop.f32.mrb[0].mxu0
        %v3007 = vadd.f32 %v2875, %v3006
        %v3008 = vpop.f32.mrb[0].mxu0
        %3009 = vmatprep.mubr.f32.mxu0 0.0
        %3010 = vmatmul.mubr.f32.gmra.mrb[0].mxu0 %v2917
        %v3011 = vpop.f32.mrb[0].mxu0
        %v3012 = vadd.f32 %v2880, %v3011
        %v3013 = vpop.f32.mrb[0].mxu0
        %3014 = vmatprep.mubr.f32.mxu0 0.0
        %3015 = vmatmul.mubr.f32.gmra.mrb[0].mxu0 %v2920
        %v3016 = vpop.f32.mrb[0].mxu0
        %v3017 = vadd.f32 %v2885, %v3016
        %v3018 = vpop.f32.mrb[0].mxu0
        %3019 = vmatprep.mubr.f32.mxu0 0.0
        %3020 = vmatmul.mubr.f32.gmra.mrb[0].mxu0 %v2923
        %v3021 = vpop.f32.mrb[0].mxu0
        %v3022 = vadd.f32 %v2890, %v3021
        %v3023 = vpop.f32.mrb[0].mxu0
        %3024 = vmatprep.mubr.f32.mxu0 0.0
        %3025 = vmatmul.mubr.f32.gmra.mrb[0].mxu0 %v2926
        %v3026 = vpop.f32.mrb[0].mxu0
        %v3027 = vadd.f32 %v2895, %v3026
        %v3028 = vpop.f32.mrb[0].mxu0
        %3029 = vmatprep.mubr.f32.mxu0 0.0
        %3030 = vmatmul.mubr.f32.gmra.mrb[0].mxu0 %v2929
        %v3031 = vpop.f32.mrb[0].mxu0
        %v3032 = vadd.f32 %v2900, %v3031
        %v3033 = vpop.f32.mrb[0].mxu0
        %3034 = vmatprep.mubr.f32.mxu0 0.0
        %3035 = vmatmul.mubr.f32.gmra.mrb[0].mxu0 %v2932
        %v3036 = vpop.f32.mrb[0].mxu0
        %v3037 = vadd.f32 %v2905, %v3036
        %v3038 = vpop.f32.mrb[0].mxu0
        %3039 = vmatprep.mubr.f32.mxu0 0.0
        %3040 = vmatmul.mubr.f32.gmra.mrb[0].mxu0 %v2935
        %v3041 = vpop.f32.mrb[0].mxu0
        %v3042 = vadd.f32 %v2910, %v3041
        %v3043 = vpop.f32.mrb[0].mxu0
        %3044 = vdwg.mxu0
        %v3045 = vld [vmem:[%s8] sm:$0xff]
        %v3046 = vld [vmem:[%s8 + $0x8] sm:$0xff]
        %v3047 = vld [vmem:[%s8 + $0x10] sm:$0xff]
        %v3048 = vld [vmem:[%s8 + $0x18] sm:$0xff]
        %v3049 = vld [vmem:[%s8 + $0x20] sm:$0xff]
        %v3050 = vld [vmem:[%s8 + $0x28] sm:$0xff]
        %vm3051 = vcmask 392192
        %v3053 = vsel %vm3051, %v3007, 0
        %v3056 = vsel %vm3051, %v3012, 0
        %v3059 = vsel %vm3051, %v3017, 0
        %v3062 = vsel %vm3051, %v3022, 0
        %v3065 = vsel %vm3051, %v3027, 0
        %v3068 = vsel %vm3051, %v3032, 0
        %v3071 = vsel %vm3051, %v3037, 0
        %v3074 = vsel %vm3051, %v3042, 0
        %3076 = vmatprep.subr.mxu0 0.0
        %3077 = vmatpush1.msra.mxu0 %v3045
        %3078 = vmatprep.subr.mxu0 0.0
        %3079 = vmatpush1.msra.mxu0 %v3046
        %3080 = vmatprep.subr.mxu0 0.0
        %3081 = vmatpush1.msra.mxu0 %v3047
        %3082 = vmatprep.subr.mxu0 0.0
        %3083 = vmatpush1.msra.mxu0 %v3048
        %3084 = vmatprep.subr.mxu0 0.0
        %3085 = vmatpush1.msra.mxu0 %v3049
        %3086 = vmatprep.subr.mxu0 0.0
        %3087 = vmatpush1.msra.mxu0 %v3050
        %3088 = vmatprep.subr.mxu0 0.0
        %3089 = vmatpush1.msra.mxu0 0.0
        %3090 = vmatprep.subr.mxu0 0.0
        %3091 = vmatpush1.msra.mxu0 0.0
        %3092 = vmatprep.subr.mxu0 0.0
        %3093 = vmatpush1.msra.mxu0 0.0
        %3094 = vmatprep.subr.mxu0 0.0
        %3095 = vmatpush1.msra.mxu0 0.0
        %3096 = vmatprep.subr.mxu0 0.0
        %3097 = vmatpush1.msra.mxu0 0.0
        %3098 = vmatprep.subr.mxu0 0.0
        %3099 = vmatpush1.msra.mxu0 0.0
        %3100 = vmatprep.subr.mxu0 0.0
        %3101 = vmatpush1.msra.mxu0 0.0
        %3102 = vmatprep.subr.mxu0 0.0
        %3103 = vmatpush1.msra.mxu0 0.0
        %3104 = vmatprep.subr.mxu0 0.0
        %3105 = vmatpush1.msra.mxu0 0.0
        %3106 = vmatprep.subr.mxu0 0.0
        %3107 = vmatpush1.msra.mxu0 0.0
        %3108 = vmatprep.subr.mxu0 0.0
        %3109 = vmatpush1.msra.mxu0 0.0
        %3110 = vmatprep.subr.mxu0 0.0
        %3111 = vmatpush1.msra.mxu0 0.0
        %3112 = vmatprep.subr.mxu0 0.0
        %3113 = vmatpush1.msra.mxu0 0.0
        %3114 = vmatprep.subr.mxu0 0.0
        %3115 = vmatpush1.msra.mxu0 0.0
        %3116 = vmatprep.subr.mxu0 0.0
        %3117 = vmatpush1.msra.mxu0 0.0
        %3118 = vmatprep.subr.mxu0 0.0
        %3119 = vmatpush1.msra.mxu0 0.0
        %3120 = vmatprep.subr.mxu0 0.0
        %3121 = vmatpush1.msra.mxu0 0.0
        %3122 = vmatprep.subr.mxu0 0.0
        %3123 = vmatpush1.msra.mxu0 0.0
        %3124 = vmatprep.subr.mxu0 0.0
        %3125 = vmatpush1.msra.mxu0 0.0
        %3126 = vmatprep.subr.mxu0 0.0
        %3127 = vmatpush1.msra.mxu0 0.0
        %3128 = vmatprep.subr.mxu0 0.0
        %3129 = vmatpush1.msra.mxu0 0.0
        %3130 = vmatprep.subr.mxu0 0.0
        %3131 = vmatpush1.msra.mxu0 0.0
        %3132 = vmatprep.subr.mxu0 0.0
        %3133 = vmatpush1.msra.mxu0 0.0
        %3134 = vmatprep.subr.mxu0 0.0
        %3135 = vmatpush1.msra.mxu0 0.0
        %3136 = vmatprep.subr.mxu0 0.0
        %3137 = vmatpush1.msra.mxu0 0.0
        %3138 = vmatprep.subr.mxu0 0.0
        %3139 = vmatpush1.msra.mxu0 0.0
        %3140 = vmatprep.mubr.f32.mxu0 0.0
        %3141 = vmatmul.mubr.f32.gmra.mrb[0].mxu0 %v3053
        %v3142 = vpop.f32.mrb[0].mxu0
        %v3143 = vadd.f32 0.0, %v3142
        %v3144 = vpop.f32.mrb[0].mxu0
        %3145 = vmatprep.mubr.f32.mxu0 0.0
        %3146 = vmatmul.mubr.f32.gmra.mrb[0].mxu0 %v3056
        %v3147 = vpop.f32.mrb[0].mxu0
        %v3148 = vadd.f32 0.0, %v3147
        %v3149 = vpop.f32.mrb[0].mxu0
        %3150 = vmatprep.mubr.f32.mxu0 0.0
        %3151 = vmatmul.mubr.f32.gmra.mrb[0].mxu0 %v3059
        %v3152 = vpop.f32.mrb[0].mxu0
        %v3153 = vadd.f32 0.0, %v3152
        %v3154 = vpop.f32.mrb[0].mxu0
        %3155 = vmatprep.mubr.f32.mxu0 0.0
        %3156 = vmatmul.mubr.f32.gmra.mrb[0].mxu0 %v3062
        %v3157 = vpop.f32.mrb[0].mxu0
        %v3158 = vadd.f32 0.0, %v3157
        %v3159 = vpop.f32.mrb[0].mxu0
        %3160 = vmatprep.mubr.f32.mxu0 0.0
        %3161 = vmatmul.mubr.f32.gmra.mrb[0].mxu0 %v3065
        %v3162 = vpop.f32.mrb[0].mxu0
        %v3163 = vadd.f32 0.0, %v3162
        %v3164 = vpop.f32.mrb[0].mxu0
        %3165 = vmatprep.mubr.f32.mxu0 0.0
        %3166 = vmatmul.mubr.f32.gmra.mrb[0].mxu0 %v3068
        %v3167 = vpop.f32.mrb[0].mxu0
        %v3168 = vadd.f32 0.0, %v3167
        %v3169 = vpop.f32.mrb[0].mxu0
        %3170 = vmatprep.mubr.f32.mxu0 0.0
        %3171 = vmatmul.mubr.f32.gmra.mrb[0].mxu0 %v3071
        %v3172 = vpop.f32.mrb[0].mxu0
        %v3173 = vadd.f32 0.0, %v3172
        %v3174 = vpop.f32.mrb[0].mxu0
        %3175 = vmatprep.mubr.f32.mxu0 0.0
        %3176 = vmatmul.mubr.f32.gmra.mrb[0].mxu0 %v3074
        %v3177 = vpop.f32.mrb[0].mxu0
        %v3178 = vadd.f32 0.0, %v3177
        %v3179 = vpop.f32.mrb[0].mxu0
        %3180 = vdwg.mxu0
        %3181 = vst [vmem:[%s408] sm:$0xff] %v3143
        %3182 = vst [vmem:[%s408 + $0x8] sm:$0xff] %v3148
        %3183 = vst [vmem:[%s408 + $0x10] sm:$0xff] %v3153
        %3184 = vst [vmem:[%s408 + $0x18] sm:$0xff] %v3158
        %3185 = vst [vmem:[%s408 + $0x20] sm:$0xff] %v3163
        %3186 = vst [vmem:[%s408 + $0x28] sm:$0xff] %v3168
        %3187 = vst [vmem:[%s408 + $0x30] sm:$0xff] %v3173
        %3188 = vst [vmem:[%s408 + $0x38] sm:$0xff] %v3178
        %s3189 = smul.u32 8, %s23
        %p3190 = scmp.lt.s32.totalorder %s3189, 15
        %s3191 = scalar_select %p3190, %s3189, 15
        %s3192 = smul.addr %s3191, 8
        %s3193 = scalar_lea.vmem %s10, %s3192
        // Predicated region
        $region73: #{forward.1} parent=59 // pred_check
          %p3194 = pneg %p256
        $region74: #{forward.1} parent=59 // pred_check_branch
          %3196 = sbr.rel (%p3194) target = $region76
        $region75: #{forward.1} parent=59 // pred_region
          %s3197 = smul.u32 8, %s23
        $region76: #{forward.1} parent=59 // pred_fallthru
          _
      $region60: #{forward.1} parent=5 // pred_fallthru
        _
      %p3198 = scmp.le.s32.totalorder 2, %s18
      // Predicated region
      $region77: #{forward.1} parent=5 // pred_check
        %p3199 = pneg %p3198
      $region78: #{forward.1} parent=5 // pred_check_branch
        %3201 = sbr.rel (%p3199) target = $region80
      $region79: #{forward.1} parent=5 // pred_region
        %s3202 = ssub.s32 %s18, 2
        // Predicated region
        $region81: #{forward.1} parent=79 // pred_check
          %p3203 = pneg %p262
        $region82: #{forward.1} parent=79 // pred_check_branch
          %3205 = sbr.rel (%p3203) target = $region84
        $region83: #{forward.1} parent=79 // pred_region
          %s3206 = smul.u32 8, %s24
          %p3207 = scmp.lt.s32.totalorder %s3206, 15
          %s3208 = scalar_select %p3207, %s3206, 15
          %s3209 = smul.addr %s3208, 8
          %s3210 = scalar_lea.vmem %s10, %s3209
        $region84: #{forward.1} parent=79 // pred_fallthru
          _
      $region80: #{forward.1} parent=5 // pred_fallthru
        _
    $region6: #{forward.1} parent=1 // loop_footer
      %s22 = sadd.s32 1, %s18
    $region7: #{forward.1} parent=1 // loop_footer_branch
      %17 = sbr.rel target = $region3
    $region8: #{forward.1} parent=1 // loop_exit
      _
    %3211 = vsyncpa [#allocation6], 1
    %s3212 = scalar_lea.sflag [#allocation6], 1
    %3213 = vsyncpa %s3212, 1
    %3214 = vsyncpa [#allocation8], 1

</llo_original>
